<compile_context>
chip_gen: v7x
topology: tpu7x:2x2x1
jax: 0.10.0
libtpu: 0.0.40
codegen_flags: <defaults>
</compile_context>

<pallas_src>
import functools

import jax
import jax.numpy as jnp
import numpy as np
from jax import lax
from jax.experimental import pallas as pl
from jax.experimental.pallas import tpu as pltpu

# Channel sizes of the 5 pointwise conv layers: 3 -> 64 -> 128 -> 128 -> 256 -> 16
CHANNELS = (3, 64, 128, 128, 256, 16)


def _encoder_kernel(x_ref,
                    w1, b1, w2, b2, w3, b3, w4, b4, w5, b5,
                    o_ref, acc_ref, *, sub_n, n_sub):
    """One (batch, point-split, point-tile) grid cell.

    x_ref  : (1, 3, TILE)   NCW tile of points for one batch element (f32)
    wK     : (C_out, C_in)  folded conv+BN weight (bf16, MXU operand)
    bK     : (C_out, 1)     folded conv+BN bias (f32)
    o_ref  : (1, 1, 16, 1)  per-(batch, split) max (written on the last k step only)
    acc_ref: (16, 1)        VMEM running-max accumulator (per-core, per (b, split))
    """

    def layer(h, w_ref, b_ref, to_bf16):
        # bf16 MXU operands, f32 accumulation; bias + ReLU in f32 on the VPU.
        y = jnp.dot(w_ref[...], h, preferred_element_type=jnp.float32)
        a = jnp.maximum(y + b_ref[...], 0.0)            # (C_out, sub_n) f32
        # Producer-side cast: bit-identical to casting inside the next dot,
        # but halves the bytes that live across the layer boundary.
        return a.astype(jnp.bfloat16) if to_bf16 else a

    def sub_body(i, running_max):
        start = pl.multiple_of(i * sub_n, sub_n)
        h = x_ref[0, :, pl.ds(start, sub_n)].astype(jnp.bfloat16)   # (3, sub_n)
        h = layer(h, w1, b1, True)
        h = layer(h, w2, b2, True)
        h = layer(h, w3, b3, True)
        h = layer(h, w4, b4, True)
        h = layer(h, w5, b5, False)                                 # (16, sub_n) f32
        return jnp.maximum(running_max, jnp.max(h, axis=-1, keepdims=True))

    init = jnp.full((CHANNELS[-1], 1), -jnp.inf, dtype=jnp.float32)
    tile_max = lax.fori_loop(0, n_sub, sub_body, init, unroll=True)  # (16, 1)

    k = pl.program_id(2)

    @pl.when(k == 0)
    def _():
        acc_ref[...] = tile_max

    @pl.when(k != 0)
    def _():
        acc_ref[...] = jnp.maximum(acc_ref[...], tile_max)

    @pl.when(k == pl.num_programs(2) - 1)
    def _():
        o_ref[0, 0] = acc_ref[...]        # single lane-sparse write per (batch, split)


def encoder_forward(x_ncw, folded_ws, folded_bs, *, tile_n=2048, sub_n=256, n_splits=2):
    """x_ncw: (B, 3, N) float32 NCW input. Returns (B, 16, 1), matching the torch module."""
    B, C_in, N = x_ncw.shape
    assert C_in == CHANNELS[0]

    # Point-axis split so both v7x TensorCores get work even at B == 1.
    if n_splits < 1 or N % n_splits != 0 or (N // n_splits) % 128 != 0:
        n_splits = 1
    n_per_split = N // n_splits

    tile = min(tile_n, n_per_split)
    # TODO(synk): for N not a multiple of the tiling, mask the tail tile with -inf
    # before the max (do NOT zero-pad: relu(bias) of fake points can exceed the
    # true maximum).
    assert n_per_split % tile == 0, "points-per-split must be a multiple of the tile size"
    sub = min(sub_n, tile)
    assert tile % sub == 0, "tile size must be a multiple of the inner sub-chunk"
    n_sub = tile // sub
    k_per_split = n_per_split // tile

    x = x_ncw.astype(jnp.float32)

    params, param_specs = [], []
    for w, b in zip(folded_ws, folded_bs):
        c_out, c_in = w.shape
        params.append(w.astype(jnp.bfloat16))                   # MXU-native operand
        params.append(b.reshape(c_out, 1).astype(jnp.float32))   # bias stays f32
        param_specs.append(pl.BlockSpec((c_out, c_in), lambda bb, ss, kk: (0, 0)))
        param_specs.append(pl.BlockSpec((c_out, 1), lambda bb, ss, kk: (0, 0)))

    x_spec = pl.BlockSpec((1, CHANNELS[0], tile),
                          lambda bb, ss, kk: (bb, 0, ss * k_per_split + kk))
    out_spec = pl.BlockSpec((1, 1, CHANNELS[-1], 1),
                            lambda bb, ss, kk: (bb, ss, 0, 0))

    kernel = functools.partial(_encoder_kernel, sub_n=sub, n_sub=n_sub)

    out = pl.pallas_call(
        kernel,
        out_shape=jax.ShapeDtypeStruct((B, n_splits, CHANNELS[-1], 1), jnp.float32),
        grid_spec=pltpu.PrefetchScalarGridSpec(
            num_scalar_prefetch=0,
            grid=(B, n_splits, k_per_split),
            in_specs=[x_spec] + param_specs,
            out_specs=out_spec,
            scratch_shapes=[pltpu.VMEM((CHANNELS[-1], 1), jnp.float32)],
        ),
        compiler_params=pltpu.CompilerParams(
            dimension_semantics=("parallel", "parallel", "arbitrary")),
    )(x, *params)

    # Combine per-split partial maxes; shape matches torch.max(x, 2, keepdim=True)[0].
    return jnp.max(out, axis=1)                                  # (B, 16, 1)


def init_params(key):
    """Deterministic conv + batchnorm parameters, with BN (eval mode) folded in.

    Weights are stored (c_out, c_in) — the Conv1d(kernel_size=1) natural layout.
    """
    eps = 1e-5
    folded_ws, folded_bs = [], []
    keys = jax.random.split(key, len(CHANNELS) - 1)
    for i, kk in enumerate(keys):
        c_in, c_out = CHANNELS[i], CHANNELS[i + 1]
        k_w, k_b, k_g, k_beta, k_rm, k_rv = jax.random.split(kk, 6)
        bound = 1.0 / np.sqrt(c_in)
        w = jax.random.uniform(k_w, (c_out, c_in), jnp.float32, -bound, bound)
        b = jax.random.uniform(k_b, (c_out,), jnp.float32, -bound, bound)
        # BatchNorm1d(c_out) affine params / running stats (deterministic, non-trivial).
        gamma = jax.random.uniform(k_g, (c_out,), jnp.float32, 0.5, 1.5)
        beta = 0.1 * jax.random.normal(k_beta, (c_out,), jnp.float32)
        running_mean = 0.1 * jax.random.normal(k_rm, (c_out,), jnp.float32)
        running_var = jax.random.uniform(k_rv, (c_out,), jnp.float32, 0.5, 1.5)
        # Fold eval-mode BN: y = (W x + b - mu) * g/sqrt(v+eps) + beta
        scale = gamma / jnp.sqrt(running_var + eps)
        folded_ws.append(w * scale[:, None])
        folded_bs.append((b - running_mean) * scale + beta)
    return folded_ws, folded_bs


def reference_forward(x_ncw, folded_ws, folded_bs):
    """Pure-JAX reference with matching bf16-matmul / f32-accumulate semantics."""
    h = x_ncw.astype(jnp.float32)                     # (B, C, N)
    for w, b in zip(folded_ws, folded_bs):
        y = jnp.einsum("oc,bcn->bon",
                       w.astype(jnp.bfloat16), h.astype(jnp.bfloat16),
                       preferred_element_type=jnp.float32)
        h = jnp.maximum(y + b[None, :, None], 0.0)
    return jnp.max(h, axis=2, keepdims=True)          # (B, 16, 1)


if __name__ == "__main__":
    key = jax.random.PRNGKey(0)
    k_params, k_x = jax.random.split(key)

    folded_ws, folded_bs = init_params(k_params)

    # Small synthetic input: batch=2, channels=3, points=2048 (NCW like the torch module).
    B, N = 2, 2048
    x = jax.random.normal(k_x, (B, CHANNELS[0], N), jnp.float32)

    y = jax.block_until_ready(encoder_forward(x, folded_ws, folded_bs))
    y_ref = jax.block_until_ready(reference_forward(x, folded_ws, folded_bs))

    assert y.shape == (B, CHANNELS[-1], 1), y.shape
    np.testing.assert_allclose(np.asarray(y), np.asarray(y_ref), rtol=5e-3, atol=5e-3)

    print("KERNEL_OK")
</pallas_src>

<mosaic_0001>
module attributes {stable_mosaic.version = 11 : i64} {
  func.func @_encoder_kernel(%arg0: i32, %arg1: i32, %arg2: i32, %arg3: memref<1x3x1024xf32, #tpu.memory_space<vmem>>, %arg4: memref<64x3xbf16, #tpu.memory_space<vmem>>, %arg5: memref<64x1xf32, #tpu.memory_space<vmem>>, %arg6: memref<128x64xbf16, #tpu.memory_space<vmem>>, %arg7: memref<128x1xf32, #tpu.memory_space<vmem>>, %arg8: memref<128x128xbf16, #tpu.memory_space<vmem>>, %arg9: memref<128x1xf32, #tpu.memory_space<vmem>>, %arg10: memref<256x128xbf16, #tpu.memory_space<vmem>>, %arg11: memref<256x1xf32, #tpu.memory_space<vmem>>, %arg12: memref<16x256xbf16, #tpu.memory_space<vmem>>, %arg13: memref<16x1xf32, #tpu.memory_space<vmem>>, %arg14: memref<1x1x16x1xf32, #tpu.memory_space<vmem>>, %arg15: memref<16x1xf32, #tpu.memory_space<vmem>>) attributes {dimension_semantics = [#tpu.dimension_semantics<parallel>, #tpu.dimension_semantics<parallel>, #tpu.dimension_semantics<arbitrary>], iteration_bounds = array<i64: 2, 2, 1>, scalar_prefetch = 0 : i64, scratch_operands = 1 : i64, tpu.core_type = #tpu.core_type<tc>, window_params = [{transform_indices = @transform_0, window_bounds = array<i64: 1, 3, 1024>}, {pipeline_mode = #tpu.pipeline_mode<synchronous>, transform_indices = @transform_1, window_bounds = array<i64: 64, 3>}, {pipeline_mode = #tpu.pipeline_mode<synchronous>, transform_indices = @transform_2, window_bounds = array<i64: 64, 1>}, {pipeline_mode = #tpu.pipeline_mode<synchronous>, transform_indices = @transform_3, window_bounds = array<i64: 128, 64>}, {pipeline_mode = #tpu.pipeline_mode<synchronous>, transform_indices = @transform_4, window_bounds = array<i64: 128, 1>}, {pipeline_mode = #tpu.pipeline_mode<synchronous>, transform_indices = @transform_5, window_bounds = array<i64: 128, 128>}, {pipeline_mode = #tpu.pipeline_mode<synchronous>, transform_indices = @transform_6, window_bounds = array<i64: 128, 1>}, {pipeline_mode = #tpu.pipeline_mode<synchronous>, transform_indices = @transform_7, window_bounds = array<i64: 256, 128>}, {pipeline_mode = #tpu.pipeline_mode<synchronous>, transform_indices = @transform_8, window_bounds = array<i64: 256, 1>}, {pipeline_mode = #tpu.pipeline_mode<synchronous>, transform_indices = @transform_9, window_bounds = array<i64: 16, 256>}, {pipeline_mode = #tpu.pipeline_mode<synchronous>, transform_indices = @transform_10, window_bounds = array<i64: 16, 1>}, {transform_indices = @transform_11, window_bounds = array<i64: 1, 1, 16, 1>}]} {
    %cst = arith.constant 0xFF800000 : f32
    %0 = vector.broadcast %cst : f32 to vector<16x1xf32>
    %c0_i32 = arith.constant 0 : i32
    %c256_i32 = arith.constant 256 : i32
    %1 = arith.muli %c0_i32, %c256_i32 : i32
    %2 = tpu.assume_multiple %1, 256 : i32
    %c0 = arith.constant 0 : index
    %c0_0 = arith.constant 0 : index
    %3 = arith.index_cast %2 : i32 to index
    %4 = vector.load %arg3[%c0, %c0_0, %3] : memref<1x3x1024xf32, #tpu.memory_space<vmem>>, vector<1x3x256xf32>
    %5 = vector.shape_cast %4 : vector<1x3x256xf32> to vector<3x256xf32>
    %6 = arith.truncf %5 : vector<3x256xf32> to vector<3x256xbf16>
    %c0_1 = arith.constant 0 : index
    %c0_2 = arith.constant 0 : index
    %7 = vector.load %arg4[%c0_1, %c0_2] : memref<64x3xbf16, #tpu.memory_space<vmem>>, vector<64x3xbf16>
    %cst_3 = arith.constant dense<0.000000e+00> : vector<64x256xf32>
    %8 = tpu.matmul %7, %6, %cst_3 {dimension_numbers = #tpu.dot_dimension_numbers<[1], [0], [0], [1], [0, 0, 1, 1], [], []>} : vector<64x3xbf16>, vector<3x256xbf16>, vector<64x256xf32> -> vector<64x256xf32>
    %c0_4 = arith.constant 0 : index
    %c0_5 = arith.constant 0 : index
    %9 = vector.load %arg5[%c0_4, %c0_5] : memref<64x1xf32, #tpu.memory_space<vmem>>, vector<64x1xf32>
    %10 = vector.broadcast %9 : vector<64x1xf32> to vector<64x256xf32>
    %11 = arith.addf %8, %10 : vector<64x256xf32>
    %cst_6 = arith.constant 0.000000e+00 : f32
    %12 = vector.broadcast %cst_6 : f32 to vector<64x256xf32>
    %13 = arith.maximumf %11, %12 : vector<64x256xf32>
    %14 = arith.truncf %13 : vector<64x256xf32> to vector<64x256xbf16>
    %c0_7 = arith.constant 0 : index
    %c0_8 = arith.constant 0 : index
    %15 = vector.load %arg6[%c0_7, %c0_8] : memref<128x64xbf16, #tpu.memory_space<vmem>>, vector<128x64xbf16>
    %cst_9 = arith.constant dense<0.000000e+00> : vector<128x256xf32>
    %16 = tpu.matmul %15, %14, %cst_9 {dimension_numbers = #tpu.dot_dimension_numbers<[1], [0], [0], [1], [0, 0, 1, 1], [], []>} : vector<128x64xbf16>, vector<64x256xbf16>, vector<128x256xf32> -> vector<128x256xf32>
    %c0_10 = arith.constant 0 : index
    %c0_11 = arith.constant 0 : index
    %17 = vector.load %arg7[%c0_10, %c0_11] : memref<128x1xf32, #tpu.memory_space<vmem>>, vector<128x1xf32>
    %18 = vector.broadcast %17 : vector<128x1xf32> to vector<128x256xf32>
    %19 = arith.addf %16, %18 : vector<128x256xf32>
    %cst_12 = arith.constant 0.000000e+00 : f32
    %20 = vector.broadcast %cst_12 : f32 to vector<128x256xf32>
    %21 = arith.maximumf %19, %20 : vector<128x256xf32>
    %22 = arith.truncf %21 : vector<128x256xf32> to vector<128x256xbf16>
    %c0_13 = arith.constant 0 : index
    %c0_14 = arith.constant 0 : index
    %23 = vector.load %arg8[%c0_13, %c0_14] : memref<128x128xbf16, #tpu.memory_space<vmem>>, vector<128x128xbf16>
    %cst_15 = arith.constant dense<0.000000e+00> : vector<128x256xf32>
    %24 = tpu.matmul %23, %22, %cst_15 {dimension_numbers = #tpu.dot_dimension_numbers<[1], [0], [0], [1], [0, 0, 1, 1], [], []>} : vector<128x128xbf16>, vector<128x256xbf16>, vector<128x256xf32> -> vector<128x256xf32>
    %c0_16 = arith.constant 0 : index
    %c0_17 = arith.constant 0 : index
    %25 = vector.load %arg9[%c0_16, %c0_17] : memref<128x1xf32, #tpu.memory_space<vmem>>, vector<128x1xf32>
    %26 = vector.broadcast %25 : vector<128x1xf32> to vector<128x256xf32>
    %27 = arith.addf %24, %26 : vector<128x256xf32>
    %cst_18 = arith.constant 0.000000e+00 : f32
    %28 = vector.broadcast %cst_18 : f32 to vector<128x256xf32>
    %29 = arith.maximumf %27, %28 : vector<128x256xf32>
    %30 = arith.truncf %29 : vector<128x256xf32> to vector<128x256xbf16>
    %c0_19 = arith.constant 0 : index
    %c0_20 = arith.constant 0 : index
    %31 = vector.load %arg10[%c0_19, %c0_20] : memref<256x128xbf16, #tpu.memory_space<vmem>>, vector<256x128xbf16>
    %cst_21 = arith.constant dense<0.000000e+00> : vector<256x256xf32>
    %32 = tpu.matmul %31, %30, %cst_21 {dimension_numbers = #tpu.dot_dimension_numbers<[1], [0], [0], [1], [0, 0, 1, 1], [], []>} : vector<256x128xbf16>, vector<128x256xbf16>, vector<256x256xf32> -> vector<256x256xf32>
    %c0_22 = arith.constant 0 : index
    %c0_23 = arith.constant 0 : index
    %33 = vector.load %arg11[%c0_22, %c0_23] : memref<256x1xf32, #tpu.memory_space<vmem>>, vector<256x1xf32>
    %34 = vector.broadcast %33 : vector<256x1xf32> to vector<256x256xf32>
    %35 = arith.addf %32, %34 : vector<256x256xf32>
    %cst_24 = arith.constant 0.000000e+00 : f32
    %36 = vector.broadcast %cst_24 : f32 to vector<256x256xf32>
    %37 = arith.maximumf %35, %36 : vector<256x256xf32>
    %38 = arith.truncf %37 : vector<256x256xf32> to vector<256x256xbf16>
    %c0_25 = arith.constant 0 : index
    %c0_26 = arith.constant 0 : index
    %39 = vector.load %arg12[%c0_25, %c0_26] : memref<16x256xbf16, #tpu.memory_space<vmem>>, vector<16x256xbf16>
    %cst_27 = arith.constant dense<0.000000e+00> : vector<16x256xf32>
    %40 = tpu.matmul %39, %38, %cst_27 {dimension_numbers = #tpu.dot_dimension_numbers<[1], [0], [0], [1], [0, 0, 1, 1], [], []>} : vector<16x256xbf16>, vector<256x256xbf16>, vector<16x256xf32> -> vector<16x256xf32>
    %c0_28 = arith.constant 0 : index
    %c0_29 = arith.constant 0 : index
    %41 = vector.load %arg13[%c0_28, %c0_29] : memref<16x1xf32, #tpu.memory_space<vmem>>, vector<16x1xf32>
    %42 = vector.broadcast %41 : vector<16x1xf32> to vector<16x256xf32>
    %43 = arith.addf %40, %42 : vector<16x256xf32>
    %cst_30 = arith.constant 0.000000e+00 : f32
    %44 = vector.broadcast %cst_30 : f32 to vector<16x256xf32>
    %45 = arith.maximumf %43, %44 : vector<16x256xf32>
    %cst_31 = arith.constant dense<0xFF800000> : vector<16xf32>
    %46 = vector.multi_reduction <maximumf>, %45, %cst_31 [1] : vector<16x256xf32> to vector<16xf32>
    %47 = vector.shape_cast %46 : vector<16xf32> to vector<16x1xf32>
    %48 = arith.maximumf %0, %47 : vector<16x1xf32>
    %c1_i32 = arith.constant 1 : i32
    %c256_i32_32 = arith.constant 256 : i32
    %49 = arith.muli %c1_i32, %c256_i32_32 : i32
    %50 = tpu.assume_multiple %49, 256 : i32
    %c0_33 = arith.constant 0 : index
    %c0_34 = arith.constant 0 : index
    %51 = arith.index_cast %50 : i32 to index
    %52 = vector.load %arg3[%c0_33, %c0_34, %51] : memref<1x3x1024xf32, #tpu.memory_space<vmem>>, vector<1x3x256xf32>
    %53 = vector.shape_cast %52 : vector<1x3x256xf32> to vector<3x256xf32>
    %54 = arith.truncf %53 : vector<3x256xf32> to vector<3x256xbf16>
    %c0_35 = arith.constant 0 : index
    %c0_36 = arith.constant 0 : index
    %55 = vector.load %arg4[%c0_35, %c0_36] : memref<64x3xbf16, #tpu.memory_space<vmem>>, vector<64x3xbf16>
    %cst_37 = arith.constant dense<0.000000e+00> : vector<64x256xf32>
    %56 = tpu.matmul %55, %54, %cst_37 {dimension_numbers = #tpu.dot_dimension_numbers<[1], [0], [0], [1], [0, 0, 1, 1], [], []>} : vector<64x3xbf16>, vector<3x256xbf16>, vector<64x256xf32> -> vector<64x256xf32>
    %c0_38 = arith.constant 0 : index
    %c0_39 = arith.constant 0 : index
    %57 = vector.load %arg5[%c0_38, %c0_39] : memref<64x1xf32, #tpu.memory_space<vmem>>, vector<64x1xf32>
    %58 = vector.broadcast %57 : vector<64x1xf32> to vector<64x256xf32>
    %59 = arith.addf %56, %58 : vector<64x256xf32>
    %cst_40 = arith.constant 0.000000e+00 : f32
    %60 = vector.broadcast %cst_40 : f32 to vector<64x256xf32>
    %61 = arith.maximumf %59, %60 : vector<64x256xf32>
    %62 = arith.truncf %61 : vector<64x256xf32> to vector<64x256xbf16>
    %c0_41 = arith.constant 0 : index
    %c0_42 = arith.constant 0 : index
    %63 = vector.load %arg6[%c0_41, %c0_42] : memref<128x64xbf16, #tpu.memory_space<vmem>>, vector<128x64xbf16>
    %cst_43 = arith.constant dense<0.000000e+00> : vector<128x256xf32>
    %64 = tpu.matmul %63, %62, %cst_43 {dimension_numbers = #tpu.dot_dimension_numbers<[1], [0], [0], [1], [0, 0, 1, 1], [], []>} : vector<128x64xbf16>, vector<64x256xbf16>, vector<128x256xf32> -> vector<128x256xf32>
    %c0_44 = arith.constant 0 : index
    %c0_45 = arith.constant 0 : index
    %65 = vector.load %arg7[%c0_44, %c0_45] : memref<128x1xf32, #tpu.memory_space<vmem>>, vector<128x1xf32>
    %66 = vector.broadcast %65 : vector<128x1xf32> to vector<128x256xf32>
    %67 = arith.addf %64, %66 : vector<128x256xf32>
    %cst_46 = arith.constant 0.000000e+00 : f32
    %68 = vector.broadcast %cst_46 : f32 to vector<128x256xf32>
    %69 = arith.maximumf %67, %68 : vector<128x256xf32>
    %70 = arith.truncf %69 : vector<128x256xf32> to vector<128x256xbf16>
    %c0_47 = arith.constant 0 : index
    %c0_48 = arith.constant 0 : index
    %71 = vector.load %arg8[%c0_47, %c0_48] : memref<128x128xbf16, #tpu.memory_space<vmem>>, vector<128x128xbf16>
    %cst_49 = arith.constant dense<0.000000e+00> : vector<128x256xf32>
    %72 = tpu.matmul %71, %70, %cst_49 {dimension_numbers = #tpu.dot_dimension_numbers<[1], [0], [0], [1], [0, 0, 1, 1], [], []>} : vector<128x128xbf16>, vector<128x256xbf16>, vector<128x256xf32> -> vector<128x256xf32>
    %c0_50 = arith.constant 0 : index
    %c0_51 = arith.constant 0 : index
    %73 = vector.load %arg9[%c0_50, %c0_51] : memref<128x1xf32, #tpu.memory_space<vmem>>, vector<128x1xf32>
    %74 = vector.broadcast %73 : vector<128x1xf32> to vector<128x256xf32>
    %75 = arith.addf %72, %74 : vector<128x256xf32>
    %cst_52 = arith.constant 0.000000e+00 : f32
    %76 = vector.broadcast %cst_52 : f32 to vector<128x256xf32>
    %77 = arith.maximumf %75, %76 : vector<128x256xf32>
    %78 = arith.truncf %77 : vector<128x256xf32> to vector<128x256xbf16>
    %c0_53 = arith.constant 0 : index
    %c0_54 = arith.constant 0 : index
    %79 = vector.load %arg10[%c0_53, %c0_54] : memref<256x128xbf16, #tpu.memory_space<vmem>>, vector<256x128xbf16>
    %cst_55 = arith.constant dense<0.000000e+00> : vector<256x256xf32>
    %80 = tpu.matmul %79, %78, %cst_55 {dimension_numbers = #tpu.dot_dimension_numbers<[1], [0], [0], [1], [0, 0, 1, 1], [], []>} : vector<256x128xbf16>, vector<128x256xbf16>, vector<256x256xf32> -> vector<256x256xf32>
    %c0_56 = arith.constant 0 : index
    %c0_57 = arith.constant 0 : index
    %81 = vector.load %arg11[%c0_56, %c0_57] : memref<256x1xf32, #tpu.memory_space<vmem>>, vector<256x1xf32>
    %82 = vector.broadcast %81 : vector<256x1xf32> to vector<256x256xf32>
    %83 = arith.addf %80, %82 : vector<256x256xf32>
    %cst_58 = arith.constant 0.000000e+00 : f32
    %84 = vector.broadcast %cst_58 : f32 to vector<256x256xf32>
    %85 = arith.maximumf %83, %84 : vector<256x256xf32>
    %86 = arith.truncf %85 : vector<256x256xf32> to vector<256x256xbf16>
    %c0_59 = arith.constant 0 : index
    %c0_60 = arith.constant 0 : index
    %87 = vector.load %arg12[%c0_59, %c0_60] : memref<16x256xbf16, #tpu.memory_space<vmem>>, vector<16x256xbf16>
    %cst_61 = arith.constant dense<0.000000e+00> : vector<16x256xf32>
    %88 = tpu.matmul %87, %86, %cst_61 {dimension_numbers = #tpu.dot_dimension_numbers<[1], [0], [0], [1], [0, 0, 1, 1], [], []>} : vector<16x256xbf16>, vector<256x256xbf16>, vector<16x256xf32> -> vector<16x256xf32>
    %c0_62 = arith.constant 0 : index
    %c0_63 = arith.constant 0 : index
    %89 = vector.load %arg13[%c0_62, %c0_63] : memref<16x1xf32, #tpu.memory_space<vmem>>, vector<16x1xf32>
    %90 = vector.broadcast %89 : vector<16x1xf32> to vector<16x256xf32>
    %91 = arith.addf %88, %90 : vector<16x256xf32>
    %cst_64 = arith.constant 0.000000e+00 : f32
    %92 = vector.broadcast %cst_64 : f32 to vector<16x256xf32>
    %93 = arith.maximumf %91, %92 : vector<16x256xf32>
    %cst_65 = arith.constant dense<0xFF800000> : vector<16xf32>
    %94 = vector.multi_reduction <maximumf>, %93, %cst_65 [1] : vector<16x256xf32> to vector<16xf32>
    %95 = vector.shape_cast %94 : vector<16xf32> to vector<16x1xf32>
    %96 = arith.maximumf %48, %95 : vector<16x1xf32>
    %c2_i32 = arith.constant 2 : i32
    %c256_i32_66 = arith.constant 256 : i32
    %97 = arith.muli %c2_i32, %c256_i32_66 : i32
    %98 = tpu.assume_multiple %97, 256 : i32
    %c0_67 = arith.constant 0 : index
    %c0_68 = arith.constant 0 : index
    %99 = arith.index_cast %98 : i32 to index
    %100 = vector.load %arg3[%c0_67, %c0_68, %99] : memref<1x3x1024xf32, #tpu.memory_space<vmem>>, vector<1x3x256xf32>
    %101 = vector.shape_cast %100 : vector<1x3x256xf32> to vector<3x256xf32>
    %102 = arith.truncf %101 : vector<3x256xf32> to vector<3x256xbf16>
    %c0_69 = arith.constant 0 : index
    %c0_70 = arith.constant 0 : index
    %103 = vector.load %arg4[%c0_69, %c0_70] : memref<64x3xbf16, #tpu.memory_space<vmem>>, vector<64x3xbf16>
    %cst_71 = arith.constant dense<0.000000e+00> : vector<64x256xf32>
    %104 = tpu.matmul %103, %102, %cst_71 {dimension_numbers = #tpu.dot_dimension_numbers<[1], [0], [0], [1], [0, 0, 1, 1], [], []>} : vector<64x3xbf16>, vector<3x256xbf16>, vector<64x256xf32> -> vector<64x256xf32>
    %c0_72 = arith.constant 0 : index
    %c0_73 = arith.constant 0 : index
    %105 = vector.load %arg5[%c0_72, %c0_73] : memref<64x1xf32, #tpu.memory_space<vmem>>, vector<64x1xf32>
    %106 = vector.broadcast %105 : vector<64x1xf32> to vector<64x256xf32>
    %107 = arith.addf %104, %106 : vector<64x256xf32>
    %cst_74 = arith.constant 0.000000e+00 : f32
    %108 = vector.broadcast %cst_74 : f32 to vector<64x256xf32>
    %109 = arith.maximumf %107, %108 : vector<64x256xf32>
    %110 = arith.truncf %109 : vector<64x256xf32> to vector<64x256xbf16>
    %c0_75 = arith.constant 0 : index
    %c0_76 = arith.constant 0 : index
    %111 = vector.load %arg6[%c0_75, %c0_76] : memref<128x64xbf16, #tpu.memory_space<vmem>>, vector<128x64xbf16>
    %cst_77 = arith.constant dense<0.000000e+00> : vector<128x256xf32>
    %112 = tpu.matmul %111, %110, %cst_77 {dimension_numbers = #tpu.dot_dimension_numbers<[1], [0], [0], [1], [0, 0, 1, 1], [], []>} : vector<128x64xbf16>, vector<64x256xbf16>, vector<128x256xf32> -> vector<128x256xf32>
    %c0_78 = arith.constant 0 : index
    %c0_79 = arith.constant 0 : index
    %113 = vector.load %arg7[%c0_78, %c0_79] : memref<128x1xf32, #tpu.memory_space<vmem>>, vector<128x1xf32>
    %114 = vector.broadcast %113 : vector<128x1xf32> to vector<128x256xf32>
    %115 = arith.addf %112, %114 : vector<128x256xf32>
    %cst_80 = arith.constant 0.000000e+00 : f32
    %116 = vector.broadcast %cst_80 : f32 to vector<128x256xf32>
    %117 = arith.maximumf %115, %116 : vector<128x256xf32>
    %118 = arith.truncf %117 : vector<128x256xf32> to vector<128x256xbf16>
    %c0_81 = arith.constant 0 : index
    %c0_82 = arith.constant 0 : index
    %119 = vector.load %arg8[%c0_81, %c0_82] : memref<128x128xbf16, #tpu.memory_space<vmem>>, vector<128x128xbf16>
    %cst_83 = arith.constant dense<0.000000e+00> : vector<128x256xf32>
    %120 = tpu.matmul %119, %118, %cst_83 {dimension_numbers = #tpu.dot_dimension_numbers<[1], [0], [0], [1], [0, 0, 1, 1], [], []>} : vector<128x128xbf16>, vector<128x256xbf16>, vector<128x256xf32> -> vector<128x256xf32>
    %c0_84 = arith.constant 0 : index
    %c0_85 = arith.constant 0 : index
    %121 = vector.load %arg9[%c0_84, %c0_85] : memref<128x1xf32, #tpu.memory_space<vmem>>, vector<128x1xf32>
    %122 = vector.broadcast %121 : vector<128x1xf32> to vector<128x256xf32>
    %123 = arith.addf %120, %122 : vector<128x256xf32>
    %cst_86 = arith.constant 0.000000e+00 : f32
    %124 = vector.broadcast %cst_86 : f32 to vector<128x256xf32>
    %125 = arith.maximumf %123, %124 : vector<128x256xf32>
    %126 = arith.truncf %125 : vector<128x256xf32> to vector<128x256xbf16>
    %c0_87 = arith.constant 0 : index
    %c0_88 = arith.constant 0 : index
    %127 = vector.load %arg10[%c0_87, %c0_88] : memref<256x128xbf16, #tpu.memory_space<vmem>>, vector<256x128xbf16>
    %cst_89 = arith.constant dense<0.000000e+00> : vector<256x256xf32>
    %128 = tpu.matmul %127, %126, %cst_89 {dimension_numbers = #tpu.dot_dimension_numbers<[1], [0], [0], [1], [0, 0, 1, 1], [], []>} : vector<256x128xbf16>, vector<128x256xbf16>, vector<256x256xf32> -> vector<256x256xf32>
    %c0_90 = arith.constant 0 : index
    %c0_91 = arith.constant 0 : index
    %129 = vector.load %arg11[%c0_90, %c0_91] : memref<256x1xf32, #tpu.memory_space<vmem>>, vector<256x1xf32>
    %130 = vector.broadcast %129 : vector<256x1xf32> to vector<256x256xf32>
    %131 = arith.addf %128, %130 : vector<256x256xf32>
    %cst_92 = arith.constant 0.000000e+00 : f32
    %132 = vector.broadcast %cst_92 : f32 to vector<256x256xf32>
    %133 = arith.maximumf %131, %132 : vector<256x256xf32>
    %134 = arith.truncf %133 : vector<256x256xf32> to vector<256x256xbf16>
    %c0_93 = arith.constant 0 : index
    %c0_94 = arith.constant 0 : index
    %135 = vector.load %arg12[%c0_93, %c0_94] : memref<16x256xbf16, #tpu.memory_space<vmem>>, vector<16x256xbf16>
    %cst_95 = arith.constant dense<0.000000e+00> : vector<16x256xf32>
    %136 = tpu.matmul %135, %134, %cst_95 {dimension_numbers = #tpu.dot_dimension_numbers<[1], [0], [0], [1], [0, 0, 1, 1], [], []>} : vector<16x256xbf16>, vector<256x256xbf16>, vector<16x256xf32> -> vector<16x256xf32>
    %c0_96 = arith.constant 0 : index
    %c0_97 = arith.constant 0 : index
    %137 = vector.load %arg13[%c0_96, %c0_97] : memref<16x1xf32, #tpu.memory_space<vmem>>, vector<16x1xf32>
    %138 = vector.broadcast %137 : vector<16x1xf32> to vector<16x256xf32>
    %139 = arith.addf %136, %138 : vector<16x256xf32>
    %cst_98 = arith.constant 0.000000e+00 : f32
    %140 = vector.broadcast %cst_98 : f32 to vector<16x256xf32>
    %141 = arith.maximumf %139, %140 : vector<16x256xf32>
    %cst_99 = arith.constant dense<0xFF800000> : vector<16xf32>
    %142 = vector.multi_reduction <maximumf>, %141, %cst_99 [1] : vector<16x256xf32> to vector<16xf32>
    %143 = vector.shape_cast %142 : vector<16xf32> to vector<16x1xf32>
    %144 = arith.maximumf %96, %143 : vector<16x1xf32>
    %c3_i32 = arith.constant 3 : i32
    %c256_i32_100 = arith.constant 256 : i32
    %145 = arith.muli %c3_i32, %c256_i32_100 : i32
    %146 = tpu.assume_multiple %145, 256 : i32
    %c0_101 = arith.constant 0 : index
    %c0_102 = arith.constant 0 : index
    %147 = arith.index_cast %146 : i32 to index
    %148 = vector.load %arg3[%c0_101, %c0_102, %147] : memref<1x3x1024xf32, #tpu.memory_space<vmem>>, vector<1x3x256xf32>
    %149 = vector.shape_cast %148 : vector<1x3x256xf32> to vector<3x256xf32>
    %150 = arith.truncf %149 : vector<3x256xf32> to vector<3x256xbf16>
    %c0_103 = arith.constant 0 : index
    %c0_104 = arith.constant 0 : index
    %151 = vector.load %arg4[%c0_103, %c0_104] : memref<64x3xbf16, #tpu.memory_space<vmem>>, vector<64x3xbf16>
    %cst_105 = arith.constant dense<0.000000e+00> : vector<64x256xf32>
    %152 = tpu.matmul %151, %150, %cst_105 {dimension_numbers = #tpu.dot_dimension_numbers<[1], [0], [0], [1], [0, 0, 1, 1], [], []>} : vector<64x3xbf16>, vector<3x256xbf16>, vector<64x256xf32> -> vector<64x256xf32>
    %c0_106 = arith.constant 0 : index
    %c0_107 = arith.constant 0 : index
    %153 = vector.load %arg5[%c0_106, %c0_107] : memref<64x1xf32, #tpu.memory_space<vmem>>, vector<64x1xf32>
    %154 = vector.broadcast %153 : vector<64x1xf32> to vector<64x256xf32>
    %155 = arith.addf %152, %154 : vector<64x256xf32>
    %cst_108 = arith.constant 0.000000e+00 : f32
    %156 = vector.broadcast %cst_108 : f32 to vector<64x256xf32>
    %157 = arith.maximumf %155, %156 : vector<64x256xf32>
    %158 = arith.truncf %157 : vector<64x256xf32> to vector<64x256xbf16>
    %c0_109 = arith.constant 0 : index
    %c0_110 = arith.constant 0 : index
    %159 = vector.load %arg6[%c0_109, %c0_110] : memref<128x64xbf16, #tpu.memory_space<vmem>>, vector<128x64xbf16>
    %cst_111 = arith.constant dense<0.000000e+00> : vector<128x256xf32>
    %160 = tpu.matmul %159, %158, %cst_111 {dimension_numbers = #tpu.dot_dimension_numbers<[1], [0], [0], [1], [0, 0, 1, 1], [], []>} : vector<128x64xbf16>, vector<64x256xbf16>, vector<128x256xf32> -> vector<128x256xf32>
    %c0_112 = arith.constant 0 : index
    %c0_113 = arith.constant 0 : index
    %161 = vector.load %arg7[%c0_112, %c0_113] : memref<128x1xf32, #tpu.memory_space<vmem>>, vector<128x1xf32>
    %162 = vector.broadcast %161 : vector<128x1xf32> to vector<128x256xf32>
    %163 = arith.addf %160, %162 : vector<128x256xf32>
    %cst_114 = arith.constant 0.000000e+00 : f32
    %164 = vector.broadcast %cst_114 : f32 to vector<128x256xf32>
    %165 = arith.maximumf %163, %164 : vector<128x256xf32>
    %166 = arith.truncf %165 : vector<128x256xf32> to vector<128x256xbf16>
    %c0_115 = arith.constant 0 : index
    %c0_116 = arith.constant 0 : index
    %167 = vector.load %arg8[%c0_115, %c0_116] : memref<128x128xbf16, #tpu.memory_space<vmem>>, vector<128x128xbf16>
    %cst_117 = arith.constant dense<0.000000e+00> : vector<128x256xf32>
    %168 = tpu.matmul %167, %166, %cst_117 {dimension_numbers = #tpu.dot_dimension_numbers<[1], [0], [0], [1], [0, 0, 1, 1], [], []>} : vector<128x128xbf16>, vector<128x256xbf16>, vector<128x256xf32> -> vector<128x256xf32>
    %c0_118 = arith.constant 0 : index
    %c0_119 = arith.constant 0 : index
    %169 = vector.load %arg9[%c0_118, %c0_119] : memref<128x1xf32, #tpu.memory_space<vmem>>, vector<128x1xf32>
    %170 = vector.broadcast %169 : vector<128x1xf32> to vector<128x256xf32>
    %171 = arith.addf %168, %170 : vector<128x256xf32>
    %cst_120 = arith.constant 0.000000e+00 : f32
    %172 = vector.broadcast %cst_120 : f32 to vector<128x256xf32>
    %173 = arith.maximumf %171, %172 : vector<128x256xf32>
    %174 = arith.truncf %173 : vector<128x256xf32> to vector<128x256xbf16>
    %c0_121 = arith.constant 0 : index
    %c0_122 = arith.constant 0 : index
    %175 = vector.load %arg10[%c0_121, %c0_122] : memref<256x128xbf16, #tpu.memory_space<vmem>>, vector<256x128xbf16>
    %cst_123 = arith.constant dense<0.000000e+00> : vector<256x256xf32>
    %176 = tpu.matmul %175, %174, %cst_123 {dimension_numbers = #tpu.dot_dimension_numbers<[1], [0], [0], [1], [0, 0, 1, 1], [], []>} : vector<256x128xbf16>, vector<128x256xbf16>, vector<256x256xf32> -> vector<256x256xf32>
    %c0_124 = arith.constant 0 : index
    %c0_125 = arith.constant 0 : index
    %177 = vector.load %arg11[%c0_124, %c0_125] : memref<256x1xf32, #tpu.memory_space<vmem>>, vector<256x1xf32>
    %178 = vector.broadcast %177 : vector<256x1xf32> to vector<256x256xf32>
    %179 = arith.addf %176, %178 : vector<256x256xf32>
    %cst_126 = arith.constant 0.000000e+00 : f32
    %180 = vector.broadcast %cst_126 : f32 to vector<256x256xf32>
    %181 = arith.maximumf %179, %180 : vector<256x256xf32>
    %182 = arith.truncf %181 : vector<256x256xf32> to vector<256x256xbf16>
    %c0_127 = arith.constant 0 : index
    %c0_128 = arith.constant 0 : index
    %183 = vector.load %arg12[%c0_127, %c0_128] : memref<16x256xbf16, #tpu.memory_space<vmem>>, vector<16x256xbf16>
    %cst_129 = arith.constant dense<0.000000e+00> : vector<16x256xf32>
    %184 = tpu.matmul %183, %182, %cst_129 {dimension_numbers = #tpu.dot_dimension_numbers<[1], [0], [0], [1], [0, 0, 1, 1], [], []>} : vector<16x256xbf16>, vector<256x256xbf16>, vector<16x256xf32> -> vector<16x256xf32>
    %c0_130 = arith.constant 0 : index
    %c0_131 = arith.constant 0 : index
    %185 = vector.load %arg13[%c0_130, %c0_131] : memref<16x1xf32, #tpu.memory_space<vmem>>, vector<16x1xf32>
    %186 = vector.broadcast %185 : vector<16x1xf32> to vector<16x256xf32>
    %187 = arith.addf %184, %186 : vector<16x256xf32>
    %cst_132 = arith.constant 0.000000e+00 : f32
    %188 = vector.broadcast %cst_132 : f32 to vector<16x256xf32>
    %189 = arith.maximumf %187, %188 : vector<16x256xf32>
    %cst_133 = arith.constant dense<0xFF800000> : vector<16xf32>
    %190 = vector.multi_reduction <maximumf>, %189, %cst_133 [1] : vector<16x256xf32> to vector<16xf32>
    %191 = vector.shape_cast %190 : vector<16xf32> to vector<16x1xf32>
    %192 = arith.maximumf %144, %191 : vector<16x1xf32>
    %c4_i32 = arith.constant 4 : i32
    %c0_i32_134 = arith.constant 0 : i32
    %193 = arith.cmpi eq, %arg2, %c0_i32_134 : i32
    %194 = arith.extui %193 : i1 to i32
    %c0_i32_135 = arith.constant 0 : i32
    %195 = arith.cmpi ne, %194, %c0_i32_135 : i32
    scf.if %195 {
      %c0_140 = arith.constant 0 : index
      %c0_141 = arith.constant 0 : index
      %202 = vector.load %arg15[%c0_140, %c0_141] : memref<16x1xf32, #tpu.memory_space<vmem>>, vector<16x1xf32>
      tpu.vector_store %arg15[%c0_140, %c0_141], %192 {strides = array<i32>} : memref<16x1xf32, #tpu.memory_space<vmem>>, vector<16x1xf32>,
    } else {
    }
    %c0_i32_136 = arith.constant 0 : i32
    %196 = arith.cmpi ne, %arg2, %c0_i32_136 : i32
    %197 = arith.extui %196 : i1 to i32
    %c0_i32_137 = arith.constant 0 : i32
    %198 = arith.cmpi ne, %197, %c0_i32_137 : i32
    scf.if %198 {
      %c0_140 = arith.constant 0 : index
      %c0_141 = arith.constant 0 : index
      %202 = vector.load %arg15[%c0_140, %c0_141] : memref<16x1xf32, #tpu.memory_space<vmem>>, vector<16x1xf32>
      %203 = arith.maximumf %202, %192 : vector<16x1xf32>
      %c0_142 = arith.constant 0 : index
      %c0_143 = arith.constant 0 : index
      %204 = vector.load %arg15[%c0_142, %c0_143] : memref<16x1xf32, #tpu.memory_space<vmem>>, vector<16x1xf32>
      tpu.vector_store %arg15[%c0_142, %c0_143], %203 {strides = array<i32>} : memref<16x1xf32, #tpu.memory_space<vmem>>, vector<16x1xf32>,
    } else {
    }
    %c0_i32_138 = arith.constant 0 : i32
    %199 = arith.cmpi eq, %arg2, %c0_i32_138 : i32
    %200 = arith.extui %199 : i1 to i32
    %c0_i32_139 = arith.constant 0 : i32
    %201 = arith.cmpi ne, %200, %c0_i32_139 : i32
    scf.if %201 {
      %c0_140 = arith.constant 0 : index
      %c0_141 = arith.constant 0 : index
      %202 = vector.load %arg15[%c0_140, %c0_141] : memref<16x1xf32, #tpu.memory_space<vmem>>, vector<16x1xf32>
      %c0_142 = arith.constant 0 : index
      %c0_143 = arith.constant 0 : index
      %c0_144 = arith.constant 0 : index
      %c0_145 = arith.constant 0 : index
      %203 = vector.load %arg14[%c0_142, %c0_143, %c0_144, %c0_145] : memref<1x1x16x1xf32, #tpu.memory_space<vmem>>, vector<1x1x16x1xf32>
      %204 = vector.shape_cast %203 : vector<1x1x16x1xf32> to vector<16x1xf32>
      %205 = vector.shape_cast %202 : vector<16x1xf32> to vector<1x1x16x1xf32>
      tpu.vector_store %arg14[%c0_142, %c0_143, %c0_144, %c0_145], %205 {strides = array<i32>} : memref<1x1x16x1xf32, #tpu.memory_space<vmem>>, vector<1x1x16x1xf32>,
    } else {
    }
    return
  }
  func.func @transform_0(%arg0: i32, %arg1: i32, %arg2: i32) -> (i32, i32, i32) {
    %c1_i32 = arith.constant 1 : i32
    %0 = arith.muli %arg1, %c1_i32 : i32
    %1 = arith.addi %0, %arg2 : i32
    %c0_i32 = arith.constant 0 : i32
    %c0_i32_0 = arith.constant 0 : i32
    return %arg0, %c0_i32, %1 : i32, i32, i32
  }
  func.func @transform_1(%arg0: i32, %arg1: i32, %arg2: i32) -> (i32, i32) {
    %c0_i32 = arith.constant 0 : i32
    %c0_i32_0 = arith.constant 0 : i32
    %c0_i32_1 = arith.constant 0 : i32
    return %c0_i32, %c0_i32_0 : i32, i32
  }
  func.func @transform_2(%arg0: i32, %arg1: i32, %arg2: i32) -> (i32, i32) {
    %c0_i32 = arith.constant 0 : i32
    %c0_i32_0 = arith.constant 0 : i32
    %c0_i32_1 = arith.constant 0 : i32
    return %c0_i32, %c0_i32_0 : i32, i32
  }
  func.func @transform_3(%arg0: i32, %arg1: i32, %arg2: i32) -> (i32, i32) {
    %c0_i32 = arith.constant 0 : i32
    %c0_i32_0 = arith.constant 0 : i32
    %c0_i32_1 = arith.constant 0 : i32
    return %c0_i32, %c0_i32_0 : i32, i32
  }
  func.func @transform_4(%arg0: i32, %arg1: i32, %arg2: i32) -> (i32, i32) {
    %c0_i32 = arith.constant 0 : i32
    %c0_i32_0 = arith.constant 0 : i32
    %c0_i32_1 = arith.constant 0 : i32
    return %c0_i32, %c0_i32_0 : i32, i32
  }
  func.func @transform_5(%arg0: i32, %arg1: i32, %arg2: i32) -> (i32, i32) {
    %c0_i32 = arith.constant 0 : i32
    %c0_i32_0 = arith.constant 0 : i32
    %c0_i32_1 = arith.constant 0 : i32
    return %c0_i32, %c0_i32_0 : i32, i32
  }
  func.func @transform_6(%arg0: i32, %arg1: i32, %arg2: i32) -> (i32, i32) {
    %c0_i32 = arith.constant 0 : i32
    %c0_i32_0 = arith.constant 0 : i32
    %c0_i32_1 = arith.constant 0 : i32
    return %c0_i32, %c0_i32_0 : i32, i32
  }
  func.func @transform_7(%arg0: i32, %arg1: i32, %arg2: i32) -> (i32, i32) {
    %c0_i32 = arith.constant 0 : i32
    %c0_i32_0 = arith.constant 0 : i32
    %c0_i32_1 = arith.constant 0 : i32
    return %c0_i32, %c0_i32_0 : i32, i32
  }
  func.func @transform_8(%arg0: i32, %arg1: i32, %arg2: i32) -> (i32, i32) {
    %c0_i32 = arith.constant 0 : i32
    %c0_i32_0 = arith.constant 0 : i32
    %c0_i32_1 = arith.constant 0 : i32
    return %c0_i32, %c0_i32_0 : i32, i32
  }
  func.func @transform_9(%arg0: i32, %arg1: i32, %arg2: i32) -> (i32, i32) {
    %c0_i32 = arith.constant 0 : i32
    %c0_i32_0 = arith.constant 0 : i32
    %c0_i32_1 = arith.constant 0 : i32
    return %c0_i32, %c0_i32_0 : i32, i32
  }
  func.func @transform_10(%arg0: i32, %arg1: i32, %arg2: i32) -> (i32, i32) {
    %c0_i32 = arith.constant 0 : i32
    %c0_i32_0 = arith.constant 0 : i32
    %c0_i32_1 = arith.constant 0 : i32
    return %c0_i32, %c0_i32_0 : i32, i32
  }
  func.func @transform_11(%arg0: i32, %arg1: i32, %arg2: i32) -> (i32, i32, i32, i32) {
    %c0_i32 = arith.constant 0 : i32
    %c0_i32_0 = arith.constant 0 : i32
    %c0_i32_1 = arith.constant 0 : i32
    return %arg0, %arg1, %c0_i32, %c0_i32_0 : i32, i32, i32, i32
  }
}

</mosaic_0001>

<llo_original>
// kernel: tpu_custom_call.1
$region0: #{tpu_custom_call.1}
  #allocation0 [shape = 'u32[]', space=smem, size = 0x4, offset = 0x4, fixed_abs, tag = 'smem constant byte address 0x4 - core index']
  #allocation1 [shape = 'u32[144,128]{1,0:T(1,128)}', space=vmem, size = 0x12000, scoped, tag = 'internal scratch']
  #allocation2 [shape = 'f32[16,1]{1,0:T(8,128)}', space=vmem, size = 0x2000, scoped, tag = 'scratch operand']
  %s0 = inlined_call_operand.vmem [shape: f32[2,3,2048], index: 0, kind: input, shape index: {}]
  %s1 = inlined_call_operand.vmem [shape: bf16[64,3], index: 1, kind: input, shape index: {}]
  %s2 = inlined_call_operand.vmem [shape: f32[64,1], index: 2, kind: input, shape index: {}]
  %s3 = inlined_call_operand.vmem [shape: bf16[128,64], index: 3, kind: input, shape index: {}]
  %s4 = inlined_call_operand.vmem [shape: f32[128,1], index: 4, kind: input, shape index: {}]
  %s5 = inlined_call_operand.vmem [shape: bf16[128,128], index: 5, kind: input, shape index: {}]
  %s6 = inlined_call_operand.vmem [shape: f32[128,1], index: 6, kind: input, shape index: {}]
  %s7 = inlined_call_operand.vmem [shape: bf16[256,128], index: 7, kind: input, shape index: {}]
  %s8 = inlined_call_operand.vmem [shape: f32[256,1], index: 8, kind: input, shape index: {}]
  %s9 = inlined_call_operand.vmem [shape: bf16[16,256], index: 9, kind: input, shape index: {}]
  %s10 = inlined_call_operand.vmem [shape: f32[16,1], index: 10, kind: input, shape index: {}]
  %s11 = inlined_call_operand.vmem [shape: f32[2,2,16,1], index: 11, kind: output, shape index: {}]
  %s12 = sld [smem:[#allocation0]]
  $region89: #{tpu_custom_call.1} parent=0
    _
  %s14 = ssub.s32 1, %s12
  %s15 = scalar_select 0, %s14, %s12
  loop: start=0, step=1, limit=6
  $region2: #{tpu_custom_call.1} parent=0 // loop_pre_header
    _
  $region3: #{tpu_custom_call.1} parent=0 // loop_header
    %s17 = sphi 0, %s21
    %p18 = scmp.ge.s32.totalorder %s17, 6
    %s24 = sphi 0, %s43
    %s25 = sphi 0, %s39
    %s26 = sphi 0, %s35
    %s27 = sphi 0, %s24
    %s28 = sphi 0, %s25
    %s29 = sphi 0, %s26
    %s30 = sphi 0, %s27
    %s31 = sphi 0, %s28
    %s32 = sphi 0, %s29
    %s50 = sphi 0, %s52
    %s53 = sphi 0, %s50
    %s54 = sphi 0, %s53
    %s70 = sphi 0, %s54
    %s74 = sphi 0, %s74
    %s76 = sphi 0, %s74
    %s77 = sphi 0, %s76
    %s91 = sphi 0, %s77
    %s95 = sphi 0, %s95
    %s97 = sphi 0, %s95
    %s98 = sphi 0, %s97
    %s112 = sphi 0, %s98
    %s116 = sphi 0, %s116
    %s118 = sphi 0, %s116
    %s119 = sphi 0, %s118
    %s133 = sphi 0, %s119
    %s137 = sphi 0, %s137
    %s139 = sphi 0, %s137
    %s140 = sphi 0, %s139
    %s154 = sphi 0, %s140
    %s158 = sphi 0, %s158
    %s160 = sphi 0, %s158
    %s161 = sphi 0, %s160
    %s175 = sphi 0, %s161
    %s179 = sphi 0, %s179
    %s181 = sphi 0, %s179
    %s182 = sphi 0, %s181
    %s196 = sphi 0, %s182
    %s200 = sphi 0, %s200
    %s202 = sphi 0, %s200
    %s203 = sphi 0, %s202
    %s217 = sphi 0, %s203
    %s221 = sphi 0, %s221
    %s223 = sphi 0, %s221
    %s224 = sphi 0, %s223
    %s238 = sphi 0, %s224
    %s242 = sphi 0, %s242
    %s244 = sphi 0, %s242
    %s245 = sphi 0, %s244
    %s259 = sphi 0, %s245
    %s263 = sphi 0, %s263
    %s265 = sphi 0, %s263
    %s266 = sphi 0, %s265
    %s280 = sphi 0, %s266
    %s288 = sphi 0, %s290
    %s291 = sphi 0, %s288
    %s292 = sphi 0, %s291
    %s308 = sphi 0, %s292
  $region4: #{tpu_custom_call.1} parent=0 // loop_header_branch
    %20 = sbr.rel (%p18) target = $region8
  $region5: #{tpu_custom_call.1} parent=0 // loop_body
    %s22 = ssub.s32 %s17, 1
    %s23 = ssub.s32 %s17, 2
    %s33 = sadd.s32 1, %s26
    %p34 = scmp.ge.s32.totalorder %s33, 1
    %s35 = scalar_select %p34, 0, %s33
    %s36 = sadd.s32 1, %s25
    %s37 = scalar_select %p34, %s36, %s25
    %p38 = scmp.ge.s32.totalorder %s37, 2
    %s39 = scalar_select %p38, 0, %s37
    %s40 = sadd.s32 1, %s24
    %s41 = scalar_select %p38, %s40, %s24
    %p42 = scmp.ge.s32.totalorder %s41, 2
    %s43 = scalar_select %p42, 0, %s41
    %s44 = sadd.s32 %s25, %s26
    %s45 = sadd.s32 %s39, %s35
    %s46 = ssub.s32 %s24, %s43
    %s47 = ssub.s32 %s44, %s45
    %s48 = sor.u32 %s46, %s47
    %p49 = scmp.eq.s32.totalorder %s48, 0
    %s51 = sadd.s32 %s50, 1
    %s52 = scalar_select %p49, %s50, %s51
    %p55 = pneg %p49
    %p56 = scmp.eq.s32.totalorder %s17, 3
    %p57 = por %p55, %p56
    %p58 = scmp.ne.s32.totalorder %s50, %s53
    %p59 = scmp.eq.s32.totalorder %s17, 0
    %p60 = por %p58, %p59
    %p61 = scmp.ne.s32.totalorder %s50, %s53
    %p62 = scmp.eq.s32.totalorder %s22, 3
    %p63 = por %p61, %p62
    %p64 = scmp.ne.s32.totalorder %s53, %s54
    %p65 = scmp.eq.s32.totalorder %s22, 0
    %p66 = por %p64, %p65
    %p67 = scmp.ne.s32.totalorder %s53, %s54
    %p68 = scmp.eq.s32.totalorder %s23, 3
    %p69 = por %p67, %p68
    %p71 = scmp.ne.s32.totalorder %s54, %s70
    %p72 = scmp.eq.s32.totalorder %s23, 0
    %p73 = por %p71, %p72
    %s75 = sadd.s32 %s74, 1
    %p78 = scmp.eq.s32.totalorder %s17, 3
    %p79 = scmp.ne.s32.totalorder %s74, %s76
    %p80 = scmp.eq.s32.totalorder %s17, 0
    %p81 = por %p79, %p80
    %p82 = scmp.ne.s32.totalorder %s74, %s76
    %p83 = scmp.eq.s32.totalorder %s22, 3
    %p84 = por %p82, %p83
    %p85 = scmp.ne.s32.totalorder %s76, %s77
    %p86 = scmp.eq.s32.totalorder %s22, 0
    %p87 = por %p85, %p86
    %p88 = scmp.ne.s32.totalorder %s76, %s77
    %p89 = scmp.eq.s32.totalorder %s23, 3
    %p90 = por %p88, %p89
    %p92 = scmp.ne.s32.totalorder %s77, %s91
    %p93 = scmp.eq.s32.totalorder %s23, 0
    %p94 = por %p92, %p93
    %s96 = sadd.s32 %s95, 1
    %p99 = scmp.eq.s32.totalorder %s17, 3
    %p100 = scmp.ne.s32.totalorder %s95, %s97
    %p101 = scmp.eq.s32.totalorder %s17, 0
    %p102 = por %p100, %p101
    %p103 = scmp.ne.s32.totalorder %s95, %s97
    %p104 = scmp.eq.s32.totalorder %s22, 3
    %p105 = por %p103, %p104
    %p106 = scmp.ne.s32.totalorder %s97, %s98
    %p107 = scmp.eq.s32.totalorder %s22, 0
    %p108 = por %p106, %p107
    %p109 = scmp.ne.s32.totalorder %s97, %s98
    %p110 = scmp.eq.s32.totalorder %s23, 3
    %p111 = por %p109, %p110
    %p113 = scmp.ne.s32.totalorder %s98, %s112
    %p114 = scmp.eq.s32.totalorder %s23, 0
    %p115 = por %p113, %p114
    %s117 = sadd.s32 %s116, 1
    %p120 = scmp.eq.s32.totalorder %s17, 3
    %p121 = scmp.ne.s32.totalorder %s116, %s118
    %p122 = scmp.eq.s32.totalorder %s17, 0
    %p123 = por %p121, %p122
    %p124 = scmp.ne.s32.totalorder %s116, %s118
    %p125 = scmp.eq.s32.totalorder %s22, 3
    %p126 = por %p124, %p125
    %p127 = scmp.ne.s32.totalorder %s118, %s119
    %p128 = scmp.eq.s32.totalorder %s22, 0
    %p129 = por %p127, %p128
    %p130 = scmp.ne.s32.totalorder %s118, %s119
    %p131 = scmp.eq.s32.totalorder %s23, 3
    %p132 = por %p130, %p131
    %p134 = scmp.ne.s32.totalorder %s119, %s133
    %p135 = scmp.eq.s32.totalorder %s23, 0
    %p136 = por %p134, %p135
    %s138 = sadd.s32 %s137, 1
    %p141 = scmp.eq.s32.totalorder %s17, 3
    %p142 = scmp.ne.s32.totalorder %s137, %s139
    %p143 = scmp.eq.s32.totalorder %s17, 0
    %p144 = por %p142, %p143
    %p145 = scmp.ne.s32.totalorder %s137, %s139
    %p146 = scmp.eq.s32.totalorder %s22, 3
    %p147 = por %p145, %p146
    %p148 = scmp.ne.s32.totalorder %s139, %s140
    %p149 = scmp.eq.s32.totalorder %s22, 0
    %p150 = por %p148, %p149
    %p151 = scmp.ne.s32.totalorder %s139, %s140
    %p152 = scmp.eq.s32.totalorder %s23, 3
    %p153 = por %p151, %p152
    %p155 = scmp.ne.s32.totalorder %s140, %s154
    %p156 = scmp.eq.s32.totalorder %s23, 0
    %p157 = por %p155, %p156
    %s159 = sadd.s32 %s158, 1
    %p162 = scmp.eq.s32.totalorder %s17, 3
    %p163 = scmp.ne.s32.totalorder %s158, %s160
    %p164 = scmp.eq.s32.totalorder %s17, 0
    %p165 = por %p163, %p164
    %p166 = scmp.ne.s32.totalorder %s158, %s160
    %p167 = scmp.eq.s32.totalorder %s22, 3
    %p168 = por %p166, %p167
    %p169 = scmp.ne.s32.totalorder %s160, %s161
    %p170 = scmp.eq.s32.totalorder %s22, 0
    %p171 = por %p169, %p170
    %p172 = scmp.ne.s32.totalorder %s160, %s161
    %p173 = scmp.eq.s32.totalorder %s23, 3
    %p174 = por %p172, %p173
    %p176 = scmp.ne.s32.totalorder %s161, %s175
    %p177 = scmp.eq.s32.totalorder %s23, 0
    %p178 = por %p176, %p177
    %s180 = sadd.s32 %s179, 1
    %p183 = scmp.eq.s32.totalorder %s17, 3
    %p184 = scmp.ne.s32.totalorder %s179, %s181
    %p185 = scmp.eq.s32.totalorder %s17, 0
    %p186 = por %p184, %p185
    %p187 = scmp.ne.s32.totalorder %s179, %s181
    %p188 = scmp.eq.s32.totalorder %s22, 3
    %p189 = por %p187, %p188
    %p190 = scmp.ne.s32.totalorder %s181, %s182
    %p191 = scmp.eq.s32.totalorder %s22, 0
    %p192 = por %p190, %p191
    %p193 = scmp.ne.s32.totalorder %s181, %s182
    %p194 = scmp.eq.s32.totalorder %s23, 3
    %p195 = por %p193, %p194
    %p197 = scmp.ne.s32.totalorder %s182, %s196
    %p198 = scmp.eq.s32.totalorder %s23, 0
    %p199 = por %p197, %p198
    %s201 = sadd.s32 %s200, 1
    %p204 = scmp.eq.s32.totalorder %s17, 3
    %p205 = scmp.ne.s32.totalorder %s200, %s202
    %p206 = scmp.eq.s32.totalorder %s17, 0
    %p207 = por %p205, %p206
    %p208 = scmp.ne.s32.totalorder %s200, %s202
    %p209 = scmp.eq.s32.totalorder %s22, 3
    %p210 = por %p208, %p209
    %p211 = scmp.ne.s32.totalorder %s202, %s203
    %p212 = scmp.eq.s32.totalorder %s22, 0
    %p213 = por %p211, %p212
    %p214 = scmp.ne.s32.totalorder %s202, %s203
    %p215 = scmp.eq.s32.totalorder %s23, 3
    %p216 = por %p214, %p215
    %p218 = scmp.ne.s32.totalorder %s203, %s217
    %p219 = scmp.eq.s32.totalorder %s23, 0
    %p220 = por %p218, %p219
    %s222 = sadd.s32 %s221, 1
    %p225 = scmp.eq.s32.totalorder %s17, 3
    %p226 = scmp.ne.s32.totalorder %s221, %s223
    %p227 = scmp.eq.s32.totalorder %s17, 0
    %p228 = por %p226, %p227
    %p229 = scmp.ne.s32.totalorder %s221, %s223
    %p230 = scmp.eq.s32.totalorder %s22, 3
    %p231 = por %p229, %p230
    %p232 = scmp.ne.s32.totalorder %s223, %s224
    %p233 = scmp.eq.s32.totalorder %s22, 0
    %p234 = por %p232, %p233
    %p235 = scmp.ne.s32.totalorder %s223, %s224
    %p236 = scmp.eq.s32.totalorder %s23, 3
    %p237 = por %p235, %p236
    %p239 = scmp.ne.s32.totalorder %s224, %s238
    %p240 = scmp.eq.s32.totalorder %s23, 0
    %p241 = por %p239, %p240
    %s243 = sadd.s32 %s242, 1
    %p246 = scmp.eq.s32.totalorder %s17, 3
    %p247 = scmp.ne.s32.totalorder %s242, %s244
    %p248 = scmp.eq.s32.totalorder %s17, 0
    %p249 = por %p247, %p248
    %p250 = scmp.ne.s32.totalorder %s242, %s244
    %p251 = scmp.eq.s32.totalorder %s22, 3
    %p252 = por %p250, %p251
    %p253 = scmp.ne.s32.totalorder %s244, %s245
    %p254 = scmp.eq.s32.totalorder %s22, 0
    %p255 = por %p253, %p254
    %p256 = scmp.ne.s32.totalorder %s244, %s245
    %p257 = scmp.eq.s32.totalorder %s23, 3
    %p258 = por %p256, %p257
    %p260 = scmp.ne.s32.totalorder %s245, %s259
    %p261 = scmp.eq.s32.totalorder %s23, 0
    %p262 = por %p260, %p261
    %s264 = sadd.s32 %s263, 1
    %p267 = scmp.eq.s32.totalorder %s17, 3
    %p268 = scmp.ne.s32.totalorder %s263, %s265
    %p269 = scmp.eq.s32.totalorder %s17, 0
    %p270 = por %p268, %p269
    %p271 = scmp.ne.s32.totalorder %s263, %s265
    %p272 = scmp.eq.s32.totalorder %s22, 3
    %p273 = por %p271, %p272
    %p274 = scmp.ne.s32.totalorder %s265, %s266
    %p275 = scmp.eq.s32.totalorder %s22, 0
    %p276 = por %p274, %p275
    %p277 = scmp.ne.s32.totalorder %s265, %s266
    %p278 = scmp.eq.s32.totalorder %s23, 3
    %p279 = por %p277, %p278
    %p281 = scmp.ne.s32.totalorder %s266, %s280
    %p282 = scmp.eq.s32.totalorder %s23, 0
    %p283 = por %p281, %p282
    %s284 = ssub.s32 %s24, %s43
    %s285 = ssub.s32 %s25, %s39
    %s286 = sor.u32 %s284, %s285
    %p287 = scmp.eq.s32.totalorder %s286, 0
    %s289 = sadd.s32 %s288, 1
    %s290 = scalar_select %p287, %s288, %s289
    %p293 = pneg %p287
    %p294 = scmp.eq.s32.totalorder %s17, 3
    %p295 = por %p293, %p294
    %p296 = scmp.ne.s32.totalorder %s288, %s291
    %p297 = scmp.eq.s32.totalorder %s17, 0
    %p298 = por %p296, %p297
    %p299 = scmp.ne.s32.totalorder %s288, %s291
    %p300 = scmp.eq.s32.totalorder %s22, 3
    %p301 = por %p299, %p300
    %p302 = scmp.ne.s32.totalorder %s291, %s292
    %p303 = scmp.eq.s32.totalorder %s22, 0
    %p304 = por %p302, %p303
    %p305 = scmp.ne.s32.totalorder %s291, %s292
    %p306 = scmp.eq.s32.totalorder %s23, 3
    %p307 = por %p305, %p306
    %p309 = scmp.ne.s32.totalorder %s292, %s308
    %p310 = scmp.eq.s32.totalorder %s23, 0
    %p311 = por %p309, %p310
    %p312 = scmp.le.s32.totalorder 1, %s17
    %p313 = scmp.lt.s32.totalorder %s17, 5
    %p314 = pnand %p312, %p313
    %p315 = pneg %p314
    // Predicated region
    $region9: #{tpu_custom_call.1} parent=5 // pred_check
      _
    $region10: #{tpu_custom_call.1} parent=5 // pred_check_branch
      %317 = sbr.rel (%p314) target = $region12
    $region11: #{tpu_custom_call.1} parent=5 // pred_region
      %s318 = ssub.s32 %s17, 1
      // Predicated region
      $region13: #{tpu_custom_call.1} parent=11 // pred_check
        %p319 = pneg %p87
      $region14: #{tpu_custom_call.1} parent=11 // pred_check_branch
        %321 = sbr.rel (%p319) target = $region16
      $region15: #{tpu_custom_call.1} parent=11 // pred_region
        _
      $region16: #{tpu_custom_call.1} parent=11 // pred_fallthru
        _
      // Predicated region
      $region17: #{tpu_custom_call.1} parent=11 // pred_check
        %p322 = pneg %p108
      $region18: #{tpu_custom_call.1} parent=11 // pred_check_branch
        %324 = sbr.rel (%p322) target = $region20
      $region19: #{tpu_custom_call.1} parent=11 // pred_region
        _
      $region20: #{tpu_custom_call.1} parent=11 // pred_fallthru
        _
      // Predicated region
      $region21: #{tpu_custom_call.1} parent=11 // pred_check
        %p325 = pneg %p129
      $region22: #{tpu_custom_call.1} parent=11 // pred_check_branch
        %327 = sbr.rel (%p325) target = $region24
      $region23: #{tpu_custom_call.1} parent=11 // pred_region
        _
      $region24: #{tpu_custom_call.1} parent=11 // pred_fallthru
        _
      // Predicated region
      $region25: #{tpu_custom_call.1} parent=11 // pred_check
        %p328 = pneg %p150
      $region26: #{tpu_custom_call.1} parent=11 // pred_check_branch
        %330 = sbr.rel (%p328) target = $region28
      $region27: #{tpu_custom_call.1} parent=11 // pred_region
        _
      $region28: #{tpu_custom_call.1} parent=11 // pred_fallthru
        _
      // Predicated region
      $region29: #{tpu_custom_call.1} parent=11 // pred_check
        %p331 = pneg %p171
      $region30: #{tpu_custom_call.1} parent=11 // pred_check_branch
        %333 = sbr.rel (%p331) target = $region32
      $region31: #{tpu_custom_call.1} parent=11 // pred_region
        _
      $region32: #{tpu_custom_call.1} parent=11 // pred_fallthru
        _
      // Predicated region
      $region33: #{tpu_custom_call.1} parent=11 // pred_check
        %p334 = pneg %p192
      $region34: #{tpu_custom_call.1} parent=11 // pred_check_branch
        %336 = sbr.rel (%p334) target = $region36
      $region35: #{tpu_custom_call.1} parent=11 // pred_region
        _
      $region36: #{tpu_custom_call.1} parent=11 // pred_fallthru
        _
      // Predicated region
      $region37: #{tpu_custom_call.1} parent=11 // pred_check
        %p337 = pneg %p213
      $region38: #{tpu_custom_call.1} parent=11 // pred_check_branch
        %339 = sbr.rel (%p337) target = $region40
      $region39: #{tpu_custom_call.1} parent=11 // pred_region
        _
      $region40: #{tpu_custom_call.1} parent=11 // pred_fallthru
        _
      // Predicated region
      $region41: #{tpu_custom_call.1} parent=11 // pred_check
        %p340 = pneg %p234
      $region42: #{tpu_custom_call.1} parent=11 // pred_check_branch
        %342 = sbr.rel (%p340) target = $region44
      $region43: #{tpu_custom_call.1} parent=11 // pred_region
        _
      $region44: #{tpu_custom_call.1} parent=11 // pred_fallthru
        _
      // Predicated region
      $region45: #{tpu_custom_call.1} parent=11 // pred_check
        %p343 = pneg %p255
      $region46: #{tpu_custom_call.1} parent=11 // pred_check_branch
        %345 = sbr.rel (%p343) target = $region48
      $region47: #{tpu_custom_call.1} parent=11 // pred_region
        _
      $region48: #{tpu_custom_call.1} parent=11 // pred_fallthru
        _
      // Predicated region
      $region49: #{tpu_custom_call.1} parent=11 // pred_check
        %p346 = pneg %p276
      $region50: #{tpu_custom_call.1} parent=11 // pred_check_branch
        %348 = sbr.rel (%p346) target = $region52
      $region51: #{tpu_custom_call.1} parent=11 // pred_region
        _
      $region52: #{tpu_custom_call.1} parent=11 // pred_fallthru
        _
    $region12: #{tpu_custom_call.1} parent=5 // pred_fallthru
      _
    %p349 = scmp.lt.s32.totalorder %s17, 4
    // Predicated region
    $region53: #{tpu_custom_call.1} parent=5 // pred_check
      %p350 = pneg %p349
    $region54: #{tpu_custom_call.1} parent=5 // pred_check_branch
      %352 = sbr.rel (%p350) target = $region56
    $region55: #{tpu_custom_call.1} parent=5 // pred_region
      // Predicated region
      $region57: #{tpu_custom_call.1} parent=55 // pred_check
        %p353 = pneg %p60
      $region58: #{tpu_custom_call.1} parent=55 // pred_check_branch
        %355 = sbr.rel (%p353) target = $region60
      $region59: #{tpu_custom_call.1} parent=55 // pred_region
        %s356 = sadd.s32 %s25, %s26
        %s357 = smul.u32 8, %s356
        %p358 = scmp.lt.s32.totalorder %s24, 1
        %s359 = scalar_select %p358, %s24, 1
        %p360 = scmp.lt.s32.totalorder %s357, 15
        %s361 = scalar_select %p360, %s357, 15
        %s362 = smul.addr %s359, 16
        %s363 = sadd.s32 %s361, %s362
        %s364 = smul.addr %s363, 4
        %s365 = scalar_lea.vmem %s0, %s364
        %s366 = sadd.s32 %s25, %s26
        %s367 = smul.u32 8, %s366
      $region60: #{tpu_custom_call.1} parent=55 // pred_fallthru
        _
    $region56: #{tpu_custom_call.1} parent=5 // pred_fallthru
      _
    %p368 = scmp.le.s32.totalorder 1, %s17
    %p369 = scmp.lt.s32.totalorder %s17, 5
    %p370 = pnand %p368, %p369
    %p371 = pneg %p370
    // Predicated region
    $region61: #{tpu_custom_call.1} parent=5 // pred_check
      _
    $region62: #{tpu_custom_call.1} parent=5 // pred_check_branch
      %373 = sbr.rel (%p370) target = $region64
    $region63: #{tpu_custom_call.1} parent=5 // pred_region
      %s374 = ssub.s32 %s17, 1
      %s375 = sadd.s32 %s28, %s29
      %s376 = smul.u32 8, %s375
      %p377 = scmp.lt.s32.totalorder %s27, 1
      %s378 = scalar_select %p377, %s27, 1
      %p379 = scmp.lt.s32.totalorder %s376, 15
      %s380 = scalar_select %p379, %s376, 15
      %s381 = smul.addr %s378, 16
      %s382 = sadd.s32 %s380, %s381
      %s383 = smul.addr %s382, 4
      %s384 = scalar_lea.vmem %s0, %s383
      %p385 = pneg %p66
      %p386 = pneg %p63
      %p387 = pneg %p87
      %p388 = pneg %p84
      %p389 = pneg %p108
      %p390 = pneg %p105
      %p391 = pneg %p129
      %p392 = pneg %p126
      %p393 = pneg %p150
      %p394 = pneg %p147
      %p395 = pneg %p171
      %p396 = pneg %p168
      %p397 = pneg %p192
      %p398 = pneg %p189
      %p399 = pneg %p213
      %p400 = pneg %p210
      %p401 = pneg %p234
      %p402 = pneg %p231
      %p403 = pneg %p255
      %p404 = pneg %p252
      %p405 = pneg %p276
      %p406 = pneg %p273
      %p407 = pneg %p304
      %p408 = pneg %p301
      %p409 = scmp.lt.s32.totalorder %s27, 1
      %s410 = scalar_select %p409, %s27, 1
      %p411 = scmp.lt.s32.totalorder %s28, 1
      %s412 = scalar_select %p411, %s28, 1
      %s413 = smul.addr %s412, 2
      %s414 = smul.addr %s410, 4
      %s415 = sadd.s32 %s413, %s414
      %s416 = smul.addr %s415, 8
      %s417 = scalar_lea.vmem %s11, %s416
      %s418 = sadd.s32 %s28, %s29
      %s419 = smul.u32 8, %s418
      %p420 = scmp.lt.s32.totalorder %s27, 1
      %s421 = scalar_select %p420, %s27, 1
      %p422 = scmp.lt.s32.totalorder %s419, 15
      %s423 = scalar_select %p422, %s419, 15
      %s424 = smul.addr %s421, 16
      %s425 = sadd.s32 %s423, %s424
      %s426 = smul.addr %s425, 4
      %s427 = scalar_lea.vmem %s0, %s426
      %s428 = sadd.s32 %s28, %s29
      %s429 = smul.u32 8, %s428
      %p430 = scmp.lt.s32.totalorder %s27, 1
      %s431 = scalar_select %p430, %s27, 1
      %p432 = scmp.lt.s32.totalorder %s28, 1
      %s433 = scalar_select %p432, %s28, 1
      %s434 = smul.addr %s433, 2
      %s435 = smul.addr %s431, 4
      %s436 = sadd.s32 %s434, %s435
      %s437 = smul.addr %s436, 8
      %s438 = scalar_lea.vmem %s11, %s437
      %v440 = vld [vmem:[%s427] sm:$0x77]
      %v442 = vcombine.high %v440, %v440
      %v444 = vpack.c.bf16 %v440, %v440
      %v445 = vpack.c.bf16 %v442, %v442
      %v446 = vld [vmem:[%s1] sm:$0xf]
      %v447 = vld [vmem:[%s1 + $0x4] sm:$0xf]
      %v448 = vld [vmem:[%s1 + $0x8] sm:$0xf]
      %v449 = vld [vmem:[%s1 + $0xc] sm:$0xf]
      %v450 = vld [vmem:[%s1 + $0x10] sm:$0xf]
      %v451 = vld [vmem:[%s1 + $0x14] sm:$0xf]
      %v452 = vld [vmem:[%s1 + $0x18] sm:$0xf]
      %v453 = vld [vmem:[%s1 + $0x1c] sm:$0xf]
      %v454 = vld [vmem:[%s2] sm:$0xff]
      %v455 = vld [vmem:[%s2 + $0x8] sm:$0xff]
      %v456 = vld [vmem:[%s2 + $0x10] sm:$0xff]
      %v457 = vld [vmem:[%s2 + $0x18] sm:$0xff]
      %v458 = vld [vmem:[%s2 + $0x20] sm:$0xff]
      %v459 = vld [vmem:[%s2 + $0x28] sm:$0xff]
      %v460 = vld [vmem:[%s2 + $0x30] sm:$0xff]
      %v461 = vld [vmem:[%s2 + $0x38] sm:$0xff]
      %463 = vset.pattern.permute.xlu0 0
      %464 = vperm.xlu0 %463, %v454
      %v465 = vpop.permute.xlu0 %464
      %468 = vset.pattern.permute.xlu0 0
      %469 = vperm.xlu0 %468, %v455
      %v470 = vpop.permute.xlu0 %469
      %473 = vset.pattern.permute.xlu0 0
      %474 = vperm.xlu0 %473, %v456
      %v475 = vpop.permute.xlu0 %474
      %478 = vset.pattern.permute.xlu0 0
      %479 = vperm.xlu0 %478, %v457
      %v480 = vpop.permute.xlu0 %479
      %483 = vset.pattern.permute.xlu0 0
      %484 = vperm.xlu0 %483, %v458
      %v485 = vpop.permute.xlu0 %484
      %488 = vset.pattern.permute.xlu0 0
      %489 = vperm.xlu0 %488, %v459
      %v490 = vpop.permute.xlu0 %489
      %493 = vset.pattern.permute.xlu0 0
      %494 = vperm.xlu0 %493, %v460
      %v495 = vpop.permute.xlu0 %494
      %498 = vset.pattern.permute.xlu0 0
      %499 = vperm.xlu0 %498, %v461
      %v500 = vpop.permute.xlu0 %499
      %v510 = vunpack.c.l.b16 %v446
      %v511 = vunpack.c.l.b16 %v447
      %v512 = vunpack.c.l.b16 %v448
      %v513 = vunpack.c.l.b16 %v449
      %v514 = vunpack.c.l.b16 %v450
      %v515 = vunpack.c.l.b16 %v451
      %v516 = vunpack.c.l.b16 %v452
      %v517 = vunpack.c.l.b16 %v453
      %v518 = vpack.c.b16 %v511, %v510
      %v519 = vpack.c.b16 %v513, %v512
      %v520 = vpack.c.b16 %v515, %v514
      %v521 = vpack.c.b16 %v517, %v516
      %vm522 = vcmask 23552
      %v524 = vsel %vm522, %v518, 0
      %v527 = vsel %vm522, %v519, 0
      %v530 = vsel %vm522, %v520, 0
      %v533 = vsel %vm522, %v521, 0
      %vm535 = vcmask 1040384
      %vm536 = vcmask 1041408
      %v537 = vsel %vm535, 4294967295, 65535
      %v538 = vsel %vm536, %v537, 0
      %v540 = vand.u32 %v444, %v538
      %v543 = vand.u32 %v445, %v538
      %545 = vmatprep.subr.bf16.mxu0 %v543
      %546 = vmatpush1.bf16.msra.mxu0 %v540
      %547 = vmatprep.subr.bf16.mxu0 0
      %548 = vmatpush1.bf16.msra.mxu0 0
      %549 = vmatprep.subr.bf16.mxu0 0
      %550 = vmatpush1.bf16.msra.mxu0 0
      %551 = vmatprep.subr.bf16.mxu0 0
      %552 = vmatpush1.bf16.msra.mxu0 0
      %553 = vmatprep.subr.bf16.mxu0 0
      %554 = vmatpush1.bf16.msra.mxu0 0
      %555 = vmatprep.subr.bf16.mxu0 0
      %556 = vmatpush1.bf16.msra.mxu0 0
      %557 = vmatprep.subr.bf16.mxu0 0
      %558 = vmatpush1.bf16.msra.mxu0 0
      %559 = vmatprep.subr.bf16.mxu0 0
      %560 = vmatpush1.bf16.msra.mxu0 0
      %561 = vmatprep.subr.bf16.mxu0 0
      %562 = vmatpush1.bf16.msra.mxu0 0
      %563 = vmatprep.subr.bf16.mxu0 0
      %564 = vmatpush1.bf16.msra.mxu0 0
      %565 = vmatprep.subr.bf16.mxu0 0
      %566 = vmatpush1.bf16.msra.mxu0 0
      %567 = vmatprep.subr.bf16.mxu0 0
      %568 = vmatpush1.bf16.msra.mxu0 0
      %569 = vmatprep.subr.bf16.mxu0 0
      %570 = vmatpush1.bf16.msra.mxu0 0
      %571 = vmatprep.subr.bf16.mxu0 0
      %572 = vmatpush1.bf16.msra.mxu0 0
      %573 = vmatprep.subr.bf16.mxu0 0
      %574 = vmatpush1.bf16.msra.mxu0 0
      %575 = vmatprep.subr.bf16.mxu0 0
      %576 = vmatpush1.bf16.msra.mxu0 0
      %577 = vmatprep.mubr.bf16.mxu0 0
      %578 = vmatmul.mubr.bf16.gmra.mrb[0].mxu0 %v524
      %v579 = vpop.f32.mrb[0].mxu0
      %v580 = vadd.f32 %v465, %v579
      %v581 = vpop.f32.mrb[0].mxu0
      %v582 = vadd.f32 %v465, %v581
      %v583 = vpop.f32.mrb[0].mxu0
      %v584 = vadd.f32 %v470, %v583
      %v585 = vpop.f32.mrb[0].mxu0
      %v586 = vadd.f32 %v470, %v585
      %587 = vmatprep.mubr.bf16.mxu0 0
      %588 = vmatmul.mubr.bf16.gmra.mrb[0].mxu0 %v527
      %v589 = vpop.f32.mrb[0].mxu0
      %v590 = vadd.f32 %v475, %v589
      %v591 = vpop.f32.mrb[0].mxu0
      %v592 = vadd.f32 %v475, %v591
      %v593 = vpop.f32.mrb[0].mxu0
      %v594 = vadd.f32 %v480, %v593
      %v595 = vpop.f32.mrb[0].mxu0
      %v596 = vadd.f32 %v480, %v595
      %597 = vmatprep.mubr.bf16.mxu0 0
      %598 = vmatmul.mubr.bf16.gmra.mrb[0].mxu0 %v530
      %v599 = vpop.f32.mrb[0].mxu0
      %v600 = vadd.f32 %v485, %v599
      %v601 = vpop.f32.mrb[0].mxu0
      %v602 = vadd.f32 %v485, %v601
      %v603 = vpop.f32.mrb[0].mxu0
      %v604 = vadd.f32 %v490, %v603
      %v605 = vpop.f32.mrb[0].mxu0
      %v606 = vadd.f32 %v490, %v605
      %607 = vmatprep.mubr.bf16.mxu0 0
      %608 = vmatmul.mubr.bf16.gmra.mrb[0].mxu0 %v533
      %v609 = vpop.f32.mrb[0].mxu0
      %v610 = vadd.f32 %v495, %v609
      %v611 = vpop.f32.mrb[0].mxu0
      %v612 = vadd.f32 %v495, %v611
      %v613 = vpop.f32.mrb[0].mxu0
      %v614 = vadd.f32 %v500, %v613
      %v615 = vpop.f32.mrb[0].mxu0
      %v616 = vadd.f32 %v500, %v615
      %617 = vdwg.mxu0
      %v618 = vmax.f32 %v580, 0.0
      %v619 = vmax.f32 %v582, 0.0
      %v620 = vmax.f32 %v584, 0.0
      %v621 = vmax.f32 %v586, 0.0
      %v622 = vmax.f32 %v590, 0.0
      %v623 = vmax.f32 %v592, 0.0
      %v624 = vmax.f32 %v594, 0.0
      %v625 = vmax.f32 %v596, 0.0
      %v626 = vmax.f32 %v600, 0.0
      %v627 = vmax.f32 %v602, 0.0
      %v628 = vmax.f32 %v604, 0.0
      %v629 = vmax.f32 %v606, 0.0
      %v630 = vmax.f32 %v610, 0.0
      %v631 = vmax.f32 %v612, 0.0
      %v632 = vmax.f32 %v614, 0.0
      %v633 = vmax.f32 %v616, 0.0
      %v634 = vpack.c.bf16 %v620, %v618
      %v635 = vpack.c.bf16 %v621, %v619
      %v636 = vpack.c.bf16 %v624, %v622
      %v637 = vpack.c.bf16 %v625, %v623
      %v638 = vpack.c.bf16 %v628, %v626
      %v639 = vpack.c.bf16 %v629, %v627
      %v640 = vpack.c.bf16 %v632, %v630
      %v641 = vpack.c.bf16 %v633, %v631
      %v642 = vld [vmem:[%s3] sm:$0xf]
      %v643 = vld [vmem:[%s3 + $0x4] sm:$0xf]
      %v644 = vld [vmem:[%s3 + $0x8] sm:$0xf]
      %v645 = vld [vmem:[%s3 + $0xc] sm:$0xf]
      %v646 = vld [vmem:[%s3 + $0x10] sm:$0xf]
      %v647 = vld [vmem:[%s3 + $0x14] sm:$0xf]
      %v648 = vld [vmem:[%s3 + $0x18] sm:$0xf]
      %v649 = vld [vmem:[%s3 + $0x1c] sm:$0xf]
      %v650 = vld [vmem:[%s3 + $0x20] sm:$0xf]
      %v651 = vld [vmem:[%s3 + $0x24] sm:$0xf]
      %v652 = vld [vmem:[%s3 + $0x28] sm:$0xf]
      %v653 = vld [vmem:[%s3 + $0x2c] sm:$0xf]
      %v654 = vld [vmem:[%s3 + $0x30] sm:$0xf]
      %v655 = vld [vmem:[%s3 + $0x34] sm:$0xf]
      %v656 = vld [vmem:[%s3 + $0x38] sm:$0xf]
      %v657 = vld [vmem:[%s3 + $0x3c] sm:$0xf]
      %v658 = vld [vmem:[%s4] sm:$0xff]
      %v659 = vld [vmem:[%s4 + $0x8] sm:$0xff]
      %v660 = vld [vmem:[%s4 + $0x10] sm:$0xff]
      %v661 = vld [vmem:[%s4 + $0x18] sm:$0xff]
      %v662 = vld [vmem:[%s4 + $0x20] sm:$0xff]
      %v663 = vld [vmem:[%s4 + $0x28] sm:$0xff]
      %v664 = vld [vmem:[%s4 + $0x30] sm:$0xff]
      %v665 = vld [vmem:[%s4 + $0x38] sm:$0xff]
      %v666 = vld [vmem:[%s4 + $0x40] sm:$0xff]
      %v667 = vld [vmem:[%s4 + $0x48] sm:$0xff]
      %v668 = vld [vmem:[%s4 + $0x50] sm:$0xff]
      %v669 = vld [vmem:[%s4 + $0x58] sm:$0xff]
      %v670 = vld [vmem:[%s4 + $0x60] sm:$0xff]
      %v671 = vld [vmem:[%s4 + $0x68] sm:$0xff]
      %v672 = vld [vmem:[%s4 + $0x70] sm:$0xff]
      %v673 = vld [vmem:[%s4 + $0x78] sm:$0xff]
      %675 = vset.pattern.permute.xlu0 0
      %676 = vperm.xlu0 %675, %v658
      %v677 = vpop.permute.xlu0 %676
      %680 = vset.pattern.permute.xlu0 0
      %681 = vperm.xlu0 %680, %v659
      %v682 = vpop.permute.xlu0 %681
      %685 = vset.pattern.permute.xlu0 0
      %686 = vperm.xlu0 %685, %v660
      %v687 = vpop.permute.xlu0 %686
      %690 = vset.pattern.permute.xlu0 0
      %691 = vperm.xlu0 %690, %v661
      %v692 = vpop.permute.xlu0 %691
      %695 = vset.pattern.permute.xlu0 0
      %696 = vperm.xlu0 %695, %v662
      %v697 = vpop.permute.xlu0 %696
      %700 = vset.pattern.permute.xlu0 0
      %701 = vperm.xlu0 %700, %v663
      %v702 = vpop.permute.xlu0 %701
      %705 = vset.pattern.permute.xlu0 0
      %706 = vperm.xlu0 %705, %v664
      %v707 = vpop.permute.xlu0 %706
      %710 = vset.pattern.permute.xlu0 0
      %711 = vperm.xlu0 %710, %v665
      %v712 = vpop.permute.xlu0 %711
      %715 = vset.pattern.permute.xlu0 0
      %716 = vperm.xlu0 %715, %v666
      %v717 = vpop.permute.xlu0 %716
      %720 = vset.pattern.permute.xlu0 0
      %721 = vperm.xlu0 %720, %v667
      %v722 = vpop.permute.xlu0 %721
      %725 = vset.pattern.permute.xlu0 0
      %726 = vperm.xlu0 %725, %v668
      %v727 = vpop.permute.xlu0 %726
      %730 = vset.pattern.permute.xlu0 0
      %731 = vperm.xlu0 %730, %v669
      %v732 = vpop.permute.xlu0 %731
      %735 = vset.pattern.permute.xlu0 0
      %736 = vperm.xlu0 %735, %v670
      %v737 = vpop.permute.xlu0 %736
      %740 = vset.pattern.permute.xlu0 0
      %741 = vperm.xlu0 %740, %v671
      %v742 = vpop.permute.xlu0 %741
      %745 = vset.pattern.permute.xlu0 0
      %746 = vperm.xlu0 %745, %v672
      %v747 = vpop.permute.xlu0 %746
      %750 = vset.pattern.permute.xlu0 0
      %751 = vperm.xlu0 %750, %v673
      %v752 = vpop.permute.xlu0 %751
      %v770 = vunpack.c.l.b16 %v642
      %v771 = vunpack.c.l.b16 %v643
      %v772 = vunpack.c.l.b16 %v644
      %v773 = vunpack.c.l.b16 %v645
      %v774 = vunpack.c.l.b16 %v646
      %v775 = vunpack.c.l.b16 %v647
      %v776 = vunpack.c.l.b16 %v648
      %v777 = vunpack.c.l.b16 %v649
      %v778 = vunpack.c.l.b16 %v650
      %v779 = vunpack.c.l.b16 %v651
      %v780 = vunpack.c.l.b16 %v652
      %v781 = vunpack.c.l.b16 %v653
      %v782 = vunpack.c.l.b16 %v654
      %v783 = vunpack.c.l.b16 %v655
      %v784 = vunpack.c.l.b16 %v656
      %v785 = vunpack.c.l.b16 %v657
      %v786 = vpack.c.b16 %v771, %v770
      %v787 = vpack.c.b16 %v773, %v772
      %v788 = vpack.c.b16 %v775, %v774
      %v789 = vpack.c.b16 %v777, %v776
      %v790 = vpack.c.b16 %v779, %v778
      %v791 = vpack.c.b16 %v781, %v780
      %v792 = vpack.c.b16 %v783, %v782
      %v793 = vpack.c.b16 %v785, %v784
      %vm794 = vcmask 523264
      %v796 = vsel %vm794, %v786, 0
      %v799 = vsel %vm794, %v787, 0
      %v802 = vsel %vm794, %v788, 0
      %v805 = vsel %vm794, %v789, 0
      %v808 = vsel %vm794, %v790, 0
      %v811 = vsel %vm794, %v791, 0
      %v814 = vsel %vm794, %v792, 0
      %v817 = vsel %vm794, %v793, 0
      %819 = vmatprep.subr.bf16.mxu0 %v635
      %820 = vmatpush1.bf16.msra.mxu0 %v634
      %821 = vmatprep.subr.bf16.mxu0 %v637
      %822 = vmatpush1.bf16.msra.mxu0 %v636
      %823 = vmatprep.subr.bf16.mxu0 %v639
      %824 = vmatpush1.bf16.msra.mxu0 %v638
      %825 = vmatprep.subr.bf16.mxu0 %v641
      %826 = vmatpush1.bf16.msra.mxu0 %v640
      %827 = vmatprep.subr.bf16.mxu0 0
      %828 = vmatpush1.bf16.msra.mxu0 0
      %829 = vmatprep.subr.bf16.mxu0 0
      %830 = vmatpush1.bf16.msra.mxu0 0
      %831 = vmatprep.subr.bf16.mxu0 0
      %832 = vmatpush1.bf16.msra.mxu0 0
      %833 = vmatprep.subr.bf16.mxu0 0
      %834 = vmatpush1.bf16.msra.mxu0 0
      %835 = vmatprep.subr.bf16.mxu0 0
      %836 = vmatpush1.bf16.msra.mxu0 0
      %837 = vmatprep.subr.bf16.mxu0 0
      %838 = vmatpush1.bf16.msra.mxu0 0
      %839 = vmatprep.subr.bf16.mxu0 0
      %840 = vmatpush1.bf16.msra.mxu0 0
      %841 = vmatprep.subr.bf16.mxu0 0
      %842 = vmatpush1.bf16.msra.mxu0 0
      %843 = vmatprep.subr.bf16.mxu0 0
      %844 = vmatpush1.bf16.msra.mxu0 0
      %845 = vmatprep.subr.bf16.mxu0 0
      %846 = vmatpush1.bf16.msra.mxu0 0
      %847 = vmatprep.subr.bf16.mxu0 0
      %848 = vmatpush1.bf16.msra.mxu0 0
      %849 = vmatprep.subr.bf16.mxu0 0
      %850 = vmatpush1.bf16.msra.mxu0 0
      %851 = vmatprep.mubr.bf16.mxu0 0
      %852 = vmatmul.mubr.bf16.gmra.mrb[0].mxu0 %v796
      %v853 = vpop.f32.mrb[0].mxu0
      %v854 = vadd.f32 %v677, %v853
      %v855 = vpop.f32.mrb[0].mxu0
      %v856 = vadd.f32 %v677, %v855
      %v857 = vpop.f32.mrb[0].mxu0
      %v858 = vadd.f32 %v682, %v857
      %v859 = vpop.f32.mrb[0].mxu0
      %v860 = vadd.f32 %v682, %v859
      %861 = vmatprep.mubr.bf16.mxu0 0
      %862 = vmatmul.mubr.bf16.gmra.mrb[0].mxu0 %v799
      %v863 = vpop.f32.mrb[0].mxu0
      %v864 = vadd.f32 %v687, %v863
      %v865 = vpop.f32.mrb[0].mxu0
      %v866 = vadd.f32 %v687, %v865
      %v867 = vpop.f32.mrb[0].mxu0
      %v868 = vadd.f32 %v692, %v867
      %v869 = vpop.f32.mrb[0].mxu0
      %v870 = vadd.f32 %v692, %v869
      %871 = vmatprep.mubr.bf16.mxu0 0
      %872 = vmatmul.mubr.bf16.gmra.mrb[0].mxu0 %v802
      %v873 = vpop.f32.mrb[0].mxu0
      %v874 = vadd.f32 %v697, %v873
      %v875 = vpop.f32.mrb[0].mxu0
      %v876 = vadd.f32 %v697, %v875
      %v877 = vpop.f32.mrb[0].mxu0
      %v878 = vadd.f32 %v702, %v877
      %v879 = vpop.f32.mrb[0].mxu0
      %v880 = vadd.f32 %v702, %v879
      %881 = vmatprep.mubr.bf16.mxu0 0
      %882 = vmatmul.mubr.bf16.gmra.mrb[0].mxu0 %v805
      %v883 = vpop.f32.mrb[0].mxu0
      %v884 = vadd.f32 %v707, %v883
      %v885 = vpop.f32.mrb[0].mxu0
      %v886 = vadd.f32 %v707, %v885
      %v887 = vpop.f32.mrb[0].mxu0
      %v888 = vadd.f32 %v712, %v887
      %v889 = vpop.f32.mrb[0].mxu0
      %v890 = vadd.f32 %v712, %v889
      %891 = vmatprep.mubr.bf16.mxu0 0
      %892 = vmatmul.mubr.bf16.gmra.mrb[0].mxu0 %v808
      %v893 = vpop.f32.mrb[0].mxu0
      %v894 = vadd.f32 %v717, %v893
      %v895 = vpop.f32.mrb[0].mxu0
      %v896 = vadd.f32 %v717, %v895
      %v897 = vpop.f32.mrb[0].mxu0
      %v898 = vadd.f32 %v722, %v897
      %v899 = vpop.f32.mrb[0].mxu0
      %v900 = vadd.f32 %v722, %v899
      %901 = vmatprep.mubr.bf16.mxu0 0
      %902 = vmatmul.mubr.bf16.gmra.mrb[0].mxu0 %v811
      %v903 = vpop.f32.mrb[0].mxu0
      %v904 = vadd.f32 %v727, %v903
      %v905 = vpop.f32.mrb[0].mxu0
      %v906 = vadd.f32 %v727, %v905
      %v907 = vpop.f32.mrb[0].mxu0
      %v908 = vadd.f32 %v732, %v907
      %v909 = vpop.f32.mrb[0].mxu0
      %v910 = vadd.f32 %v732, %v909
      %911 = vmatprep.mubr.bf16.mxu0 0
      %912 = vmatmul.mubr.bf16.gmra.mrb[0].mxu0 %v814
      %v913 = vpop.f32.mrb[0].mxu0
      %v914 = vadd.f32 %v737, %v913
      %v915 = vpop.f32.mrb[0].mxu0
      %v916 = vadd.f32 %v737, %v915
      %v917 = vpop.f32.mrb[0].mxu0
      %v918 = vadd.f32 %v742, %v917
      %v919 = vpop.f32.mrb[0].mxu0
      %v920 = vadd.f32 %v742, %v919
      %921 = vmatprep.mubr.bf16.mxu0 0
      %922 = vmatmul.mubr.bf16.gmra.mrb[0].mxu0 %v817
      %v923 = vpop.f32.mrb[0].mxu0
      %v924 = vadd.f32 %v747, %v923
      %v925 = vpop.f32.mrb[0].mxu0
      %v926 = vadd.f32 %v747, %v925
      %v927 = vpop.f32.mrb[0].mxu0
      %v928 = vadd.f32 %v752, %v927
      %v929 = vpop.f32.mrb[0].mxu0
      %v930 = vadd.f32 %v752, %v929
      %931 = vdwg.mxu0
      %v932 = vmax.f32 %v854, 0.0
      %v933 = vmax.f32 %v856, 0.0
      %v934 = vmax.f32 %v858, 0.0
      %v935 = vmax.f32 %v860, 0.0
      %v936 = vmax.f32 %v864, 0.0
      %v937 = vmax.f32 %v866, 0.0
      %v938 = vmax.f32 %v868, 0.0
      %v939 = vmax.f32 %v870, 0.0
      %v940 = vmax.f32 %v874, 0.0
      %v941 = vmax.f32 %v876, 0.0
      %v942 = vmax.f32 %v878, 0.0
      %v943 = vmax.f32 %v880, 0.0
      %v944 = vmax.f32 %v884, 0.0
      %v945 = vmax.f32 %v886, 0.0
      %v946 = vmax.f32 %v888, 0.0
      %v947 = vmax.f32 %v890, 0.0
      %v948 = vmax.f32 %v894, 0.0
      %v949 = vmax.f32 %v896, 0.0
      %v950 = vmax.f32 %v898, 0.0
      %v951 = vmax.f32 %v900, 0.0
      %v952 = vmax.f32 %v904, 0.0
      %v953 = vmax.f32 %v906, 0.0
      %v954 = vmax.f32 %v908, 0.0
      %v955 = vmax.f32 %v910, 0.0
      %v956 = vmax.f32 %v914, 0.0
      %v957 = vmax.f32 %v916, 0.0
      %v958 = vmax.f32 %v918, 0.0
      %v959 = vmax.f32 %v920, 0.0
      %v960 = vmax.f32 %v924, 0.0
      %v961 = vmax.f32 %v926, 0.0
      %v962 = vmax.f32 %v928, 0.0
      %v963 = vmax.f32 %v930, 0.0
      %v964 = vpack.c.bf16 %v934, %v932
      %v965 = vpack.c.bf16 %v935, %v933
      %v966 = vpack.c.bf16 %v938, %v936
      %v967 = vpack.c.bf16 %v939, %v937
      %v968 = vpack.c.bf16 %v942, %v940
      %v969 = vpack.c.bf16 %v943, %v941
      %v970 = vpack.c.bf16 %v946, %v944
      %v971 = vpack.c.bf16 %v947, %v945
      %v972 = vpack.c.bf16 %v950, %v948
      %v973 = vpack.c.bf16 %v951, %v949
      %v974 = vpack.c.bf16 %v954, %v952
      %v975 = vpack.c.bf16 %v955, %v953
      %v976 = vpack.c.bf16 %v958, %v956
      %v977 = vpack.c.bf16 %v959, %v957
      %v978 = vpack.c.bf16 %v962, %v960
      %v979 = vpack.c.bf16 %v963, %v961
      %v980 = vld [vmem:[%s5] sm:$0xf]
      %v981 = vld [vmem:[%s5 + $0x4] sm:$0xf]
      %v982 = vld [vmem:[%s5 + $0x8] sm:$0xf]
      %v983 = vld [vmem:[%s5 + $0xc] sm:$0xf]
      %v984 = vld [vmem:[%s5 + $0x10] sm:$0xf]
      %v985 = vld [vmem:[%s5 + $0x14] sm:$0xf]
      %v986 = vld [vmem:[%s5 + $0x18] sm:$0xf]
      %v987 = vld [vmem:[%s5 + $0x1c] sm:$0xf]
      %v988 = vld [vmem:[%s5 + $0x20] sm:$0xf]
      %v989 = vld [vmem:[%s5 + $0x24] sm:$0xf]
      %v990 = vld [vmem:[%s5 + $0x28] sm:$0xf]
      %v991 = vld [vmem:[%s5 + $0x2c] sm:$0xf]
      %v992 = vld [vmem:[%s5 + $0x30] sm:$0xf]
      %v993 = vld [vmem:[%s5 + $0x34] sm:$0xf]
      %v994 = vld [vmem:[%s5 + $0x38] sm:$0xf]
      %v995 = vld [vmem:[%s5 + $0x3c] sm:$0xf]
      %v996 = vld [vmem:[%s6] sm:$0xff]
      %v997 = vld [vmem:[%s6 + $0x8] sm:$0xff]
      %v998 = vld [vmem:[%s6 + $0x10] sm:$0xff]
      %v999 = vld [vmem:[%s6 + $0x18] sm:$0xff]
      %v1000 = vld [vmem:[%s6 + $0x20] sm:$0xff]
      %v1001 = vld [vmem:[%s6 + $0x28] sm:$0xff]
      %v1002 = vld [vmem:[%s6 + $0x30] sm:$0xff]
      %v1003 = vld [vmem:[%s6 + $0x38] sm:$0xff]
      %v1004 = vld [vmem:[%s6 + $0x40] sm:$0xff]
      %v1005 = vld [vmem:[%s6 + $0x48] sm:$0xff]
      %v1006 = vld [vmem:[%s6 + $0x50] sm:$0xff]
      %v1007 = vld [vmem:[%s6 + $0x58] sm:$0xff]
      %v1008 = vld [vmem:[%s6 + $0x60] sm:$0xff]
      %v1009 = vld [vmem:[%s6 + $0x68] sm:$0xff]
      %v1010 = vld [vmem:[%s6 + $0x70] sm:$0xff]
      %v1011 = vld [vmem:[%s6 + $0x78] sm:$0xff]
      %1013 = vset.pattern.permute.xlu0 0
      %1014 = vperm.xlu0 %1013, %v996
      %v1015 = vpop.permute.xlu0 %1014
      %1018 = vset.pattern.permute.xlu0 0
      %1019 = vperm.xlu0 %1018, %v997
      %v1020 = vpop.permute.xlu0 %1019
      %1023 = vset.pattern.permute.xlu0 0
      %1024 = vperm.xlu0 %1023, %v998
      %v1025 = vpop.permute.xlu0 %1024
      %1028 = vset.pattern.permute.xlu0 0
      %1029 = vperm.xlu0 %1028, %v999
      %v1030 = vpop.permute.xlu0 %1029
      %1033 = vset.pattern.permute.xlu0 0
      %1034 = vperm.xlu0 %1033, %v1000
      %v1035 = vpop.permute.xlu0 %1034
      %1038 = vset.pattern.permute.xlu0 0
      %1039 = vperm.xlu0 %1038, %v1001
      %v1040 = vpop.permute.xlu0 %1039
      %1043 = vset.pattern.permute.xlu0 0
      %1044 = vperm.xlu0 %1043, %v1002
      %v1045 = vpop.permute.xlu0 %1044
      %1048 = vset.pattern.permute.xlu0 0
      %1049 = vperm.xlu0 %1048, %v1003
      %v1050 = vpop.permute.xlu0 %1049
      %1053 = vset.pattern.permute.xlu0 0
      %1054 = vperm.xlu0 %1053, %v1004
      %v1055 = vpop.permute.xlu0 %1054
      %1058 = vset.pattern.permute.xlu0 0
      %1059 = vperm.xlu0 %1058, %v1005
      %v1060 = vpop.permute.xlu0 %1059
      %1063 = vset.pattern.permute.xlu0 0
      %1064 = vperm.xlu0 %1063, %v1006
      %v1065 = vpop.permute.xlu0 %1064
      %1068 = vset.pattern.permute.xlu0 0
      %1069 = vperm.xlu0 %1068, %v1007
      %v1070 = vpop.permute.xlu0 %1069
      %1073 = vset.pattern.permute.xlu0 0
      %1074 = vperm.xlu0 %1073, %v1008
      %v1075 = vpop.permute.xlu0 %1074
      %1078 = vset.pattern.permute.xlu0 0
      %1079 = vperm.xlu0 %1078, %v1009
      %v1080 = vpop.permute.xlu0 %1079
      %1083 = vset.pattern.permute.xlu0 0
      %1084 = vperm.xlu0 %1083, %v1010
      %v1085 = vpop.permute.xlu0 %1084
      %1088 = vset.pattern.permute.xlu0 0
      %1089 = vperm.xlu0 %1088, %v1011
      %v1090 = vpop.permute.xlu0 %1089
      %v1108 = vunpack.c.l.b16 %v980
      %v1109 = vunpack.c.l.b16 %v981
      %v1110 = vunpack.c.l.b16 %v982
      %v1111 = vunpack.c.l.b16 %v983
      %v1112 = vunpack.c.l.b16 %v984
      %v1113 = vunpack.c.l.b16 %v985
      %v1114 = vunpack.c.l.b16 %v986
      %v1115 = vunpack.c.l.b16 %v987
      %v1116 = vunpack.c.l.b16 %v988
      %v1117 = vunpack.c.l.b16 %v989
      %v1118 = vunpack.c.l.b16 %v990
      %v1119 = vunpack.c.l.b16 %v991
      %v1120 = vunpack.c.l.b16 %v992
      %v1121 = vunpack.c.l.b16 %v993
      %v1122 = vunpack.c.l.b16 %v994
      %v1123 = vunpack.c.l.b16 %v995
      %v1124 = vpack.c.b16 %v1109, %v1108
      %v1125 = vpack.c.b16 %v1111, %v1110
      %v1126 = vpack.c.b16 %v1113, %v1112
      %v1127 = vpack.c.b16 %v1115, %v1114
      %v1128 = vpack.c.b16 %v1117, %v1116
      %v1129 = vpack.c.b16 %v1119, %v1118
      %v1130 = vpack.c.b16 %v1121, %v1120
      %v1131 = vpack.c.b16 %v1123, %v1122
      %1140 = vmatprep.subr.bf16.mxu0 %v965
      %1141 = vmatpush1.bf16.msra.mxu0 %v964
      %1142 = vmatprep.subr.bf16.mxu0 %v967
      %1143 = vmatpush1.bf16.msra.mxu0 %v966
      %1144 = vmatprep.subr.bf16.mxu0 %v969
      %1145 = vmatpush1.bf16.msra.mxu0 %v968
      %1146 = vmatprep.subr.bf16.mxu0 %v971
      %1147 = vmatpush1.bf16.msra.mxu0 %v970
      %1148 = vmatprep.subr.bf16.mxu0 %v973
      %1149 = vmatpush1.bf16.msra.mxu0 %v972
      %1150 = vmatprep.subr.bf16.mxu0 %v975
      %1151 = vmatpush1.bf16.msra.mxu0 %v974
      %1152 = vmatprep.subr.bf16.mxu0 %v977
      %1153 = vmatpush1.bf16.msra.mxu0 %v976
      %1154 = vmatprep.subr.bf16.mxu0 %v979
      %1155 = vmatpush1.bf16.msra.mxu0 %v978
      %1156 = vmatprep.subr.bf16.mxu0 0
      %1157 = vmatpush1.bf16.msra.mxu0 0
      %1158 = vmatprep.subr.bf16.mxu0 0
      %1159 = vmatpush1.bf16.msra.mxu0 0
      %1160 = vmatprep.subr.bf16.mxu0 0
      %1161 = vmatpush1.bf16.msra.mxu0 0
      %1162 = vmatprep.subr.bf16.mxu0 0
      %1163 = vmatpush1.bf16.msra.mxu0 0
      %1164 = vmatprep.subr.bf16.mxu0 0
      %1165 = vmatpush1.bf16.msra.mxu0 0
      %1166 = vmatprep.subr.bf16.mxu0 0
      %1167 = vmatpush1.bf16.msra.mxu0 0
      %1168 = vmatprep.subr.bf16.mxu0 0
      %1169 = vmatpush1.bf16.msra.mxu0 0
      %1170 = vmatprep.subr.bf16.mxu0 0
      %1171 = vmatpush1.bf16.msra.mxu0 0
      %1172 = vmatprep.mubr.bf16.mxu0 0
      %1173 = vmatmul.mubr.bf16.gmra.mrb[0].mxu0 %v1124
      %v1174 = vpop.f32.mrb[0].mxu0
      %v1175 = vadd.f32 %v1015, %v1174
      %v1176 = vpop.f32.mrb[0].mxu0
      %v1177 = vadd.f32 %v1015, %v1176
      %v1178 = vpop.f32.mrb[0].mxu0
      %v1179 = vadd.f32 %v1020, %v1178
      %v1180 = vpop.f32.mrb[0].mxu0
      %v1181 = vadd.f32 %v1020, %v1180
      %1182 = vmatprep.mubr.bf16.mxu0 0
      %1183 = vmatmul.mubr.bf16.gmra.mrb[0].mxu0 %v1125
      %v1184 = vpop.f32.mrb[0].mxu0
      %v1185 = vadd.f32 %v1025, %v1184
      %v1186 = vpop.f32.mrb[0].mxu0
      %v1187 = vadd.f32 %v1025, %v1186
      %v1188 = vpop.f32.mrb[0].mxu0
      %v1189 = vadd.f32 %v1030, %v1188
      %v1190 = vpop.f32.mrb[0].mxu0
      %v1191 = vadd.f32 %v1030, %v1190
      %1192 = vmatprep.mubr.bf16.mxu0 0
      %1193 = vmatmul.mubr.bf16.gmra.mrb[0].mxu0 %v1126
      %v1194 = vpop.f32.mrb[0].mxu0
      %v1195 = vadd.f32 %v1035, %v1194
      %v1196 = vpop.f32.mrb[0].mxu0
      %v1197 = vadd.f32 %v1035, %v1196
      %v1198 = vpop.f32.mrb[0].mxu0
      %v1199 = vadd.f32 %v1040, %v1198
      %v1200 = vpop.f32.mrb[0].mxu0
      %v1201 = vadd.f32 %v1040, %v1200
      %1202 = vmatprep.mubr.bf16.mxu0 0
      %1203 = vmatmul.mubr.bf16.gmra.mrb[0].mxu0 %v1127
      %v1204 = vpop.f32.mrb[0].mxu0
      %v1205 = vadd.f32 %v1045, %v1204
      %v1206 = vpop.f32.mrb[0].mxu0
      %v1207 = vadd.f32 %v1045, %v1206
      %v1208 = vpop.f32.mrb[0].mxu0
      %v1209 = vadd.f32 %v1050, %v1208
      %v1210 = vpop.f32.mrb[0].mxu0
      %v1211 = vadd.f32 %v1050, %v1210
      %1212 = vmatprep.mubr.bf16.mxu0 0
      %1213 = vmatmul.mubr.bf16.gmra.mrb[0].mxu0 %v1128
      %v1214 = vpop.f32.mrb[0].mxu0
      %v1215 = vadd.f32 %v1055, %v1214
      %v1216 = vpop.f32.mrb[0].mxu0
      %v1217 = vadd.f32 %v1055, %v1216
      %v1218 = vpop.f32.mrb[0].mxu0
      %v1219 = vadd.f32 %v1060, %v1218
      %v1220 = vpop.f32.mrb[0].mxu0
      %v1221 = vadd.f32 %v1060, %v1220
      %1222 = vmatprep.mubr.bf16.mxu0 0
      %1223 = vmatmul.mubr.bf16.gmra.mrb[0].mxu0 %v1129
      %v1224 = vpop.f32.mrb[0].mxu0
      %v1225 = vadd.f32 %v1065, %v1224
      %v1226 = vpop.f32.mrb[0].mxu0
      %v1227 = vadd.f32 %v1065, %v1226
      %v1228 = vpop.f32.mrb[0].mxu0
      %v1229 = vadd.f32 %v1070, %v1228
      %v1230 = vpop.f32.mrb[0].mxu0
      %v1231 = vadd.f32 %v1070, %v1230
      %1232 = vmatprep.mubr.bf16.mxu0 0
      %1233 = vmatmul.mubr.bf16.gmra.mrb[0].mxu0 %v1130
      %v1234 = vpop.f32.mrb[0].mxu0
      %v1235 = vadd.f32 %v1075, %v1234
      %v1236 = vpop.f32.mrb[0].mxu0
      %v1237 = vadd.f32 %v1075, %v1236
      %v1238 = vpop.f32.mrb[0].mxu0
      %v1239 = vadd.f32 %v1080, %v1238
      %v1240 = vpop.f32.mrb[0].mxu0
      %v1241 = vadd.f32 %v1080, %v1240
      %1242 = vmatprep.mubr.bf16.mxu0 0
      %1243 = vmatmul.mubr.bf16.gmra.mrb[0].mxu0 %v1131
      %v1244 = vpop.f32.mrb[0].mxu0
      %v1245 = vadd.f32 %v1085, %v1244
      %v1246 = vpop.f32.mrb[0].mxu0
      %v1247 = vadd.f32 %v1085, %v1246
      %v1248 = vpop.f32.mrb[0].mxu0
      %v1249 = vadd.f32 %v1090, %v1248
      %v1250 = vpop.f32.mrb[0].mxu0
      %v1251 = vadd.f32 %v1090, %v1250
      %1252 = vdwg.mxu0
      %v1253 = vmax.f32 %v1175, 0.0
      %v1254 = vmax.f32 %v1177, 0.0
      %v1255 = vmax.f32 %v1179, 0.0
      %v1256 = vmax.f32 %v1181, 0.0
      %v1257 = vmax.f32 %v1185, 0.0
      %v1258 = vmax.f32 %v1187, 0.0
      %v1259 = vmax.f32 %v1189, 0.0
      %v1260 = vmax.f32 %v1191, 0.0
      %v1261 = vmax.f32 %v1195, 0.0
      %v1262 = vmax.f32 %v1197, 0.0
      %v1263 = vmax.f32 %v1199, 0.0
      %v1264 = vmax.f32 %v1201, 0.0
      %v1265 = vmax.f32 %v1205, 0.0
      %v1266 = vmax.f32 %v1207, 0.0
      %v1267 = vmax.f32 %v1209, 0.0
      %v1268 = vmax.f32 %v1211, 0.0
      %v1269 = vmax.f32 %v1215, 0.0
      %v1270 = vmax.f32 %v1217, 0.0
      %v1271 = vmax.f32 %v1219, 0.0
      %v1272 = vmax.f32 %v1221, 0.0
      %v1273 = vmax.f32 %v1225, 0.0
      %v1274 = vmax.f32 %v1227, 0.0
      %v1275 = vmax.f32 %v1229, 0.0
      %v1276 = vmax.f32 %v1231, 0.0
      %v1277 = vmax.f32 %v1235, 0.0
      %v1278 = vmax.f32 %v1237, 0.0
      %v1279 = vmax.f32 %v1239, 0.0
      %v1280 = vmax.f32 %v1241, 0.0
      %v1281 = vmax.f32 %v1245, 0.0
      %v1282 = vmax.f32 %v1247, 0.0
      %v1283 = vmax.f32 %v1249, 0.0
      %v1284 = vmax.f32 %v1251, 0.0
      %v1285 = vpack.c.bf16 %v1255, %v1253
      %v1286 = vpack.c.bf16 %v1256, %v1254
      %v1287 = vpack.c.bf16 %v1259, %v1257
      %v1288 = vpack.c.bf16 %v1260, %v1258
      %v1289 = vpack.c.bf16 %v1263, %v1261
      %v1290 = vpack.c.bf16 %v1264, %v1262
      %v1291 = vpack.c.bf16 %v1267, %v1265
      %v1292 = vpack.c.bf16 %v1268, %v1266
      %v1293 = vpack.c.bf16 %v1271, %v1269
      %v1294 = vpack.c.bf16 %v1272, %v1270
      %v1295 = vpack.c.bf16 %v1275, %v1273
      %v1296 = vpack.c.bf16 %v1276, %v1274
      %v1297 = vpack.c.bf16 %v1279, %v1277
      %v1298 = vpack.c.bf16 %v1280, %v1278
      %v1299 = vpack.c.bf16 %v1283, %v1281
      %v1300 = vpack.c.bf16 %v1284, %v1282
      %v1301 = vld [vmem:[%s7] sm:$0xf]
      %v1302 = vld [vmem:[%s7 + $0x4] sm:$0xf]
      %v1303 = vld [vmem:[%s7 + $0x8] sm:$0xf]
      %v1304 = vld [vmem:[%s7 + $0xc] sm:$0xf]
      %v1305 = vld [vmem:[%s7 + $0x10] sm:$0xf]
      %v1306 = vld [vmem:[%s7 + $0x14] sm:$0xf]
      %v1307 = vld [vmem:[%s7 + $0x18] sm:$0xf]
      %v1308 = vld [vmem:[%s7 + $0x1c] sm:$0xf]
      %v1309 = vld [vmem:[%s7 + $0x20] sm:$0xf]
      %v1310 = vld [vmem:[%s7 + $0x24] sm:$0xf]
      %v1311 = vld [vmem:[%s7 + $0x28] sm:$0xf]
      %v1312 = vld [vmem:[%s7 + $0x2c] sm:$0xf]
      %v1313 = vld [vmem:[%s7 + $0x30] sm:$0xf]
      %v1314 = vld [vmem:[%s7 + $0x34] sm:$0xf]
      %v1315 = vld [vmem:[%s7 + $0x38] sm:$0xf]
      %v1316 = vld [vmem:[%s7 + $0x3c] sm:$0xf]
      %v1317 = vld [vmem:[%s7 + $0x40] sm:$0xf]
      %v1318 = vld [vmem:[%s7 + $0x44] sm:$0xf]
      %v1319 = vld [vmem:[%s7 + $0x48] sm:$0xf]
      %v1320 = vld [vmem:[%s7 + $0x4c] sm:$0xf]
      %v1321 = vld [vmem:[%s7 + $0x50] sm:$0xf]
      %v1322 = vld [vmem:[%s7 + $0x54] sm:$0xf]
      %v1323 = vld [vmem:[%s7 + $0x58] sm:$0xf]
      %v1324 = vld [vmem:[%s7 + $0x5c] sm:$0xf]
      %v1325 = vld [vmem:[%s7 + $0x60] sm:$0xf]
      %v1326 = vld [vmem:[%s7 + $0x64] sm:$0xf]
      %v1327 = vld [vmem:[%s7 + $0x68] sm:$0xf]
      %v1328 = vld [vmem:[%s7 + $0x6c] sm:$0xf]
      %v1329 = vld [vmem:[%s7 + $0x70] sm:$0xf]
      %v1330 = vld [vmem:[%s7 + $0x74] sm:$0xf]
      %v1331 = vld [vmem:[%s7 + $0x78] sm:$0xf]
      %v1332 = vld [vmem:[%s7 + $0x7c] sm:$0xf]
      %v1333 = vld [vmem:[%s8] sm:$0xff]
      %v1334 = vld [vmem:[%s8 + $0x8] sm:$0xff]
      %v1335 = vld [vmem:[%s8 + $0x10] sm:$0xff]
      %v1336 = vld [vmem:[%s8 + $0x18] sm:$0xff]
      %v1337 = vld [vmem:[%s8 + $0x20] sm:$0xff]
      %v1338 = vld [vmem:[%s8 + $0x28] sm:$0xff]
      %v1339 = vld [vmem:[%s8 + $0x30] sm:$0xff]
      %v1340 = vld [vmem:[%s8 + $0x38] sm:$0xff]
      %v1341 = vld [vmem:[%s8 + $0x40] sm:$0xff]
      %v1342 = vld [vmem:[%s8 + $0x48] sm:$0xff]
      %v1343 = vld [vmem:[%s8 + $0x50] sm:$0xff]
      %v1344 = vld [vmem:[%s8 + $0x58] sm:$0xff]
      %v1345 = vld [vmem:[%s8 + $0x60] sm:$0xff]
      %v1346 = vld [vmem:[%s8 + $0x68] sm:$0xff]
      %v1347 = vld [vmem:[%s8 + $0x70] sm:$0xff]
      %v1348 = vld [vmem:[%s8 + $0x78] sm:$0xff]
      %v1349 = vld [vmem:[%s8 + $0x80] sm:$0xff]
      %v1350 = vld [vmem:[%s8 + $0x88] sm:$0xff]
      %v1351 = vld [vmem:[%s8 + $0x90] sm:$0xff]
      %v1352 = vld [vmem:[%s8 + $0x98] sm:$0xff]
      %v1353 = vld [vmem:[%s8 + $0xa0] sm:$0xff]
      %v1354 = vld [vmem:[%s8 + $0xa8] sm:$0xff]
      %v1355 = vld [vmem:[%s8 + $0xb0] sm:$0xff]
      %v1356 = vld [vmem:[%s8 + $0xb8] sm:$0xff]
      %v1357 = vld [vmem:[%s8 + $0xc0] sm:$0xff]
      %v1358 = vld [vmem:[%s8 + $0xc8] sm:$0xff]
      %v1359 = vld [vmem:[%s8 + $0xd0] sm:$0xff]
      %v1360 = vld [vmem:[%s8 + $0xd8] sm:$0xff]
      %v1361 = vld [vmem:[%s8 + $0xe0] sm:$0xff]
      %v1362 = vld [vmem:[%s8 + $0xe8] sm:$0xff]
      %v1363 = vld [vmem:[%s8 + $0xf0] sm:$0xff]
      %v1364 = vld [vmem:[%s8 + $0xf8] sm:$0xff]
      %1366 = vset.pattern.permute.xlu0 0
      %1367 = vperm.xlu0 %1366, %v1333
      %v1368 = vpop.permute.xlu0 %1367
      %1371 = vset.pattern.permute.xlu0 0
      %1372 = vperm.xlu0 %1371, %v1334
      %v1373 = vpop.permute.xlu0 %1372
      %1376 = vset.pattern.permute.xlu0 0
      %1377 = vperm.xlu0 %1376, %v1335
      %v1378 = vpop.permute.xlu0 %1377
      %1381 = vset.pattern.permute.xlu0 0
      %1382 = vperm.xlu0 %1381, %v1336
      %v1383 = vpop.permute.xlu0 %1382
      %1386 = vset.pattern.permute.xlu0 0
      %1387 = vperm.xlu0 %1386, %v1337
      %v1388 = vpop.permute.xlu0 %1387
      %1391 = vset.pattern.permute.xlu0 0
      %1392 = vperm.xlu0 %1391, %v1338
      %v1393 = vpop.permute.xlu0 %1392
      %1396 = vset.pattern.permute.xlu0 0
      %1397 = vperm.xlu0 %1396, %v1339
      %v1398 = vpop.permute.xlu0 %1397
      %1401 = vset.pattern.permute.xlu0 0
      %1402 = vperm.xlu0 %1401, %v1340
      %v1403 = vpop.permute.xlu0 %1402
      %1406 = vset.pattern.permute.xlu0 0
      %1407 = vperm.xlu0 %1406, %v1341
      %v1408 = vpop.permute.xlu0 %1407
      %1411 = vset.pattern.permute.xlu0 0
      %1412 = vperm.xlu0 %1411, %v1342
      %v1413 = vpop.permute.xlu0 %1412
      %1416 = vset.pattern.permute.xlu0 0
      %1417 = vperm.xlu0 %1416, %v1343
      %v1418 = vpop.permute.xlu0 %1417
      %1421 = vset.pattern.permute.xlu0 0
      %1422 = vperm.xlu0 %1421, %v1344
      %v1423 = vpop.permute.xlu0 %1422
      %1426 = vset.pattern.permute.xlu0 0
      %1427 = vperm.xlu0 %1426, %v1345
      %v1428 = vpop.permute.xlu0 %1427
      %1431 = vset.pattern.permute.xlu0 0
      %1432 = vperm.xlu0 %1431, %v1346
      %v1433 = vpop.permute.xlu0 %1432
      %1436 = vset.pattern.permute.xlu0 0
      %1437 = vperm.xlu0 %1436, %v1347
      %v1438 = vpop.permute.xlu0 %1437
      %1441 = vset.pattern.permute.xlu0 0
      %1442 = vperm.xlu0 %1441, %v1348
      %v1443 = vpop.permute.xlu0 %1442
      %1446 = vset.pattern.permute.xlu0 0
      %1447 = vperm.xlu0 %1446, %v1349
      %v1448 = vpop.permute.xlu0 %1447
      %1451 = vset.pattern.permute.xlu0 0
      %1452 = vperm.xlu0 %1451, %v1350
      %v1453 = vpop.permute.xlu0 %1452
      %1456 = vset.pattern.permute.xlu0 0
      %1457 = vperm.xlu0 %1456, %v1351
      %v1458 = vpop.permute.xlu0 %1457
      %1461 = vset.pattern.permute.xlu0 0
      %1462 = vperm.xlu0 %1461, %v1352
      %v1463 = vpop.permute.xlu0 %1462
      %1466 = vset.pattern.permute.xlu0 0
      %1467 = vperm.xlu0 %1466, %v1353
      %v1468 = vpop.permute.xlu0 %1467
      %1471 = vset.pattern.permute.xlu0 0
      %1472 = vperm.xlu0 %1471, %v1354
      %v1473 = vpop.permute.xlu0 %1472
      %1476 = vset.pattern.permute.xlu0 0
      %1477 = vperm.xlu0 %1476, %v1355
      %v1478 = vpop.permute.xlu0 %1477
      %1481 = vset.pattern.permute.xlu0 0
      %1482 = vperm.xlu0 %1481, %v1356
      %v1483 = vpop.permute.xlu0 %1482
      %1486 = vset.pattern.permute.xlu0 0
      %1487 = vperm.xlu0 %1486, %v1357
      %v1488 = vpop.permute.xlu0 %1487
      %1491 = vset.pattern.permute.xlu0 0
      %1492 = vperm.xlu0 %1491, %v1358
      %v1493 = vpop.permute.xlu0 %1492
      %1496 = vset.pattern.permute.xlu0 0
      %1497 = vperm.xlu0 %1496, %v1359
      %v1498 = vpop.permute.xlu0 %1497
      %1501 = vset.pattern.permute.xlu0 0
      %1502 = vperm.xlu0 %1501, %v1360
      %v1503 = vpop.permute.xlu0 %1502
      %1506 = vset.pattern.permute.xlu0 0
      %1507 = vperm.xlu0 %1506, %v1361
      %v1508 = vpop.permute.xlu0 %1507
      %1511 = vset.pattern.permute.xlu0 0
      %1512 = vperm.xlu0 %1511, %v1362
      %v1513 = vpop.permute.xlu0 %1512
      %1516 = vset.pattern.permute.xlu0 0
      %1517 = vperm.xlu0 %1516, %v1363
      %v1518 = vpop.permute.xlu0 %1517
      %1521 = vset.pattern.permute.xlu0 0
      %1522 = vperm.xlu0 %1521, %v1364
      %v1523 = vpop.permute.xlu0 %1522
      %v1557 = vunpack.c.l.b16 %v1301
      %v1558 = vunpack.c.l.b16 %v1302
      %v1559 = vunpack.c.l.b16 %v1303
      %v1560 = vunpack.c.l.b16 %v1304
      %v1561 = vunpack.c.l.b16 %v1305
      %v1562 = vunpack.c.l.b16 %v1306
      %v1563 = vunpack.c.l.b16 %v1307
      %v1564 = vunpack.c.l.b16 %v1308
      %v1565 = vunpack.c.l.b16 %v1309
      %v1566 = vunpack.c.l.b16 %v1310
      %v1567 = vunpack.c.l.b16 %v1311
      %v1568 = vunpack.c.l.b16 %v1312
      %v1569 = vunpack.c.l.b16 %v1313
      %v1570 = vunpack.c.l.b16 %v1314
      %v1571 = vunpack.c.l.b16 %v1315
      %v1572 = vunpack.c.l.b16 %v1316
      %v1573 = vunpack.c.l.b16 %v1317
      %v1574 = vunpack.c.l.b16 %v1318
      %v1575 = vunpack.c.l.b16 %v1319
      %v1576 = vunpack.c.l.b16 %v1320
      %v1577 = vunpack.c.l.b16 %v1321
      %v1578 = vunpack.c.l.b16 %v1322
      %v1579 = vunpack.c.l.b16 %v1323
      %v1580 = vunpack.c.l.b16 %v1324
      %v1581 = vunpack.c.l.b16 %v1325
      %v1582 = vunpack.c.l.b16 %v1326
      %v1583 = vunpack.c.l.b16 %v1327
      %v1584 = vunpack.c.l.b16 %v1328
      %v1585 = vunpack.c.l.b16 %v1329
      %v1586 = vunpack.c.l.b16 %v1330
      %v1587 = vunpack.c.l.b16 %v1331
      %v1588 = vunpack.c.l.b16 %v1332
      %v1589 = vpack.c.b16 %v1558, %v1557
      %v1590 = vpack.c.b16 %v1560, %v1559
      %v1591 = vpack.c.b16 %v1562, %v1561
      %v1592 = vpack.c.b16 %v1564, %v1563
      %v1593 = vpack.c.b16 %v1566, %v1565
      %v1594 = vpack.c.b16 %v1568, %v1567
      %v1595 = vpack.c.b16 %v1570, %v1569
      %v1596 = vpack.c.b16 %v1572, %v1571
      %v1597 = vpack.c.b16 %v1574, %v1573
      %v1598 = vpack.c.b16 %v1576, %v1575
      %v1599 = vpack.c.b16 %v1578, %v1577
      %v1600 = vpack.c.b16 %v1580, %v1579
      %v1601 = vpack.c.b16 %v1582, %v1581
      %v1602 = vpack.c.b16 %v1584, %v1583
      %v1603 = vpack.c.b16 %v1586, %v1585
      %v1604 = vpack.c.b16 %v1588, %v1587
      %1621 = vmatprep.subr.bf16.mxu0 %v1286
      %1622 = vmatpush1.bf16.msra.mxu0 %v1285
      %1623 = vmatprep.subr.bf16.mxu0 %v1288
      %1624 = vmatpush1.bf16.msra.mxu0 %v1287
      %1625 = vmatprep.subr.bf16.mxu0 %v1290
      %1626 = vmatpush1.bf16.msra.mxu0 %v1289
      %1627 = vmatprep.subr.bf16.mxu0 %v1292
      %1628 = vmatpush1.bf16.msra.mxu0 %v1291
      %1629 = vmatprep.subr.bf16.mxu0 %v1294
      %1630 = vmatpush1.bf16.msra.mxu0 %v1293
      %1631 = vmatprep.subr.bf16.mxu0 %v1296
      %1632 = vmatpush1.bf16.msra.mxu0 %v1295
      %1633 = vmatprep.subr.bf16.mxu0 %v1298
      %1634 = vmatpush1.bf16.msra.mxu0 %v1297
      %1635 = vmatprep.subr.bf16.mxu0 %v1300
      %1636 = vmatpush1.bf16.msra.mxu0 %v1299
      %1637 = vmatprep.subr.bf16.mxu0 0
      %1638 = vmatpush1.bf16.msra.mxu0 0
      %1639 = vmatprep.subr.bf16.mxu0 0
      %1640 = vmatpush1.bf16.msra.mxu0 0
      %1641 = vmatprep.subr.bf16.mxu0 0
      %1642 = vmatpush1.bf16.msra.mxu0 0
      %1643 = vmatprep.subr.bf16.mxu0 0
      %1644 = vmatpush1.bf16.msra.mxu0 0
      %1645 = vmatprep.subr.bf16.mxu0 0
      %1646 = vmatpush1.bf16.msra.mxu0 0
      %1647 = vmatprep.subr.bf16.mxu0 0
      %1648 = vmatpush1.bf16.msra.mxu0 0
      %1649 = vmatprep.subr.bf16.mxu0 0
      %1650 = vmatpush1.bf16.msra.mxu0 0
      %1651 = vmatprep.subr.bf16.mxu0 0
      %1652 = vmatpush1.bf16.msra.mxu0 0
      %1653 = vmatprep.mubr.bf16.mxu0 0
      %1654 = vmatmul.mubr.bf16.gmra.mrb[0].mxu0 %v1589
      %v1655 = vpop.f32.mrb[0].mxu0
      %v1656 = vadd.f32 %v1368, %v1655
      %v1657 = vpop.f32.mrb[0].mxu0
      %v1658 = vadd.f32 %v1368, %v1657
      %v1659 = vpop.f32.mrb[0].mxu0
      %v1660 = vadd.f32 %v1373, %v1659
      %v1661 = vpop.f32.mrb[0].mxu0
      %v1662 = vadd.f32 %v1373, %v1661
      %1663 = vmatprep.mubr.bf16.mxu0 0
      %1664 = vmatmul.mubr.bf16.gmra.mrb[0].mxu0 %v1590
      %v1665 = vpop.f32.mrb[0].mxu0
      %v1666 = vadd.f32 %v1378, %v1665
      %v1667 = vpop.f32.mrb[0].mxu0
      %v1668 = vadd.f32 %v1378, %v1667
      %v1669 = vpop.f32.mrb[0].mxu0
      %v1670 = vadd.f32 %v1383, %v1669
      %v1671 = vpop.f32.mrb[0].mxu0
      %v1672 = vadd.f32 %v1383, %v1671
      %1673 = vmatprep.mubr.bf16.mxu0 0
      %1674 = vmatmul.mubr.bf16.gmra.mrb[0].mxu0 %v1591
      %v1675 = vpop.f32.mrb[0].mxu0
      %v1676 = vadd.f32 %v1388, %v1675
      %v1677 = vpop.f32.mrb[0].mxu0
      %v1678 = vadd.f32 %v1388, %v1677
      %v1679 = vpop.f32.mrb[0].mxu0
      %v1680 = vadd.f32 %v1393, %v1679
      %v1681 = vpop.f32.mrb[0].mxu0
      %v1682 = vadd.f32 %v1393, %v1681
      %1683 = vmatprep.mubr.bf16.mxu0 0
      %1684 = vmatmul.mubr.bf16.gmra.mrb[0].mxu0 %v1592
      %v1685 = vpop.f32.mrb[0].mxu0
      %v1686 = vadd.f32 %v1398, %v1685
      %v1687 = vpop.f32.mrb[0].mxu0
      %v1688 = vadd.f32 %v1398, %v1687
      %v1689 = vpop.f32.mrb[0].mxu0
      %v1690 = vadd.f32 %v1403, %v1689
      %v1691 = vpop.f32.mrb[0].mxu0
      %v1692 = vadd.f32 %v1403, %v1691
      %1693 = vmatprep.mubr.bf16.mxu0 0
      %1694 = vmatmul.mubr.bf16.gmra.mrb[0].mxu0 %v1593
      %v1695 = vpop.f32.mrb[0].mxu0
      %v1696 = vadd.f32 %v1408, %v1695
      %v1697 = vpop.f32.mrb[0].mxu0
      %v1698 = vadd.f32 %v1408, %v1697
      %v1699 = vpop.f32.mrb[0].mxu0
      %v1700 = vadd.f32 %v1413, %v1699
      %v1701 = vpop.f32.mrb[0].mxu0
      %v1702 = vadd.f32 %v1413, %v1701
      %1703 = vmatprep.mubr.bf16.mxu0 0
      %1704 = vmatmul.mubr.bf16.gmra.mrb[0].mxu0 %v1594
      %v1705 = vpop.f32.mrb[0].mxu0
      %v1706 = vadd.f32 %v1418, %v1705
      %v1707 = vpop.f32.mrb[0].mxu0
      %v1708 = vadd.f32 %v1418, %v1707
      %v1709 = vpop.f32.mrb[0].mxu0
      %v1710 = vadd.f32 %v1423, %v1709
      %v1711 = vpop.f32.mrb[0].mxu0
      %v1712 = vadd.f32 %v1423, %v1711
      %1713 = vmatprep.mubr.bf16.mxu0 0
      %1714 = vmatmul.mubr.bf16.gmra.mrb[0].mxu0 %v1595
      %v1715 = vpop.f32.mrb[0].mxu0
      %v1716 = vadd.f32 %v1428, %v1715
      %v1717 = vpop.f32.mrb[0].mxu0
      %v1718 = vadd.f32 %v1428, %v1717
      %v1719 = vpop.f32.mrb[0].mxu0
      %v1720 = vadd.f32 %v1433, %v1719
      %v1721 = vpop.f32.mrb[0].mxu0
      %v1722 = vadd.f32 %v1433, %v1721
      %1723 = vmatprep.mubr.bf16.mxu0 0
      %1724 = vmatmul.mubr.bf16.gmra.mrb[0].mxu0 %v1596
      %v1725 = vpop.f32.mrb[0].mxu0
      %v1726 = vadd.f32 %v1438, %v1725
      %v1727 = vpop.f32.mrb[0].mxu0
      %v1728 = vadd.f32 %v1438, %v1727
      %v1729 = vpop.f32.mrb[0].mxu0
      %v1730 = vadd.f32 %v1443, %v1729
      %v1731 = vpop.f32.mrb[0].mxu0
      %v1732 = vadd.f32 %v1443, %v1731
      %1733 = vmatprep.mubr.bf16.mxu0 0
      %1734 = vmatmul.mubr.bf16.gmra.mrb[0].mxu0 %v1597
      %v1735 = vpop.f32.mrb[0].mxu0
      %v1736 = vadd.f32 %v1448, %v1735
      %v1737 = vpop.f32.mrb[0].mxu0
      %v1738 = vadd.f32 %v1448, %v1737
      %v1739 = vpop.f32.mrb[0].mxu0
      %v1740 = vadd.f32 %v1453, %v1739
      %v1741 = vpop.f32.mrb[0].mxu0
      %v1742 = vadd.f32 %v1453, %v1741
      %1743 = vmatprep.mubr.bf16.mxu0 0
      %1744 = vmatmul.mubr.bf16.gmra.mrb[0].mxu0 %v1598
      %v1745 = vpop.f32.mrb[0].mxu0
      %v1746 = vadd.f32 %v1458, %v1745
      %v1747 = vpop.f32.mrb[0].mxu0
      %v1748 = vadd.f32 %v1458, %v1747
      %v1749 = vpop.f32.mrb[0].mxu0
      %v1750 = vadd.f32 %v1463, %v1749
      %v1751 = vpop.f32.mrb[0].mxu0
      %v1752 = vadd.f32 %v1463, %v1751
      %1753 = vmatprep.mubr.bf16.mxu0 0
      %1754 = vmatmul.mubr.bf16.gmra.mrb[0].mxu0 %v1599
      %v1755 = vpop.f32.mrb[0].mxu0
      %v1756 = vadd.f32 %v1468, %v1755
      %v1757 = vpop.f32.mrb[0].mxu0
      %v1758 = vadd.f32 %v1468, %v1757
      %v1759 = vpop.f32.mrb[0].mxu0
      %v1760 = vadd.f32 %v1473, %v1759
      %v1761 = vpop.f32.mrb[0].mxu0
      %v1762 = vadd.f32 %v1473, %v1761
      %1763 = vmatprep.mubr.bf16.mxu0 0
      %1764 = vmatmul.mubr.bf16.gmra.mrb[0].mxu0 %v1600
      %v1765 = vpop.f32.mrb[0].mxu0
      %v1766 = vadd.f32 %v1478, %v1765
      %v1767 = vpop.f32.mrb[0].mxu0
      %v1768 = vadd.f32 %v1478, %v1767
      %v1769 = vpop.f32.mrb[0].mxu0
      %v1770 = vadd.f32 %v1483, %v1769
      %v1771 = vpop.f32.mrb[0].mxu0
      %v1772 = vadd.f32 %v1483, %v1771
      %1773 = vmatprep.mubr.bf16.mxu0 0
      %1774 = vmatmul.mubr.bf16.gmra.mrb[0].mxu0 %v1601
      %v1775 = vpop.f32.mrb[0].mxu0
      %v1776 = vadd.f32 %v1488, %v1775
      %v1777 = vpop.f32.mrb[0].mxu0
      %v1778 = vadd.f32 %v1488, %v1777
      %v1779 = vpop.f32.mrb[0].mxu0
      %v1780 = vadd.f32 %v1493, %v1779
      %v1781 = vpop.f32.mrb[0].mxu0
      %v1782 = vadd.f32 %v1493, %v1781
      %1783 = vmatprep.mubr.bf16.mxu0 0
      %1784 = vmatmul.mubr.bf16.gmra.mrb[0].mxu0 %v1602
      %v1785 = vpop.f32.mrb[0].mxu0
      %v1786 = vadd.f32 %v1498, %v1785
      %v1787 = vpop.f32.mrb[0].mxu0
      %v1788 = vadd.f32 %v1498, %v1787
      %v1789 = vpop.f32.mrb[0].mxu0
      %v1790 = vadd.f32 %v1503, %v1789
      %v1791 = vpop.f32.mrb[0].mxu0
      %v1792 = vadd.f32 %v1503, %v1791
      %1793 = vmatprep.mubr.bf16.mxu0 0
      %1794 = vmatmul.mubr.bf16.gmra.mrb[0].mxu0 %v1603
      %v1795 = vpop.f32.mrb[0].mxu0
      %v1796 = vadd.f32 %v1508, %v1795
      %v1797 = vpop.f32.mrb[0].mxu0
      %v1798 = vadd.f32 %v1508, %v1797
      %v1799 = vpop.f32.mrb[0].mxu0
      %v1800 = vadd.f32 %v1513, %v1799
      %v1801 = vpop.f32.mrb[0].mxu0
      %v1802 = vadd.f32 %v1513, %v1801
      %1803 = vmatprep.mubr.bf16.mxu0 0
      %1804 = vmatmul.mubr.bf16.gmra.mrb[0].mxu0 %v1604
      %v1805 = vpop.f32.mrb[0].mxu0
      %v1806 = vadd.f32 %v1518, %v1805
      %v1807 = vpop.f32.mrb[0].mxu0
      %v1808 = vadd.f32 %v1518, %v1807
      %v1809 = vpop.f32.mrb[0].mxu0
      %v1810 = vadd.f32 %v1523, %v1809
      %v1811 = vpop.f32.mrb[0].mxu0
      %v1812 = vadd.f32 %v1523, %v1811
      %1813 = vdwg.mxu0
      %v1814 = vmax.f32 %v1656, 0.0
      %v1815 = vmax.f32 %v1658, 0.0
      %v1816 = vmax.f32 %v1660, 0.0
      %v1817 = vmax.f32 %v1662, 0.0
      %v1818 = vmax.f32 %v1666, 0.0
      %v1819 = vmax.f32 %v1668, 0.0
      %v1820 = vmax.f32 %v1670, 0.0
      %v1821 = vmax.f32 %v1672, 0.0
      %v1822 = vmax.f32 %v1676, 0.0
      %v1823 = vmax.f32 %v1678, 0.0
      %v1824 = vmax.f32 %v1680, 0.0
      %v1825 = vmax.f32 %v1682, 0.0
      %v1826 = vmax.f32 %v1686, 0.0
      %v1827 = vmax.f32 %v1688, 0.0
      %v1828 = vmax.f32 %v1690, 0.0
      %v1829 = vmax.f32 %v1692, 0.0
      %v1830 = vmax.f32 %v1696, 0.0
      %v1831 = vmax.f32 %v1698, 0.0
      %v1832 = vmax.f32 %v1700, 0.0
      %v1833 = vmax.f32 %v1702, 0.0
      %v1834 = vmax.f32 %v1706, 0.0
      %v1835 = vmax.f32 %v1708, 0.0
      %v1836 = vmax.f32 %v1710, 0.0
      %v1837 = vmax.f32 %v1712, 0.0
      %v1838 = vmax.f32 %v1716, 0.0
      %v1839 = vmax.f32 %v1718, 0.0
      %v1840 = vmax.f32 %v1720, 0.0
      %v1841 = vmax.f32 %v1722, 0.0
      %v1842 = vmax.f32 %v1726, 0.0
      %v1843 = vmax.f32 %v1728, 0.0
      %v1844 = vmax.f32 %v1730, 0.0
      %v1845 = vmax.f32 %v1732, 0.0
      %v1846 = vmax.f32 %v1736, 0.0
      %v1847 = vmax.f32 %v1738, 0.0
      %v1848 = vmax.f32 %v1740, 0.0
      %v1849 = vmax.f32 %v1742, 0.0
      %v1850 = vmax.f32 %v1746, 0.0
      %v1851 = vmax.f32 %v1748, 0.0
      %v1852 = vmax.f32 %v1750, 0.0
      %v1853 = vmax.f32 %v1752, 0.0
      %v1854 = vmax.f32 %v1756, 0.0
      %v1855 = vmax.f32 %v1758, 0.0
      %v1856 = vmax.f32 %v1760, 0.0
      %v1857 = vmax.f32 %v1762, 0.0
      %v1858 = vmax.f32 %v1766, 0.0
      %v1859 = vmax.f32 %v1768, 0.0
      %v1860 = vmax.f32 %v1770, 0.0
      %v1861 = vmax.f32 %v1772, 0.0
      %v1862 = vmax.f32 %v1776, 0.0
      %v1863 = vmax.f32 %v1778, 0.0
      %v1864 = vmax.f32 %v1780, 0.0
      %v1865 = vmax.f32 %v1782, 0.0
      %v1866 = vmax.f32 %v1786, 0.0
      %v1867 = vmax.f32 %v1788, 0.0
      %v1868 = vmax.f32 %v1790, 0.0
      %v1869 = vmax.f32 %v1792, 0.0
      %v1870 = vmax.f32 %v1796, 0.0
      %v1871 = vmax.f32 %v1798, 0.0
      %v1872 = vmax.f32 %v1800, 0.0
      %v1873 = vmax.f32 %v1802, 0.0
      %v1874 = vmax.f32 %v1806, 0.0
      %v1875 = vmax.f32 %v1808, 0.0
      %v1876 = vmax.f32 %v1810, 0.0
      %v1877 = vmax.f32 %v1812, 0.0
      %v1878 = vpack.c.bf16 %v1816, %v1814
      %v1879 = vpack.c.bf16 %v1817, %v1815
      %v1880 = vpack.c.bf16 %v1820, %v1818
      %v1881 = vpack.c.bf16 %v1821, %v1819
      %v1882 = vpack.c.bf16 %v1824, %v1822
      %v1883 = vpack.c.bf16 %v1825, %v1823
      %v1884 = vpack.c.bf16 %v1828, %v1826
      %v1885 = vpack.c.bf16 %v1829, %v1827
      %v1886 = vpack.c.bf16 %v1832, %v1830
      %v1887 = vpack.c.bf16 %v1833, %v1831
      %v1888 = vpack.c.bf16 %v1836, %v1834
      %v1889 = vpack.c.bf16 %v1837, %v1835
      %v1890 = vpack.c.bf16 %v1840, %v1838
      %v1891 = vpack.c.bf16 %v1841, %v1839
      %v1892 = vpack.c.bf16 %v1844, %v1842
      %v1893 = vpack.c.bf16 %v1845, %v1843
      %v1894 = vpack.c.bf16 %v1848, %v1846
      %v1895 = vpack.c.bf16 %v1849, %v1847
      %v1896 = vpack.c.bf16 %v1852, %v1850
      %v1897 = vpack.c.bf16 %v1853, %v1851
      %v1898 = vpack.c.bf16 %v1856, %v1854
      %v1899 = vpack.c.bf16 %v1857, %v1855
      %v1900 = vpack.c.bf16 %v1860, %v1858
      %v1901 = vpack.c.bf16 %v1861, %v1859
      %v1902 = vpack.c.bf16 %v1864, %v1862
      %v1903 = vpack.c.bf16 %v1865, %v1863
      %v1904 = vpack.c.bf16 %v1868, %v1866
      %v1905 = vpack.c.bf16 %v1869, %v1867
      %v1906 = vpack.c.bf16 %v1872, %v1870
      %v1907 = vpack.c.bf16 %v1873, %v1871
      %v1908 = vpack.c.bf16 %v1876, %v1874
      %v1909 = vpack.c.bf16 %v1877, %v1875
      %v1910 = vld [vmem:[%s9] sm:$0xff]
      %v1911 = vld [vmem:[%s9 + $0x8] sm:$0xff]
      %v1912 = vld [vmem:[%s10] sm:$0xff]
      %v1913 = vld [vmem:[%s10 + $0x8] sm:$0xff]
      %1915 = vset.pattern.permute.xlu0 0
      %1916 = vperm.xlu0 %1915, %v1912
      %v1917 = vpop.permute.xlu0 %1916
      %1920 = vset.pattern.permute.xlu0 0
      %1921 = vperm.xlu0 %1920, %v1913
      %v1922 = vpop.permute.xlu0 %1921
      %v1926 = vunpack.c.l.b16 %v1910
      %v1927 = vunpack.c.h.b16 %v1910
      %v1928 = vunpack.c.l.b16 %v1911
      %v1929 = vunpack.c.h.b16 %v1911
      %v1930 = vpack.c.b16 %v1928, %v1926
      %v1931 = vpack.c.b16 %v1929, %v1927
      %1934 = vmatprep.subr.bf16.mxu0 %v1879
      %1935 = vmatpush1.bf16.msra.mxu0 %v1878
      %1936 = vmatprep.subr.bf16.mxu0 %v1881
      %1937 = vmatpush1.bf16.msra.mxu0 %v1880
      %1938 = vmatprep.subr.bf16.mxu0 %v1883
      %1939 = vmatpush1.bf16.msra.mxu0 %v1882
      %1940 = vmatprep.subr.bf16.mxu0 %v1885
      %1941 = vmatpush1.bf16.msra.mxu0 %v1884
      %1942 = vmatprep.subr.bf16.mxu0 %v1887
      %1943 = vmatpush1.bf16.msra.mxu0 %v1886
      %1944 = vmatprep.subr.bf16.mxu0 %v1889
      %1945 = vmatpush1.bf16.msra.mxu0 %v1888
      %1946 = vmatprep.subr.bf16.mxu0 %v1891
      %1947 = vmatpush1.bf16.msra.mxu0 %v1890
      %1948 = vmatprep.subr.bf16.mxu0 %v1893
      %1949 = vmatpush1.bf16.msra.mxu0 %v1892
      %1950 = vmatprep.subr.bf16.mxu0 %v1895
      %1951 = vmatpush1.bf16.msra.mxu0 %v1894
      %1952 = vmatprep.subr.bf16.mxu0 %v1897
      %1953 = vmatpush1.bf16.msra.mxu0 %v1896
      %1954 = vmatprep.subr.bf16.mxu0 %v1899
      %1955 = vmatpush1.bf16.msra.mxu0 %v1898
      %1956 = vmatprep.subr.bf16.mxu0 %v1901
      %1957 = vmatpush1.bf16.msra.mxu0 %v1900
      %1958 = vmatprep.subr.bf16.mxu0 %v1903
      %1959 = vmatpush1.bf16.msra.mxu0 %v1902
      %1960 = vmatprep.subr.bf16.mxu0 %v1905
      %1961 = vmatpush1.bf16.msra.mxu0 %v1904
      %1962 = vmatprep.subr.bf16.mxu0 %v1907
      %1963 = vmatpush1.bf16.msra.mxu0 %v1906
      %1964 = vmatprep.subr.bf16.mxu0 %v1909
      %1965 = vmatpush1.bf16.msra.mxu0 %v1908
      %1966 = vmatprep.mubr.bf16.mxu0 %v1931
      %1967 = vmatmul.mubr.bf16.gmra.mrb[0].mxu0 %v1930
      %v1968 = vpop.f32.mrb[0].mxu0
      %v1969 = vadd.f32 %v1917, %v1968
      %v1970 = vpop.f32.mrb[0].mxu0
      %v1971 = vadd.f32 %v1917, %v1970
      %v1972 = vpop.f32.mrb[0].mxu0
      %v1973 = vadd.f32 %v1922, %v1972
      %v1974 = vpop.f32.mrb[0].mxu0
      %v1975 = vadd.f32 %v1922, %v1974
      %1976 = vdwg.mxu0
      %v1977 = vmax.f32 %v1969, 0.0
      %v1978 = vmax.f32 %v1971, 0.0
      %v1979 = vmax.f32 %v1973, 0.0
      %v1980 = vmax.f32 %v1975, 0.0
      %v1981 = vmax.f32 %v1977, %v1978
      %1982 = vmax.xlane.f32.xlu0 %v1981
      %v1983 = vpop.xlane.xlu0 %1982
      %v1984 = vmax.f32 %v1979, %v1980
      %1985 = vmax.xlane.f32.xlu0 %v1984
      %v1986 = vpop.xlane.xlu0 %1985
      %s1987 = scalar_lea.vmem %s427, 8
      %v1988 = vld [vmem:[%s1987] sm:$0x77]
      %v1990 = vcombine.high %v1988, %v1988
      %v1992 = vpack.c.bf16 %v1988, %v1988
      %v1993 = vpack.c.bf16 %v1990, %v1990
      %v1995 = vand.u32 %v1992, %v538
      %v1998 = vand.u32 %v1993, %v538
      %2000 = vmatprep.subr.bf16.mxu0 %v1998
      %2001 = vmatpush1.bf16.msra.mxu0 %v1995
      %2002 = vmatprep.subr.bf16.mxu0 0
      %2003 = vmatpush1.bf16.msra.mxu0 0
      %2004 = vmatprep.subr.bf16.mxu0 0
      %2005 = vmatpush1.bf16.msra.mxu0 0
      %2006 = vmatprep.subr.bf16.mxu0 0
      %2007 = vmatpush1.bf16.msra.mxu0 0
      %2008 = vmatprep.subr.bf16.mxu0 0
      %2009 = vmatpush1.bf16.msra.mxu0 0
      %2010 = vmatprep.subr.bf16.mxu0 0
      %2011 = vmatpush1.bf16.msra.mxu0 0
      %2012 = vmatprep.subr.bf16.mxu0 0
      %2013 = vmatpush1.bf16.msra.mxu0 0
      %2014 = vmatprep.subr.bf16.mxu0 0
      %2015 = vmatpush1.bf16.msra.mxu0 0
      %2016 = vmatprep.subr.bf16.mxu0 0
      %2017 = vmatpush1.bf16.msra.mxu0 0
      %2018 = vmatprep.subr.bf16.mxu0 0
      %2019 = vmatpush1.bf16.msra.mxu0 0
      %2020 = vmatprep.subr.bf16.mxu0 0
      %2021 = vmatpush1.bf16.msra.mxu0 0
      %2022 = vmatprep.subr.bf16.mxu0 0
      %2023 = vmatpush1.bf16.msra.mxu0 0
      %2024 = vmatprep.subr.bf16.mxu0 0
      %2025 = vmatpush1.bf16.msra.mxu0 0
      %2026 = vmatprep.subr.bf16.mxu0 0
      %2027 = vmatpush1.bf16.msra.mxu0 0
      %2028 = vmatprep.subr.bf16.mxu0 0
      %2029 = vmatpush1.bf16.msra.mxu0 0
      %2030 = vmatprep.subr.bf16.mxu0 0
      %2031 = vmatpush1.bf16.msra.mxu0 0
      %2032 = vmatprep.mubr.bf16.mxu0 0
      %2033 = vmatmul.mubr.bf16.gmra.mrb[0].mxu0 %v524
      %v2034 = vpop.f32.mrb[0].mxu0
      %v2035 = vadd.f32 %v465, %v2034
      %v2036 = vpop.f32.mrb[0].mxu0
      %v2037 = vadd.f32 %v465, %v2036
      %v2038 = vpop.f32.mrb[0].mxu0
      %v2039 = vadd.f32 %v470, %v2038
      %v2040 = vpop.f32.mrb[0].mxu0
      %v2041 = vadd.f32 %v470, %v2040
      %2042 = vmatprep.mubr.bf16.mxu0 0
      %2043 = vmatmul.mubr.bf16.gmra.mrb[0].mxu0 %v527
      %v2044 = vpop.f32.mrb[0].mxu0
      %v2045 = vadd.f32 %v475, %v2044
      %v2046 = vpop.f32.mrb[0].mxu0
      %v2047 = vadd.f32 %v475, %v2046
      %v2048 = vpop.f32.mrb[0].mxu0
      %v2049 = vadd.f32 %v480, %v2048
      %v2050 = vpop.f32.mrb[0].mxu0
      %v2051 = vadd.f32 %v480, %v2050
      %2052 = vmatprep.mubr.bf16.mxu0 0
      %2053 = vmatmul.mubr.bf16.gmra.mrb[0].mxu0 %v530
      %v2054 = vpop.f32.mrb[0].mxu0
      %v2055 = vadd.f32 %v485, %v2054
      %v2056 = vpop.f32.mrb[0].mxu0
      %v2057 = vadd.f32 %v485, %v2056
      %v2058 = vpop.f32.mrb[0].mxu0
      %v2059 = vadd.f32 %v490, %v2058
      %v2060 = vpop.f32.mrb[0].mxu0
      %v2061 = vadd.f32 %v490, %v2060
      %2062 = vmatprep.mubr.bf16.mxu0 0
      %2063 = vmatmul.mubr.bf16.gmra.mrb[0].mxu0 %v533
      %v2064 = vpop.f32.mrb[0].mxu0
      %v2065 = vadd.f32 %v495, %v2064
      %v2066 = vpop.f32.mrb[0].mxu0
      %v2067 = vadd.f32 %v495, %v2066
      %v2068 = vpop.f32.mrb[0].mxu0
      %v2069 = vadd.f32 %v500, %v2068
      %v2070 = vpop.f32.mrb[0].mxu0
      %v2071 = vadd.f32 %v500, %v2070
      %2072 = vdwg.mxu0
      %v2073 = vmax.f32 %v2035, 0.0
      %v2074 = vmax.f32 %v2037, 0.0
      %v2075 = vmax.f32 %v2039, 0.0
      %v2076 = vmax.f32 %v2041, 0.0
      %v2077 = vmax.f32 %v2045, 0.0
      %v2078 = vmax.f32 %v2047, 0.0
      %v2079 = vmax.f32 %v2049, 0.0
      %v2080 = vmax.f32 %v2051, 0.0
      %v2081 = vmax.f32 %v2055, 0.0
      %v2082 = vmax.f32 %v2057, 0.0
      %v2083 = vmax.f32 %v2059, 0.0
      %v2084 = vmax.f32 %v2061, 0.0
      %v2085 = vmax.f32 %v2065, 0.0
      %v2086 = vmax.f32 %v2067, 0.0
      %v2087 = vmax.f32 %v2069, 0.0
      %v2088 = vmax.f32 %v2071, 0.0
      %v2089 = vpack.c.bf16 %v2075, %v2073
      %v2090 = vpack.c.bf16 %v2076, %v2074
      %v2091 = vpack.c.bf16 %v2079, %v2077
      %v2092 = vpack.c.bf16 %v2080, %v2078
      %v2093 = vpack.c.bf16 %v2083, %v2081
      %v2094 = vpack.c.bf16 %v2084, %v2082
      %v2095 = vpack.c.bf16 %v2087, %v2085
      %v2096 = vpack.c.bf16 %v2088, %v2086
      %2097 = vmatprep.subr.bf16.mxu0 %v2090
      %2098 = vmatpush1.bf16.msra.mxu0 %v2089
      %2099 = vmatprep.subr.bf16.mxu0 %v2092
      %2100 = vmatpush1.bf16.msra.mxu0 %v2091
      %2101 = vmatprep.subr.bf16.mxu0 %v2094
      %2102 = vmatpush1.bf16.msra.mxu0 %v2093
      %2103 = vmatprep.subr.bf16.mxu0 %v2096
      %2104 = vmatpush1.bf16.msra.mxu0 %v2095
      %2105 = vmatprep.subr.bf16.mxu0 0
      %2106 = vmatpush1.bf16.msra.mxu0 0
      %2107 = vmatprep.subr.bf16.mxu0 0
      %2108 = vmatpush1.bf16.msra.mxu0 0
      %2109 = vmatprep.subr.bf16.mxu0 0
      %2110 = vmatpush1.bf16.msra.mxu0 0
      %2111 = vmatprep.subr.bf16.mxu0 0
      %2112 = vmatpush1.bf16.msra.mxu0 0
      %2113 = vmatprep.subr.bf16.mxu0 0
      %2114 = vmatpush1.bf16.msra.mxu0 0
      %2115 = vmatprep.subr.bf16.mxu0 0
      %2116 = vmatpush1.bf16.msra.mxu0 0
      %2117 = vmatprep.subr.bf16.mxu0 0
      %2118 = vmatpush1.bf16.msra.mxu0 0
      %2119 = vmatprep.subr.bf16.mxu0 0
      %2120 = vmatpush1.bf16.msra.mxu0 0
      %2121 = vmatprep.subr.bf16.mxu0 0
      %2122 = vmatpush1.bf16.msra.mxu0 0
      %2123 = vmatprep.subr.bf16.mxu0 0
      %2124 = vmatpush1.bf16.msra.mxu0 0
      %2125 = vmatprep.subr.bf16.mxu0 0
      %2126 = vmatpush1.bf16.msra.mxu0 0
      %2127 = vmatprep.subr.bf16.mxu0 0
      %2128 = vmatpush1.bf16.msra.mxu0 0
      %2129 = vmatprep.mubr.bf16.mxu0 0
      %2130 = vmatmul.mubr.bf16.gmra.mrb[0].mxu0 %v796
      %v2131 = vpop.f32.mrb[0].mxu0
      %v2132 = vadd.f32 %v677, %v2131
      %v2133 = vpop.f32.mrb[0].mxu0
      %v2134 = vadd.f32 %v677, %v2133
      %v2135 = vpop.f32.mrb[0].mxu0
      %v2136 = vadd.f32 %v682, %v2135
      %v2137 = vpop.f32.mrb[0].mxu0
      %v2138 = vadd.f32 %v682, %v2137
      %2139 = vmatprep.mubr.bf16.mxu0 0
      %2140 = vmatmul.mubr.bf16.gmra.mrb[0].mxu0 %v799
      %v2141 = vpop.f32.mrb[0].mxu0
      %v2142 = vadd.f32 %v687, %v2141
      %v2143 = vpop.f32.mrb[0].mxu0
      %v2144 = vadd.f32 %v687, %v2143
      %v2145 = vpop.f32.mrb[0].mxu0
      %v2146 = vadd.f32 %v692, %v2145
      %v2147 = vpop.f32.mrb[0].mxu0
      %v2148 = vadd.f32 %v692, %v2147
      %2149 = vmatprep.mubr.bf16.mxu0 0
      %2150 = vmatmul.mubr.bf16.gmra.mrb[0].mxu0 %v802
      %v2151 = vpop.f32.mrb[0].mxu0
      %v2152 = vadd.f32 %v697, %v2151
      %v2153 = vpop.f32.mrb[0].mxu0
      %v2154 = vadd.f32 %v697, %v2153
      %v2155 = vpop.f32.mrb[0].mxu0
      %v2156 = vadd.f32 %v702, %v2155
      %v2157 = vpop.f32.mrb[0].mxu0
      %v2158 = vadd.f32 %v702, %v2157
      %2159 = vmatprep.mubr.bf16.mxu0 0
      %2160 = vmatmul.mubr.bf16.gmra.mrb[0].mxu0 %v805
      %v2161 = vpop.f32.mrb[0].mxu0
      %v2162 = vadd.f32 %v707, %v2161
      %v2163 = vpop.f32.mrb[0].mxu0
      %v2164 = vadd.f32 %v707, %v2163
      %v2165 = vpop.f32.mrb[0].mxu0
      %v2166 = vadd.f32 %v712, %v2165
      %v2167 = vpop.f32.mrb[0].mxu0
      %v2168 = vadd.f32 %v712, %v2167
      %2169 = vmatprep.mubr.bf16.mxu0 0
      %2170 = vmatmul.mubr.bf16.gmra.mrb[0].mxu0 %v808
      %v2171 = vpop.f32.mrb[0].mxu0
      %v2172 = vadd.f32 %v717, %v2171
      %v2173 = vpop.f32.mrb[0].mxu0
      %v2174 = vadd.f32 %v717, %v2173
      %v2175 = vpop.f32.mrb[0].mxu0
      %v2176 = vadd.f32 %v722, %v2175
      %v2177 = vpop.f32.mrb[0].mxu0
      %v2178 = vadd.f32 %v722, %v2177
      %2179 = vmatprep.mubr.bf16.mxu0 0
      %2180 = vmatmul.mubr.bf16.gmra.mrb[0].mxu0 %v811
      %v2181 = vpop.f32.mrb[0].mxu0
      %v2182 = vadd.f32 %v727, %v2181
      %v2183 = vpop.f32.mrb[0].mxu0
      %v2184 = vadd.f32 %v727, %v2183
      %v2185 = vpop.f32.mrb[0].mxu0
      %v2186 = vadd.f32 %v732, %v2185
      %v2187 = vpop.f32.mrb[0].mxu0
      %v2188 = vadd.f32 %v732, %v2187
      %2189 = vmatprep.mubr.bf16.mxu0 0
      %2190 = vmatmul.mubr.bf16.gmra.mrb[0].mxu0 %v814
      %v2191 = vpop.f32.mrb[0].mxu0
      %v2192 = vadd.f32 %v737, %v2191
      %v2193 = vpop.f32.mrb[0].mxu0
      %v2194 = vadd.f32 %v737, %v2193
      %v2195 = vpop.f32.mrb[0].mxu0
      %v2196 = vadd.f32 %v742, %v2195
      %v2197 = vpop.f32.mrb[0].mxu0
      %v2198 = vadd.f32 %v742, %v2197
      %2199 = vmatprep.mubr.bf16.mxu0 0
      %2200 = vmatmul.mubr.bf16.gmra.mrb[0].mxu0 %v817
      %v2201 = vpop.f32.mrb[0].mxu0
      %v2202 = vadd.f32 %v747, %v2201
      %v2203 = vpop.f32.mrb[0].mxu0
      %v2204 = vadd.f32 %v747, %v2203
      %v2205 = vpop.f32.mrb[0].mxu0
      %v2206 = vadd.f32 %v752, %v2205
      %v2207 = vpop.f32.mrb[0].mxu0
      %v2208 = vadd.f32 %v752, %v2207
      %2209 = vdwg.mxu0
      %v2210 = vmax.f32 %v2132, 0.0
      %v2211 = vmax.f32 %v2134, 0.0
      %v2212 = vmax.f32 %v2136, 0.0
      %v2213 = vmax.f32 %v2138, 0.0
      %v2214 = vmax.f32 %v2142, 0.0
      %v2215 = vmax.f32 %v2144, 0.0
      %v2216 = vmax.f32 %v2146, 0.0
      %v2217 = vmax.f32 %v2148, 0.0
      %v2218 = vmax.f32 %v2152, 0.0
      %v2219 = vmax.f32 %v2154, 0.0
      %v2220 = vmax.f32 %v2156, 0.0
      %v2221 = vmax.f32 %v2158, 0.0
      %v2222 = vmax.f32 %v2162, 0.0
      %v2223 = vmax.f32 %v2164, 0.0
      %v2224 = vmax.f32 %v2166, 0.0
      %v2225 = vmax.f32 %v2168, 0.0
      %v2226 = vmax.f32 %v2172, 0.0
      %v2227 = vmax.f32 %v2174, 0.0
      %v2228 = vmax.f32 %v2176, 0.0
      %v2229 = vmax.f32 %v2178, 0.0
      %v2230 = vmax.f32 %v2182, 0.0
      %v2231 = vmax.f32 %v2184, 0.0
      %v2232 = vmax.f32 %v2186, 0.0
      %v2233 = vmax.f32 %v2188, 0.0
      %v2234 = vmax.f32 %v2192, 0.0
      %v2235 = vmax.f32 %v2194, 0.0
      %v2236 = vmax.f32 %v2196, 0.0
      %v2237 = vmax.f32 %v2198, 0.0
      %v2238 = vmax.f32 %v2202, 0.0
      %v2239 = vmax.f32 %v2204, 0.0
      %v2240 = vmax.f32 %v2206, 0.0
      %v2241 = vmax.f32 %v2208, 0.0
      %v2242 = vpack.c.bf16 %v2212, %v2210
      %v2243 = vpack.c.bf16 %v2213, %v2211
      %v2244 = vpack.c.bf16 %v2216, %v2214
      %v2245 = vpack.c.bf16 %v2217, %v2215
      %v2246 = vpack.c.bf16 %v2220, %v2218
      %v2247 = vpack.c.bf16 %v2221, %v2219
      %v2248 = vpack.c.bf16 %v2224, %v2222
      %v2249 = vpack.c.bf16 %v2225, %v2223
      %v2250 = vpack.c.bf16 %v2228, %v2226
      %v2251 = vpack.c.bf16 %v2229, %v2227
      %v2252 = vpack.c.bf16 %v2232, %v2230
      %v2253 = vpack.c.bf16 %v2233, %v2231
      %v2254 = vpack.c.bf16 %v2236, %v2234
      %v2255 = vpack.c.bf16 %v2237, %v2235
      %v2256 = vpack.c.bf16 %v2240, %v2238
      %v2257 = vpack.c.bf16 %v2241, %v2239
      %2258 = vmatprep.subr.bf16.mxu0 %v2243
      %2259 = vmatpush1.bf16.msra.mxu0 %v2242
      %2260 = vmatprep.subr.bf16.mxu0 %v2245
      %2261 = vmatpush1.bf16.msra.mxu0 %v2244
      %2262 = vmatprep.subr.bf16.mxu0 %v2247
      %2263 = vmatpush1.bf16.msra.mxu0 %v2246
      %2264 = vmatprep.subr.bf16.mxu0 %v2249
      %2265 = vmatpush1.bf16.msra.mxu0 %v2248
      %2266 = vmatprep.subr.bf16.mxu0 %v2251
      %2267 = vmatpush1.bf16.msra.mxu0 %v2250
      %2268 = vmatprep.subr.bf16.mxu0 %v2253
      %2269 = vmatpush1.bf16.msra.mxu0 %v2252
      %2270 = vmatprep.subr.bf16.mxu0 %v2255
      %2271 = vmatpush1.bf16.msra.mxu0 %v2254
      %2272 = vmatprep.subr.bf16.mxu0 %v2257
      %2273 = vmatpush1.bf16.msra.mxu0 %v2256
      %2274 = vmatprep.subr.bf16.mxu0 0
      %2275 = vmatpush1.bf16.msra.mxu0 0
      %2276 = vmatprep.subr.bf16.mxu0 0
      %2277 = vmatpush1.bf16.msra.mxu0 0
      %2278 = vmatprep.subr.bf16.mxu0 0
      %2279 = vmatpush1.bf16.msra.mxu0 0
      %2280 = vmatprep.subr.bf16.mxu0 0
      %2281 = vmatpush1.bf16.msra.mxu0 0
      %2282 = vmatprep.subr.bf16.mxu0 0
      %2283 = vmatpush1.bf16.msra.mxu0 0
      %2284 = vmatprep.subr.bf16.mxu0 0
      %2285 = vmatpush1.bf16.msra.mxu0 0
      %2286 = vmatprep.subr.bf16.mxu0 0
      %2287 = vmatpush1.bf16.msra.mxu0 0
      %2288 = vmatprep.subr.bf16.mxu0 0
      %2289 = vmatpush1.bf16.msra.mxu0 0
      %2290 = vmatprep.mubr.bf16.mxu0 0
      %2291 = vmatmul.mubr.bf16.gmra.mrb[0].mxu0 %v1124
      %v2292 = vpop.f32.mrb[0].mxu0
      %v2293 = vadd.f32 %v1015, %v2292
      %v2294 = vpop.f32.mrb[0].mxu0
      %v2295 = vadd.f32 %v1015, %v2294
      %v2296 = vpop.f32.mrb[0].mxu0
      %v2297 = vadd.f32 %v1020, %v2296
      %v2298 = vpop.f32.mrb[0].mxu0
      %v2299 = vadd.f32 %v1020, %v2298
      %2300 = vmatprep.mubr.bf16.mxu0 0
      %2301 = vmatmul.mubr.bf16.gmra.mrb[0].mxu0 %v1125
      %v2302 = vpop.f32.mrb[0].mxu0
      %v2303 = vadd.f32 %v1025, %v2302
      %v2304 = vpop.f32.mrb[0].mxu0
      %v2305 = vadd.f32 %v1025, %v2304
      %v2306 = vpop.f32.mrb[0].mxu0
      %v2307 = vadd.f32 %v1030, %v2306
      %v2308 = vpop.f32.mrb[0].mxu0
      %v2309 = vadd.f32 %v1030, %v2308
      %2310 = vmatprep.mubr.bf16.mxu0 0
      %2311 = vmatmul.mubr.bf16.gmra.mrb[0].mxu0 %v1126
      %v2312 = vpop.f32.mrb[0].mxu0
      %v2313 = vadd.f32 %v1035, %v2312
      %v2314 = vpop.f32.mrb[0].mxu0
      %v2315 = vadd.f32 %v1035, %v2314
      %v2316 = vpop.f32.mrb[0].mxu0
      %v2317 = vadd.f32 %v1040, %v2316
      %v2318 = vpop.f32.mrb[0].mxu0
      %v2319 = vadd.f32 %v1040, %v2318
      %2320 = vmatprep.mubr.bf16.mxu0 0
      %2321 = vmatmul.mubr.bf16.gmra.mrb[0].mxu0 %v1127
      %v2322 = vpop.f32.mrb[0].mxu0
      %v2323 = vadd.f32 %v1045, %v2322
      %v2324 = vpop.f32.mrb[0].mxu0
      %v2325 = vadd.f32 %v1045, %v2324
      %v2326 = vpop.f32.mrb[0].mxu0
      %v2327 = vadd.f32 %v1050, %v2326
      %v2328 = vpop.f32.mrb[0].mxu0
      %v2329 = vadd.f32 %v1050, %v2328
      %2330 = vmatprep.mubr.bf16.mxu0 0
      %2331 = vmatmul.mubr.bf16.gmra.mrb[0].mxu0 %v1128
      %v2332 = vpop.f32.mrb[0].mxu0
      %v2333 = vadd.f32 %v1055, %v2332
      %v2334 = vpop.f32.mrb[0].mxu0
      %v2335 = vadd.f32 %v1055, %v2334
      %v2336 = vpop.f32.mrb[0].mxu0
      %v2337 = vadd.f32 %v1060, %v2336
      %v2338 = vpop.f32.mrb[0].mxu0
      %v2339 = vadd.f32 %v1060, %v2338
      %2340 = vmatprep.mubr.bf16.mxu0 0
      %2341 = vmatmul.mubr.bf16.gmra.mrb[0].mxu0 %v1129
      %v2342 = vpop.f32.mrb[0].mxu0
      %v2343 = vadd.f32 %v1065, %v2342
      %v2344 = vpop.f32.mrb[0].mxu0
      %v2345 = vadd.f32 %v1065, %v2344
      %v2346 = vpop.f32.mrb[0].mxu0
      %v2347 = vadd.f32 %v1070, %v2346
      %v2348 = vpop.f32.mrb[0].mxu0
      %v2349 = vadd.f32 %v1070, %v2348
      %2350 = vmatprep.mubr.bf16.mxu0 0
      %2351 = vmatmul.mubr.bf16.gmra.mrb[0].mxu0 %v1130
      %v2352 = vpop.f32.mrb[0].mxu0
      %v2353 = vadd.f32 %v1075, %v2352
      %v2354 = vpop.f32.mrb[0].mxu0
      %v2355 = vadd.f32 %v1075, %v2354
      %v2356 = vpop.f32.mrb[0].mxu0
      %v2357 = vadd.f32 %v1080, %v2356
      %v2358 = vpop.f32.mrb[0].mxu0
      %v2359 = vadd.f32 %v1080, %v2358
      %2360 = vmatprep.mubr.bf16.mxu0 0
      %2361 = vmatmul.mubr.bf16.gmra.mrb[0].mxu0 %v1131
      %v2362 = vpop.f32.mrb[0].mxu0
      %v2363 = vadd.f32 %v1085, %v2362
      %v2364 = vpop.f32.mrb[0].mxu0
      %v2365 = vadd.f32 %v1085, %v2364
      %v2366 = vpop.f32.mrb[0].mxu0
      %v2367 = vadd.f32 %v1090, %v2366
      %v2368 = vpop.f32.mrb[0].mxu0
      %v2369 = vadd.f32 %v1090, %v2368
      %2370 = vdwg.mxu0
      %v2371 = vmax.f32 %v2293, 0.0
      %v2372 = vmax.f32 %v2295, 0.0
      %v2373 = vmax.f32 %v2297, 0.0
      %v2374 = vmax.f32 %v2299, 0.0
      %v2375 = vmax.f32 %v2303, 0.0
      %v2376 = vmax.f32 %v2305, 0.0
      %v2377 = vmax.f32 %v2307, 0.0
      %v2378 = vmax.f32 %v2309, 0.0
      %v2379 = vmax.f32 %v2313, 0.0
      %v2380 = vmax.f32 %v2315, 0.0
      %v2381 = vmax.f32 %v2317, 0.0
      %v2382 = vmax.f32 %v2319, 0.0
      %v2383 = vmax.f32 %v2323, 0.0
      %v2384 = vmax.f32 %v2325, 0.0
      %v2385 = vmax.f32 %v2327, 0.0
      %v2386 = vmax.f32 %v2329, 0.0
      %v2387 = vmax.f32 %v2333, 0.0
      %v2388 = vmax.f32 %v2335, 0.0
      %v2389 = vmax.f32 %v2337, 0.0
      %v2390 = vmax.f32 %v2339, 0.0
      %v2391 = vmax.f32 %v2343, 0.0
      %v2392 = vmax.f32 %v2345, 0.0
      %v2393 = vmax.f32 %v2347, 0.0
      %v2394 = vmax.f32 %v2349, 0.0
      %v2395 = vmax.f32 %v2353, 0.0
      %v2396 = vmax.f32 %v2355, 0.0
      %v2397 = vmax.f32 %v2357, 0.0
      %v2398 = vmax.f32 %v2359, 0.0
      %v2399 = vmax.f32 %v2363, 0.0
      %v2400 = vmax.f32 %v2365, 0.0
      %v2401 = vmax.f32 %v2367, 0.0
      %v2402 = vmax.f32 %v2369, 0.0
      %v2403 = vpack.c.bf16 %v2373, %v2371
      %v2404 = vpack.c.bf16 %v2374, %v2372
      %v2405 = vpack.c.bf16 %v2377, %v2375
      %v2406 = vpack.c.bf16 %v2378, %v2376
      %v2407 = vpack.c.bf16 %v2381, %v2379
      %v2408 = vpack.c.bf16 %v2382, %v2380
      %v2409 = vpack.c.bf16 %v2385, %v2383
      %v2410 = vpack.c.bf16 %v2386, %v2384
      %v2411 = vpack.c.bf16 %v2389, %v2387
      %v2412 = vpack.c.bf16 %v2390, %v2388
      %v2413 = vpack.c.bf16 %v2393, %v2391
      %v2414 = vpack.c.bf16 %v2394, %v2392
      %v2415 = vpack.c.bf16 %v2397, %v2395
      %v2416 = vpack.c.bf16 %v2398, %v2396
      %v2417 = vpack.c.bf16 %v2401, %v2399
      %v2418 = vpack.c.bf16 %v2402, %v2400
      %2419 = vmatprep.subr.bf16.mxu0 %v2404
      %2420 = vmatpush1.bf16.msra.mxu0 %v2403
      %2421 = vmatprep.subr.bf16.mxu0 %v2406
      %2422 = vmatpush1.bf16.msra.mxu0 %v2405
      %2423 = vmatprep.subr.bf16.mxu0 %v2408
      %2424 = vmatpush1.bf16.msra.mxu0 %v2407
      %2425 = vmatprep.subr.bf16.mxu0 %v2410
      %2426 = vmatpush1.bf16.msra.mxu0 %v2409
      %2427 = vmatprep.subr.bf16.mxu0 %v2412
      %2428 = vmatpush1.bf16.msra.mxu0 %v2411
      %2429 = vmatprep.subr.bf16.mxu0 %v2414
      %2430 = vmatpush1.bf16.msra.mxu0 %v2413
      %2431 = vmatprep.subr.bf16.mxu0 %v2416
      %2432 = vmatpush1.bf16.msra.mxu0 %v2415
      %2433 = vmatprep.subr.bf16.mxu0 %v2418
      %2434 = vmatpush1.bf16.msra.mxu0 %v2417
      %2435 = vmatprep.subr.bf16.mxu0 0
      %2436 = vmatpush1.bf16.msra.mxu0 0
      %2437 = vmatprep.subr.bf16.mxu0 0
      %2438 = vmatpush1.bf16.msra.mxu0 0
      %2439 = vmatprep.subr.bf16.mxu0 0
      %2440 = vmatpush1.bf16.msra.mxu0 0
      %2441 = vmatprep.subr.bf16.mxu0 0
      %2442 = vmatpush1.bf16.msra.mxu0 0
      %2443 = vmatprep.subr.bf16.mxu0 0
      %2444 = vmatpush1.bf16.msra.mxu0 0
      %2445 = vmatprep.subr.bf16.mxu0 0
      %2446 = vmatpush1.bf16.msra.mxu0 0
      %2447 = vmatprep.subr.bf16.mxu0 0
      %2448 = vmatpush1.bf16.msra.mxu0 0
      %2449 = vmatprep.subr.bf16.mxu0 0
      %2450 = vmatpush1.bf16.msra.mxu0 0
      %2451 = vmatprep.mubr.bf16.mxu0 0
      %2452 = vmatmul.mubr.bf16.gmra.mrb[0].mxu0 %v1589
      %v2453 = vpop.f32.mrb[0].mxu0
      %v2454 = vadd.f32 %v1368, %v2453
      %v2455 = vpop.f32.mrb[0].mxu0
      %v2456 = vadd.f32 %v1368, %v2455
      %v2457 = vpop.f32.mrb[0].mxu0
      %v2458 = vadd.f32 %v1373, %v2457
      %v2459 = vpop.f32.mrb[0].mxu0
      %v2460 = vadd.f32 %v1373, %v2459
      %2461 = vmatprep.mubr.bf16.mxu0 0
      %2462 = vmatmul.mubr.bf16.gmra.mrb[0].mxu0 %v1590
      %v2463 = vpop.f32.mrb[0].mxu0
      %v2464 = vadd.f32 %v1378, %v2463
      %v2465 = vpop.f32.mrb[0].mxu0
      %v2466 = vadd.f32 %v1378, %v2465
      %v2467 = vpop.f32.mrb[0].mxu0
      %v2468 = vadd.f32 %v1383, %v2467
      %v2469 = vpop.f32.mrb[0].mxu0
      %v2470 = vadd.f32 %v1383, %v2469
      %2471 = vmatprep.mubr.bf16.mxu0 0
      %2472 = vmatmul.mubr.bf16.gmra.mrb[0].mxu0 %v1591
      %v2473 = vpop.f32.mrb[0].mxu0
      %v2474 = vadd.f32 %v1388, %v2473
      %v2475 = vpop.f32.mrb[0].mxu0
      %v2476 = vadd.f32 %v1388, %v2475
      %v2477 = vpop.f32.mrb[0].mxu0
      %v2478 = vadd.f32 %v1393, %v2477
      %v2479 = vpop.f32.mrb[0].mxu0
      %v2480 = vadd.f32 %v1393, %v2479
      %2481 = vmatprep.mubr.bf16.mxu0 0
      %2482 = vmatmul.mubr.bf16.gmra.mrb[0].mxu0 %v1592
      %v2483 = vpop.f32.mrb[0].mxu0
      %v2484 = vadd.f32 %v1398, %v2483
      %v2485 = vpop.f32.mrb[0].mxu0
      %v2486 = vadd.f32 %v1398, %v2485
      %v2487 = vpop.f32.mrb[0].mxu0
      %v2488 = vadd.f32 %v1403, %v2487
      %v2489 = vpop.f32.mrb[0].mxu0
      %v2490 = vadd.f32 %v1403, %v2489
      %2491 = vmatprep.mubr.bf16.mxu0 0
      %2492 = vmatmul.mubr.bf16.gmra.mrb[0].mxu0 %v1593
      %v2493 = vpop.f32.mrb[0].mxu0
      %v2494 = vadd.f32 %v1408, %v2493
      %v2495 = vpop.f32.mrb[0].mxu0
      %v2496 = vadd.f32 %v1408, %v2495
      %v2497 = vpop.f32.mrb[0].mxu0
      %v2498 = vadd.f32 %v1413, %v2497
      %v2499 = vpop.f32.mrb[0].mxu0
      %v2500 = vadd.f32 %v1413, %v2499
      %2501 = vmatprep.mubr.bf16.mxu0 0
      %2502 = vmatmul.mubr.bf16.gmra.mrb[0].mxu0 %v1594
      %v2503 = vpop.f32.mrb[0].mxu0
      %v2504 = vadd.f32 %v1418, %v2503
      %v2505 = vpop.f32.mrb[0].mxu0
      %v2506 = vadd.f32 %v1418, %v2505
      %v2507 = vpop.f32.mrb[0].mxu0
      %v2508 = vadd.f32 %v1423, %v2507
      %v2509 = vpop.f32.mrb[0].mxu0
      %v2510 = vadd.f32 %v1423, %v2509
      %2511 = vmatprep.mubr.bf16.mxu0 0
      %2512 = vmatmul.mubr.bf16.gmra.mrb[0].mxu0 %v1595
      %v2513 = vpop.f32.mrb[0].mxu0
      %v2514 = vadd.f32 %v1428, %v2513
      %v2515 = vpop.f32.mrb[0].mxu0
      %v2516 = vadd.f32 %v1428, %v2515
      %v2517 = vpop.f32.mrb[0].mxu0
      %v2518 = vadd.f32 %v1433, %v2517
      %v2519 = vpop.f32.mrb[0].mxu0
      %v2520 = vadd.f32 %v1433, %v2519
      %2521 = vmatprep.mubr.bf16.mxu0 0
      %2522 = vmatmul.mubr.bf16.gmra.mrb[0].mxu0 %v1596
      %v2523 = vpop.f32.mrb[0].mxu0
      %v2524 = vadd.f32 %v1438, %v2523
      %v2525 = vpop.f32.mrb[0].mxu0
      %v2526 = vadd.f32 %v1438, %v2525
      %v2527 = vpop.f32.mrb[0].mxu0
      %v2528 = vadd.f32 %v1443, %v2527
      %v2529 = vpop.f32.mrb[0].mxu0
      %v2530 = vadd.f32 %v1443, %v2529
      %2531 = vmatprep.mubr.bf16.mxu0 0
      %2532 = vmatmul.mubr.bf16.gmra.mrb[0].mxu0 %v1597
      %v2533 = vpop.f32.mrb[0].mxu0
      %v2534 = vadd.f32 %v1448, %v2533
      %v2535 = vpop.f32.mrb[0].mxu0
      %v2536 = vadd.f32 %v1448, %v2535
      %v2537 = vpop.f32.mrb[0].mxu0
      %v2538 = vadd.f32 %v1453, %v2537
      %v2539 = vpop.f32.mrb[0].mxu0
      %v2540 = vadd.f32 %v1453, %v2539
      %2541 = vmatprep.mubr.bf16.mxu0 0
      %2542 = vmatmul.mubr.bf16.gmra.mrb[0].mxu0 %v1598
      %v2543 = vpop.f32.mrb[0].mxu0
      %v2544 = vadd.f32 %v1458, %v2543
      %v2545 = vpop.f32.mrb[0].mxu0
      %v2546 = vadd.f32 %v1458, %v2545
      %v2547 = vpop.f32.mrb[0].mxu0
      %v2548 = vadd.f32 %v1463, %v2547
      %v2549 = vpop.f32.mrb[0].mxu0
      %v2550 = vadd.f32 %v1463, %v2549
      %2551 = vmatprep.mubr.bf16.mxu0 0
      %2552 = vmatmul.mubr.bf16.gmra.mrb[0].mxu0 %v1599
      %v2553 = vpop.f32.mrb[0].mxu0
      %v2554 = vadd.f32 %v1468, %v2553
      %v2555 = vpop.f32.mrb[0].mxu0
      %v2556 = vadd.f32 %v1468, %v2555
      %v2557 = vpop.f32.mrb[0].mxu0
      %v2558 = vadd.f32 %v1473, %v2557
      %v2559 = vpop.f32.mrb[0].mxu0
      %v2560 = vadd.f32 %v1473, %v2559
      %2561 = vmatprep.mubr.bf16.mxu0 0
      %2562 = vmatmul.mubr.bf16.gmra.mrb[0].mxu0 %v1600
      %v2563 = vpop.f32.mrb[0].mxu0
      %v2564 = vadd.f32 %v1478, %v2563
      %v2565 = vpop.f32.mrb[0].mxu0
      %v2566 = vadd.f32 %v1478, %v2565
      %v2567 = vpop.f32.mrb[0].mxu0
      %v2568 = vadd.f32 %v1483, %v2567
      %v2569 = vpop.f32.mrb[0].mxu0
      %v2570 = vadd.f32 %v1483, %v2569
      %2571 = vmatprep.mubr.bf16.mxu0 0
      %2572 = vmatmul.mubr.bf16.gmra.mrb[0].mxu0 %v1601
      %v2573 = vpop.f32.mrb[0].mxu0
      %v2574 = vadd.f32 %v1488, %v2573
      %v2575 = vpop.f32.mrb[0].mxu0
      %v2576 = vadd.f32 %v1488, %v2575
      %v2577 = vpop.f32.mrb[0].mxu0
      %v2578 = vadd.f32 %v1493, %v2577
      %v2579 = vpop.f32.mrb[0].mxu0
      %v2580 = vadd.f32 %v1493, %v2579
      %2581 = vmatprep.mubr.bf16.mxu0 0
      %2582 = vmatmul.mubr.bf16.gmra.mrb[0].mxu0 %v1602
      %v2583 = vpop.f32.mrb[0].mxu0
      %v2584 = vadd.f32 %v1498, %v2583
      %v2585 = vpop.f32.mrb[0].mxu0
      %v2586 = vadd.f32 %v1498, %v2585
      %v2587 = vpop.f32.mrb[0].mxu0
      %v2588 = vadd.f32 %v1503, %v2587
      %v2589 = vpop.f32.mrb[0].mxu0
      %v2590 = vadd.f32 %v1503, %v2589
      %2591 = vmatprep.mubr.bf16.mxu0 0
      %2592 = vmatmul.mubr.bf16.gmra.mrb[0].mxu0 %v1603
      %v2593 = vpop.f32.mrb[0].mxu0
      %v2594 = vadd.f32 %v1508, %v2593
      %v2595 = vpop.f32.mrb[0].mxu0
      %v2596 = vadd.f32 %v1508, %v2595
      %v2597 = vpop.f32.mrb[0].mxu0
      %v2598 = vadd.f32 %v1513, %v2597
      %v2599 = vpop.f32.mrb[0].mxu0
      %v2600 = vadd.f32 %v1513, %v2599
      %2601 = vmatprep.mubr.bf16.mxu0 0
      %2602 = vmatmul.mubr.bf16.gmra.mrb[0].mxu0 %v1604
      %v2603 = vpop.f32.mrb[0].mxu0
      %v2604 = vadd.f32 %v1518, %v2603
      %v2605 = vpop.f32.mrb[0].mxu0
      %v2606 = vadd.f32 %v1518, %v2605
      %v2607 = vpop.f32.mrb[0].mxu0
      %v2608 = vadd.f32 %v1523, %v2607
      %v2609 = vpop.f32.mrb[0].mxu0
      %v2610 = vadd.f32 %v1523, %v2609
      %2611 = vdwg.mxu0
      %v2612 = vmax.f32 %v2454, 0.0
      %v2613 = vmax.f32 %v2456, 0.0
      %v2614 = vmax.f32 %v2458, 0.0
      %v2615 = vmax.f32 %v2460, 0.0
      %v2616 = vmax.f32 %v2464, 0.0
      %v2617 = vmax.f32 %v2466, 0.0
      %v2618 = vmax.f32 %v2468, 0.0
      %v2619 = vmax.f32 %v2470, 0.0
      %v2620 = vmax.f32 %v2474, 0.0
      %v2621 = vmax.f32 %v2476, 0.0
      %v2622 = vmax.f32 %v2478, 0.0
      %v2623 = vmax.f32 %v2480, 0.0
      %v2624 = vmax.f32 %v2484, 0.0
      %v2625 = vmax.f32 %v2486, 0.0
      %v2626 = vmax.f32 %v2488, 0.0
      %v2627 = vmax.f32 %v2490, 0.0
      %v2628 = vmax.f32 %v2494, 0.0
      %v2629 = vmax.f32 %v2496, 0.0
      %v2630 = vmax.f32 %v2498, 0.0
      %v2631 = vmax.f32 %v2500, 0.0
      %v2632 = vmax.f32 %v2504, 0.0
      %v2633 = vmax.f32 %v2506, 0.0
      %v2634 = vmax.f32 %v2508, 0.0
      %v2635 = vmax.f32 %v2510, 0.0
      %v2636 = vmax.f32 %v2514, 0.0
      %v2637 = vmax.f32 %v2516, 0.0
      %v2638 = vmax.f32 %v2518, 0.0
      %v2639 = vmax.f32 %v2520, 0.0
      %v2640 = vmax.f32 %v2524, 0.0
      %v2641 = vmax.f32 %v2526, 0.0
      %v2642 = vmax.f32 %v2528, 0.0
      %v2643 = vmax.f32 %v2530, 0.0
      %v2644 = vmax.f32 %v2534, 0.0
      %v2645 = vmax.f32 %v2536, 0.0
      %v2646 = vmax.f32 %v2538, 0.0
      %v2647 = vmax.f32 %v2540, 0.0
      %v2648 = vmax.f32 %v2544, 0.0
      %v2649 = vmax.f32 %v2546, 0.0
      %v2650 = vmax.f32 %v2548, 0.0
      %v2651 = vmax.f32 %v2550, 0.0
      %v2652 = vmax.f32 %v2554, 0.0
      %v2653 = vmax.f32 %v2556, 0.0
      %v2654 = vmax.f32 %v2558, 0.0
      %v2655 = vmax.f32 %v2560, 0.0
      %v2656 = vmax.f32 %v2564, 0.0
      %v2657 = vmax.f32 %v2566, 0.0
      %v2658 = vmax.f32 %v2568, 0.0
      %v2659 = vmax.f32 %v2570, 0.0
      %v2660 = vmax.f32 %v2574, 0.0
      %v2661 = vmax.f32 %v2576, 0.0
      %v2662 = vmax.f32 %v2578, 0.0
      %v2663 = vmax.f32 %v2580, 0.0
      %v2664 = vmax.f32 %v2584, 0.0
      %v2665 = vmax.f32 %v2586, 0.0
      %v2666 = vmax.f32 %v2588, 0.0
      %v2667 = vmax.f32 %v2590, 0.0
      %v2668 = vmax.f32 %v2594, 0.0
      %v2669 = vmax.f32 %v2596, 0.0
      %v2670 = vmax.f32 %v2598, 0.0
      %v2671 = vmax.f32 %v2600, 0.0
      %v2672 = vmax.f32 %v2604, 0.0
      %v2673 = vmax.f32 %v2606, 0.0
      %v2674 = vmax.f32 %v2608, 0.0
      %v2675 = vmax.f32 %v2610, 0.0
      %v2676 = vpack.c.bf16 %v2614, %v2612
      %v2677 = vpack.c.bf16 %v2615, %v2613
      %v2678 = vpack.c.bf16 %v2618, %v2616
      %v2679 = vpack.c.bf16 %v2619, %v2617
      %v2680 = vpack.c.bf16 %v2622, %v2620
      %v2681 = vpack.c.bf16 %v2623, %v2621
      %v2682 = vpack.c.bf16 %v2626, %v2624
      %v2683 = vpack.c.bf16 %v2627, %v2625
      %v2684 = vpack.c.bf16 %v2630, %v2628
      %v2685 = vpack.c.bf16 %v2631, %v2629
      %v2686 = vpack.c.bf16 %v2634, %v2632
      %v2687 = vpack.c.bf16 %v2635, %v2633
      %v2688 = vpack.c.bf16 %v2638, %v2636
      %v2689 = vpack.c.bf16 %v2639, %v2637
      %v2690 = vpack.c.bf16 %v2642, %v2640
      %v2691 = vpack.c.bf16 %v2643, %v2641
      %v2692 = vpack.c.bf16 %v2646, %v2644
      %v2693 = vpack.c.bf16 %v2647, %v2645
      %v2694 = vpack.c.bf16 %v2650, %v2648
      %v2695 = vpack.c.bf16 %v2651, %v2649
      %v2696 = vpack.c.bf16 %v2654, %v2652
      %v2697 = vpack.c.bf16 %v2655, %v2653
      %v2698 = vpack.c.bf16 %v2658, %v2656
      %v2699 = vpack.c.bf16 %v2659, %v2657
      %v2700 = vpack.c.bf16 %v2662, %v2660
      %v2701 = vpack.c.bf16 %v2663, %v2661
      %v2702 = vpack.c.bf16 %v2666, %v2664
      %v2703 = vpack.c.bf16 %v2667, %v2665
      %v2704 = vpack.c.bf16 %v2670, %v2668
      %v2705 = vpack.c.bf16 %v2671, %v2669
      %v2706 = vpack.c.bf16 %v2674, %v2672
      %v2707 = vpack.c.bf16 %v2675, %v2673
      %2708 = vmatprep.subr.bf16.mxu0 %v2677
      %2709 = vmatpush1.bf16.msra.mxu0 %v2676
      %2710 = vmatprep.subr.bf16.mxu0 %v2679
      %2711 = vmatpush1.bf16.msra.mxu0 %v2678
      %2712 = vmatprep.subr.bf16.mxu0 %v2681
      %2713 = vmatpush1.bf16.msra.mxu0 %v2680
      %2714 = vmatprep.subr.bf16.mxu0 %v2683
      %2715 = vmatpush1.bf16.msra.mxu0 %v2682
      %2716 = vmatprep.subr.bf16.mxu0 %v2685
      %2717 = vmatpush1.bf16.msra.mxu0 %v2684
      %2718 = vmatprep.subr.bf16.mxu0 %v2687
      %2719 = vmatpush1.bf16.msra.mxu0 %v2686
      %2720 = vmatprep.subr.bf16.mxu0 %v2689
      %2721 = vmatpush1.bf16.msra.mxu0 %v2688
      %2722 = vmatprep.subr.bf16.mxu0 %v2691
      %2723 = vmatpush1.bf16.msra.mxu0 %v2690
      %2724 = vmatprep.subr.bf16.mxu0 %v2693
      %2725 = vmatpush1.bf16.msra.mxu0 %v2692
      %2726 = vmatprep.subr.bf16.mxu0 %v2695
      %2727 = vmatpush1.bf16.msra.mxu0 %v2694
      %2728 = vmatprep.subr.bf16.mxu0 %v2697
      %2729 = vmatpush1.bf16.msra.mxu0 %v2696
      %2730 = vmatprep.subr.bf16.mxu0 %v2699
      %2731 = vmatpush1.bf16.msra.mxu0 %v2698
      %2732 = vmatprep.subr.bf16.mxu0 %v2701
      %2733 = vmatpush1.bf16.msra.mxu0 %v2700
      %2734 = vmatprep.subr.bf16.mxu0 %v2703
      %2735 = vmatpush1.bf16.msra.mxu0 %v2702
      %2736 = vmatprep.subr.bf16.mxu0 %v2705
      %2737 = vmatpush1.bf16.msra.mxu0 %v2704
      %2738 = vmatprep.subr.bf16.mxu0 %v2707
      %2739 = vmatpush1.bf16.msra.mxu0 %v2706
      %2740 = vmatprep.mubr.bf16.mxu0 %v1931
      %2741 = vmatmul.mubr.bf16.gmra.mrb[0].mxu0 %v1930
      %v2742 = vpop.f32.mrb[0].mxu0
      %v2743 = vadd.f32 %v1917, %v2742
      %v2744 = vpop.f32.mrb[0].mxu0
      %v2745 = vadd.f32 %v1917, %v2744
      %v2746 = vpop.f32.mrb[0].mxu0
      %v2747 = vadd.f32 %v1922, %v2746
      %v2748 = vpop.f32.mrb[0].mxu0
      %v2749 = vadd.f32 %v1922, %v2748
      %2750 = vdwg.mxu0
      %v2751 = vmax.f32 %v2743, 0.0
      %v2752 = vmax.f32 %v2745, 0.0
      %v2753 = vmax.f32 %v2747, 0.0
      %v2754 = vmax.f32 %v2749, 0.0
      %v2755 = vmax.f32 %v2751, %v2752
      %2756 = vmax.xlane.f32.xlu0 %v2755
      %v2757 = vpop.xlane.xlu0 %2756
      %v2758 = vmax.f32 %v2753, %v2754
      %2759 = vmax.xlane.f32.xlu0 %v2758
      %v2760 = vpop.xlane.xlu0 %2759
      %v2761 = vmax.f32 %v1983, %v2757
      %v2762 = vmax.f32 %v1986, %v2760
      %s2763 = scalar_lea.vmem %s427, 16
      %v2764 = vld [vmem:[%s2763] sm:$0x77]
      %v2766 = vcombine.high %v2764, %v2764
      %v2768 = vpack.c.bf16 %v2764, %v2764
      %v2769 = vpack.c.bf16 %v2766, %v2766
      %v2771 = vand.u32 %v2768, %v538
      %v2774 = vand.u32 %v2769, %v538
      %2776 = vmatprep.subr.bf16.mxu0 %v2774
      %2777 = vmatpush1.bf16.msra.mxu0 %v2771
      %2778 = vmatprep.subr.bf16.mxu0 0
      %2779 = vmatpush1.bf16.msra.mxu0 0
      %2780 = vmatprep.subr.bf16.mxu0 0
      %2781 = vmatpush1.bf16.msra.mxu0 0
      %2782 = vmatprep.subr.bf16.mxu0 0
      %2783 = vmatpush1.bf16.msra.mxu0 0
      %2784 = vmatprep.subr.bf16.mxu0 0
      %2785 = vmatpush1.bf16.msra.mxu0 0
      %2786 = vmatprep.subr.bf16.mxu0 0
      %2787 = vmatpush1.bf16.msra.mxu0 0
      %2788 = vmatprep.subr.bf16.mxu0 0
      %2789 = vmatpush1.bf16.msra.mxu0 0
      %2790 = vmatprep.subr.bf16.mxu0 0
      %2791 = vmatpush1.bf16.msra.mxu0 0
      %2792 = vmatprep.subr.bf16.mxu0 0
      %2793 = vmatpush1.bf16.msra.mxu0 0
      %2794 = vmatprep.subr.bf16.mxu0 0
      %2795 = vmatpush1.bf16.msra.mxu0 0
      %2796 = vmatprep.subr.bf16.mxu0 0
      %2797 = vmatpush1.bf16.msra.mxu0 0
      %2798 = vmatprep.subr.bf16.mxu0 0
      %2799 = vmatpush1.bf16.msra.mxu0 0
      %2800 = vmatprep.subr.bf16.mxu0 0
      %2801 = vmatpush1.bf16.msra.mxu0 0
      %2802 = vmatprep.subr.bf16.mxu0 0
      %2803 = vmatpush1.bf16.msra.mxu0 0
      %2804 = vmatprep.subr.bf16.mxu0 0
      %2805 = vmatpush1.bf16.msra.mxu0 0
      %2806 = vmatprep.subr.bf16.mxu0 0
      %2807 = vmatpush1.bf16.msra.mxu0 0
      %2808 = vmatprep.mubr.bf16.mxu0 0
      %2809 = vmatmul.mubr.bf16.gmra.mrb[0].mxu0 %v524
      %v2810 = vpop.f32.mrb[0].mxu0
      %v2811 = vadd.f32 %v465, %v2810
      %v2812 = vpop.f32.mrb[0].mxu0
      %v2813 = vadd.f32 %v465, %v2812
      %v2814 = vpop.f32.mrb[0].mxu0
      %v2815 = vadd.f32 %v470, %v2814
      %v2816 = vpop.f32.mrb[0].mxu0
      %v2817 = vadd.f32 %v470, %v2816
      %2818 = vmatprep.mubr.bf16.mxu0 0
      %2819 = vmatmul.mubr.bf16.gmra.mrb[0].mxu0 %v527
      %v2820 = vpop.f32.mrb[0].mxu0
      %v2821 = vadd.f32 %v475, %v2820
      %v2822 = vpop.f32.mrb[0].mxu0
      %v2823 = vadd.f32 %v475, %v2822
      %v2824 = vpop.f32.mrb[0].mxu0
      %v2825 = vadd.f32 %v480, %v2824
      %v2826 = vpop.f32.mrb[0].mxu0
      %v2827 = vadd.f32 %v480, %v2826
      %2828 = vmatprep.mubr.bf16.mxu0 0
      %2829 = vmatmul.mubr.bf16.gmra.mrb[0].mxu0 %v530
      %v2830 = vpop.f32.mrb[0].mxu0
      %v2831 = vadd.f32 %v485, %v2830
      %v2832 = vpop.f32.mrb[0].mxu0
      %v2833 = vadd.f32 %v485, %v2832
      %v2834 = vpop.f32.mrb[0].mxu0
      %v2835 = vadd.f32 %v490, %v2834
      %v2836 = vpop.f32.mrb[0].mxu0
      %v2837 = vadd.f32 %v490, %v2836
      %2838 = vmatprep.mubr.bf16.mxu0 0
      %2839 = vmatmul.mubr.bf16.gmra.mrb[0].mxu0 %v533
      %v2840 = vpop.f32.mrb[0].mxu0
      %v2841 = vadd.f32 %v495, %v2840
      %v2842 = vpop.f32.mrb[0].mxu0
      %v2843 = vadd.f32 %v495, %v2842
      %v2844 = vpop.f32.mrb[0].mxu0
      %v2845 = vadd.f32 %v500, %v2844
      %v2846 = vpop.f32.mrb[0].mxu0
      %v2847 = vadd.f32 %v500, %v2846
      %2848 = vdwg.mxu0
      %v2849 = vmax.f32 %v2811, 0.0
      %v2850 = vmax.f32 %v2813, 0.0
      %v2851 = vmax.f32 %v2815, 0.0
      %v2852 = vmax.f32 %v2817, 0.0
      %v2853 = vmax.f32 %v2821, 0.0
      %v2854 = vmax.f32 %v2823, 0.0
      %v2855 = vmax.f32 %v2825, 0.0
      %v2856 = vmax.f32 %v2827, 0.0
      %v2857 = vmax.f32 %v2831, 0.0
      %v2858 = vmax.f32 %v2833, 0.0
      %v2859 = vmax.f32 %v2835, 0.0
      %v2860 = vmax.f32 %v2837, 0.0
      %v2861 = vmax.f32 %v2841, 0.0
      %v2862 = vmax.f32 %v2843, 0.0
      %v2863 = vmax.f32 %v2845, 0.0
      %v2864 = vmax.f32 %v2847, 0.0
      %v2865 = vpack.c.bf16 %v2851, %v2849
      %v2866 = vpack.c.bf16 %v2852, %v2850
      %v2867 = vpack.c.bf16 %v2855, %v2853
      %v2868 = vpack.c.bf16 %v2856, %v2854
      %v2869 = vpack.c.bf16 %v2859, %v2857
      %v2870 = vpack.c.bf16 %v2860, %v2858
      %v2871 = vpack.c.bf16 %v2863, %v2861
      %v2872 = vpack.c.bf16 %v2864, %v2862
      %2873 = vmatprep.subr.bf16.mxu0 %v2866
      %2874 = vmatpush1.bf16.msra.mxu0 %v2865
      %2875 = vmatprep.subr.bf16.mxu0 %v2868
      %2876 = vmatpush1.bf16.msra.mxu0 %v2867
      %2877 = vmatprep.subr.bf16.mxu0 %v2870
      %2878 = vmatpush1.bf16.msra.mxu0 %v2869
      %2879 = vmatprep.subr.bf16.mxu0 %v2872
      %2880 = vmatpush1.bf16.msra.mxu0 %v2871
      %2881 = vmatprep.subr.bf16.mxu0 0
      %2882 = vmatpush1.bf16.msra.mxu0 0
      %2883 = vmatprep.subr.bf16.mxu0 0
      %2884 = vmatpush1.bf16.msra.mxu0 0
      %2885 = vmatprep.subr.bf16.mxu0 0
      %2886 = vmatpush1.bf16.msra.mxu0 0
      %2887 = vmatprep.subr.bf16.mxu0 0
      %2888 = vmatpush1.bf16.msra.mxu0 0
      %2889 = vmatprep.subr.bf16.mxu0 0
      %2890 = vmatpush1.bf16.msra.mxu0 0
      %2891 = vmatprep.subr.bf16.mxu0 0
      %2892 = vmatpush1.bf16.msra.mxu0 0
      %2893 = vmatprep.subr.bf16.mxu0 0
      %2894 = vmatpush1.bf16.msra.mxu0 0
      %2895 = vmatprep.subr.bf16.mxu0 0
      %2896 = vmatpush1.bf16.msra.mxu0 0
      %2897 = vmatprep.subr.bf16.mxu0 0
      %2898 = vmatpush1.bf16.msra.mxu0 0
      %2899 = vmatprep.subr.bf16.mxu0 0
      %2900 = vmatpush1.bf16.msra.mxu0 0
      %2901 = vmatprep.subr.bf16.mxu0 0
      %2902 = vmatpush1.bf16.msra.mxu0 0
      %2903 = vmatprep.subr.bf16.mxu0 0
      %2904 = vmatpush1.bf16.msra.mxu0 0
      %2905 = vmatprep.mubr.bf16.mxu0 0
      %2906 = vmatmul.mubr.bf16.gmra.mrb[0].mxu0 %v796
      %v2907 = vpop.f32.mrb[0].mxu0
      %v2908 = vadd.f32 %v677, %v2907
      %v2909 = vpop.f32.mrb[0].mxu0
      %v2910 = vadd.f32 %v677, %v2909
      %v2911 = vpop.f32.mrb[0].mxu0
      %v2912 = vadd.f32 %v682, %v2911
      %v2913 = vpop.f32.mrb[0].mxu0
      %v2914 = vadd.f32 %v682, %v2913
      %2915 = vmatprep.mubr.bf16.mxu0 0
      %2916 = vmatmul.mubr.bf16.gmra.mrb[0].mxu0 %v799
      %v2917 = vpop.f32.mrb[0].mxu0
      %v2918 = vadd.f32 %v687, %v2917
      %v2919 = vpop.f32.mrb[0].mxu0
      %v2920 = vadd.f32 %v687, %v2919
      %v2921 = vpop.f32.mrb[0].mxu0
      %v2922 = vadd.f32 %v692, %v2921
      %v2923 = vpop.f32.mrb[0].mxu0
      %v2924 = vadd.f32 %v692, %v2923
      %2925 = vmatprep.mubr.bf16.mxu0 0
      %2926 = vmatmul.mubr.bf16.gmra.mrb[0].mxu0 %v802
      %v2927 = vpop.f32.mrb[0].mxu0
      %v2928 = vadd.f32 %v697, %v2927
      %v2929 = vpop.f32.mrb[0].mxu0
      %v2930 = vadd.f32 %v697, %v2929
      %v2931 = vpop.f32.mrb[0].mxu0
      %v2932 = vadd.f32 %v702, %v2931
      %v2933 = vpop.f32.mrb[0].mxu0
      %v2934 = vadd.f32 %v702, %v2933
      %2935 = vmatprep.mubr.bf16.mxu0 0
      %2936 = vmatmul.mubr.bf16.gmra.mrb[0].mxu0 %v805
      %v2937 = vpop.f32.mrb[0].mxu0
      %v2938 = vadd.f32 %v707, %v2937
      %v2939 = vpop.f32.mrb[0].mxu0
      %v2940 = vadd.f32 %v707, %v2939
      %v2941 = vpop.f32.mrb[0].mxu0
      %v2942 = vadd.f32 %v712, %v2941
      %v2943 = vpop.f32.mrb[0].mxu0
      %v2944 = vadd.f32 %v712, %v2943
      %2945 = vmatprep.mubr.bf16.mxu0 0
      %2946 = vmatmul.mubr.bf16.gmra.mrb[0].mxu0 %v808
      %v2947 = vpop.f32.mrb[0].mxu0
      %v2948 = vadd.f32 %v717, %v2947
      %v2949 = vpop.f32.mrb[0].mxu0
      %v2950 = vadd.f32 %v717, %v2949
      %v2951 = vpop.f32.mrb[0].mxu0
      %v2952 = vadd.f32 %v722, %v2951
      %v2953 = vpop.f32.mrb[0].mxu0
      %v2954 = vadd.f32 %v722, %v2953
      %2955 = vmatprep.mubr.bf16.mxu0 0
      %2956 = vmatmul.mubr.bf16.gmra.mrb[0].mxu0 %v811
      %v2957 = vpop.f32.mrb[0].mxu0
      %v2958 = vadd.f32 %v727, %v2957
      %v2959 = vpop.f32.mrb[0].mxu0
      %v2960 = vadd.f32 %v727, %v2959
      %v2961 = vpop.f32.mrb[0].mxu0
      %v2962 = vadd.f32 %v732, %v2961
      %v2963 = vpop.f32.mrb[0].mxu0
      %v2964 = vadd.f32 %v732, %v2963
      %2965 = vmatprep.mubr.bf16.mxu0 0
      %2966 = vmatmul.mubr.bf16.gmra.mrb[0].mxu0 %v814
      %v2967 = vpop.f32.mrb[0].mxu0
      %v2968 = vadd.f32 %v737, %v2967
      %v2969 = vpop.f32.mrb[0].mxu0
      %v2970 = vadd.f32 %v737, %v2969
      %v2971 = vpop.f32.mrb[0].mxu0
      %v2972 = vadd.f32 %v742, %v2971
      %v2973 = vpop.f32.mrb[0].mxu0
      %v2974 = vadd.f32 %v742, %v2973
      %2975 = vmatprep.mubr.bf16.mxu0 0
      %2976 = vmatmul.mubr.bf16.gmra.mrb[0].mxu0 %v817
      %v2977 = vpop.f32.mrb[0].mxu0
      %v2978 = vadd.f32 %v747, %v2977
      %v2979 = vpop.f32.mrb[0].mxu0
      %v2980 = vadd.f32 %v747, %v2979
      %v2981 = vpop.f32.mrb[0].mxu0
      %v2982 = vadd.f32 %v752, %v2981
      %v2983 = vpop.f32.mrb[0].mxu0
      %v2984 = vadd.f32 %v752, %v2983
      %2985 = vdwg.mxu0
      %v2986 = vmax.f32 %v2908, 0.0
      %v2987 = vmax.f32 %v2910, 0.0
      %v2988 = vmax.f32 %v2912, 0.0
      %v2989 = vmax.f32 %v2914, 0.0
      %v2990 = vmax.f32 %v2918, 0.0
      %v2991 = vmax.f32 %v2920, 0.0
      %v2992 = vmax.f32 %v2922, 0.0
      %v2993 = vmax.f32 %v2924, 0.0
      %v2994 = vmax.f32 %v2928, 0.0
      %v2995 = vmax.f32 %v2930, 0.0
      %v2996 = vmax.f32 %v2932, 0.0
      %v2997 = vmax.f32 %v2934, 0.0
      %v2998 = vmax.f32 %v2938, 0.0
      %v2999 = vmax.f32 %v2940, 0.0
      %v3000 = vmax.f32 %v2942, 0.0
      %v3001 = vmax.f32 %v2944, 0.0
      %v3002 = vmax.f32 %v2948, 0.0
      %v3003 = vmax.f32 %v2950, 0.0
      %v3004 = vmax.f32 %v2952, 0.0
      %v3005 = vmax.f32 %v2954, 0.0
      %v3006 = vmax.f32 %v2958, 0.0
      %v3007 = vmax.f32 %v2960, 0.0
      %v3008 = vmax.f32 %v2962, 0.0
      %v3009 = vmax.f32 %v2964, 0.0
      %v3010 = vmax.f32 %v2968, 0.0
      %v3011 = vmax.f32 %v2970, 0.0
      %v3012 = vmax.f32 %v2972, 0.0
      %v3013 = vmax.f32 %v2974, 0.0
      %v3014 = vmax.f32 %v2978, 0.0
      %v3015 = vmax.f32 %v2980, 0.0
      %v3016 = vmax.f32 %v2982, 0.0
      %v3017 = vmax.f32 %v2984, 0.0
      %v3018 = vpack.c.bf16 %v2988, %v2986
      %v3019 = vpack.c.bf16 %v2989, %v2987
      %v3020 = vpack.c.bf16 %v2992, %v2990
      %v3021 = vpack.c.bf16 %v2993, %v2991
      %v3022 = vpack.c.bf16 %v2996, %v2994
      %v3023 = vpack.c.bf16 %v2997, %v2995
      %v3024 = vpack.c.bf16 %v3000, %v2998
      %v3025 = vpack.c.bf16 %v3001, %v2999
      %v3026 = vpack.c.bf16 %v3004, %v3002
      %v3027 = vpack.c.bf16 %v3005, %v3003
      %v3028 = vpack.c.bf16 %v3008, %v3006
      %v3029 = vpack.c.bf16 %v3009, %v3007
      %v3030 = vpack.c.bf16 %v3012, %v3010
      %v3031 = vpack.c.bf16 %v3013, %v3011
      %v3032 = vpack.c.bf16 %v3016, %v3014
      %v3033 = vpack.c.bf16 %v3017, %v3015
      %3034 = vmatprep.subr.bf16.mxu0 %v3019
      %3035 = vmatpush1.bf16.msra.mxu0 %v3018
      %3036 = vmatprep.subr.bf16.mxu0 %v3021
      %3037 = vmatpush1.bf16.msra.mxu0 %v3020
      %3038 = vmatprep.subr.bf16.mxu0 %v3023
      %3039 = vmatpush1.bf16.msra.mxu0 %v3022
      %3040 = vmatprep.subr.bf16.mxu0 %v3025
      %3041 = vmatpush1.bf16.msra.mxu0 %v3024
      %3042 = vmatprep.subr.bf16.mxu0 %v3027
      %3043 = vmatpush1.bf16.msra.mxu0 %v3026
      %3044 = vmatprep.subr.bf16.mxu0 %v3029
      %3045 = vmatpush1.bf16.msra.mxu0 %v3028
      %3046 = vmatprep.subr.bf16.mxu0 %v3031
      %3047 = vmatpush1.bf16.msra.mxu0 %v3030
      %3048 = vmatprep.subr.bf16.mxu0 %v3033
      %3049 = vmatpush1.bf16.msra.mxu0 %v3032
      %3050 = vmatprep.subr.bf16.mxu0 0
      %3051 = vmatpush1.bf16.msra.mxu0 0
      %3052 = vmatprep.subr.bf16.mxu0 0
      %3053 = vmatpush1.bf16.msra.mxu0 0
      %3054 = vmatprep.subr.bf16.mxu0 0
      %3055 = vmatpush1.bf16.msra.mxu0 0
      %3056 = vmatprep.subr.bf16.mxu0 0
      %3057 = vmatpush1.bf16.msra.mxu0 0
      %3058 = vmatprep.subr.bf16.mxu0 0
      %3059 = vmatpush1.bf16.msra.mxu0 0
      %3060 = vmatprep.subr.bf16.mxu0 0
      %3061 = vmatpush1.bf16.msra.mxu0 0
      %3062 = vmatprep.subr.bf16.mxu0 0
      %3063 = vmatpush1.bf16.msra.mxu0 0
      %3064 = vmatprep.subr.bf16.mxu0 0
      %3065 = vmatpush1.bf16.msra.mxu0 0
      %3066 = vmatprep.mubr.bf16.mxu0 0
      %3067 = vmatmul.mubr.bf16.gmra.mrb[0].mxu0 %v1124
      %v3068 = vpop.f32.mrb[0].mxu0
      %v3069 = vadd.f32 %v1015, %v3068
      %v3070 = vpop.f32.mrb[0].mxu0
      %v3071 = vadd.f32 %v1015, %v3070
      %v3072 = vpop.f32.mrb[0].mxu0
      %v3073 = vadd.f32 %v1020, %v3072
      %v3074 = vpop.f32.mrb[0].mxu0
      %v3075 = vadd.f32 %v1020, %v3074
      %3076 = vmatprep.mubr.bf16.mxu0 0
      %3077 = vmatmul.mubr.bf16.gmra.mrb[0].mxu0 %v1125
      %v3078 = vpop.f32.mrb[0].mxu0
      %v3079 = vadd.f32 %v1025, %v3078
      %v3080 = vpop.f32.mrb[0].mxu0
      %v3081 = vadd.f32 %v1025, %v3080
      %v3082 = vpop.f32.mrb[0].mxu0
      %v3083 = vadd.f32 %v1030, %v3082
      %v3084 = vpop.f32.mrb[0].mxu0
      %v3085 = vadd.f32 %v1030, %v3084
      %3086 = vmatprep.mubr.bf16.mxu0 0
      %3087 = vmatmul.mubr.bf16.gmra.mrb[0].mxu0 %v1126
      %v3088 = vpop.f32.mrb[0].mxu0
      %v3089 = vadd.f32 %v1035, %v3088
      %v3090 = vpop.f32.mrb[0].mxu0
      %v3091 = vadd.f32 %v1035, %v3090
      %v3092 = vpop.f32.mrb[0].mxu0
      %v3093 = vadd.f32 %v1040, %v3092
      %v3094 = vpop.f32.mrb[0].mxu0
      %v3095 = vadd.f32 %v1040, %v3094
      %3096 = vmatprep.mubr.bf16.mxu0 0
      %3097 = vmatmul.mubr.bf16.gmra.mrb[0].mxu0 %v1127
      %v3098 = vpop.f32.mrb[0].mxu0
      %v3099 = vadd.f32 %v1045, %v3098
      %v3100 = vpop.f32.mrb[0].mxu0
      %v3101 = vadd.f32 %v1045, %v3100
      %v3102 = vpop.f32.mrb[0].mxu0
      %v3103 = vadd.f32 %v1050, %v3102
      %v3104 = vpop.f32.mrb[0].mxu0
      %v3105 = vadd.f32 %v1050, %v3104
      %3106 = vmatprep.mubr.bf16.mxu0 0
      %3107 = vmatmul.mubr.bf16.gmra.mrb[0].mxu0 %v1128
      %v3108 = vpop.f32.mrb[0].mxu0
      %v3109 = vadd.f32 %v1055, %v3108
      %v3110 = vpop.f32.mrb[0].mxu0
      %v3111 = vadd.f32 %v1055, %v3110
      %v3112 = vpop.f32.mrb[0].mxu0
      %v3113 = vadd.f32 %v1060, %v3112
      %v3114 = vpop.f32.mrb[0].mxu0
      %v3115 = vadd.f32 %v1060, %v3114
      %3116 = vmatprep.mubr.bf16.mxu0 0
      %3117 = vmatmul.mubr.bf16.gmra.mrb[0].mxu0 %v1129
      %v3118 = vpop.f32.mrb[0].mxu0
      %v3119 = vadd.f32 %v1065, %v3118
      %v3120 = vpop.f32.mrb[0].mxu0
      %v3121 = vadd.f32 %v1065, %v3120
      %v3122 = vpop.f32.mrb[0].mxu0
      %v3123 = vadd.f32 %v1070, %v3122
      %v3124 = vpop.f32.mrb[0].mxu0
      %v3125 = vadd.f32 %v1070, %v3124
      %3126 = vmatprep.mubr.bf16.mxu0 0
      %3127 = vmatmul.mubr.bf16.gmra.mrb[0].mxu0 %v1130
      %v3128 = vpop.f32.mrb[0].mxu0
      %v3129 = vadd.f32 %v1075, %v3128
      %v3130 = vpop.f32.mrb[0].mxu0
      %v3131 = vadd.f32 %v1075, %v3130
      %v3132 = vpop.f32.mrb[0].mxu0
      %v3133 = vadd.f32 %v1080, %v3132
      %v3134 = vpop.f32.mrb[0].mxu0
      %v3135 = vadd.f32 %v1080, %v3134
      %3136 = vmatprep.mubr.bf16.mxu0 0
      %3137 = vmatmul.mubr.bf16.gmra.mrb[0].mxu0 %v1131
      %v3138 = vpop.f32.mrb[0].mxu0
      %v3139 = vadd.f32 %v1085, %v3138
      %v3140 = vpop.f32.mrb[0].mxu0
      %v3141 = vadd.f32 %v1085, %v3140
      %v3142 = vpop.f32.mrb[0].mxu0
      %v3143 = vadd.f32 %v1090, %v3142
      %v3144 = vpop.f32.mrb[0].mxu0
      %v3145 = vadd.f32 %v1090, %v3144
      %3146 = vdwg.mxu0
      %v3147 = vmax.f32 %v3069, 0.0
      %v3148 = vmax.f32 %v3071, 0.0
      %v3149 = vmax.f32 %v3073, 0.0
      %v3150 = vmax.f32 %v3075, 0.0
      %v3151 = vmax.f32 %v3079, 0.0
      %v3152 = vmax.f32 %v3081, 0.0
      %v3153 = vmax.f32 %v3083, 0.0
      %v3154 = vmax.f32 %v3085, 0.0
      %v3155 = vmax.f32 %v3089, 0.0
      %v3156 = vmax.f32 %v3091, 0.0
      %v3157 = vmax.f32 %v3093, 0.0
      %v3158 = vmax.f32 %v3095, 0.0
      %v3159 = vmax.f32 %v3099, 0.0
      %v3160 = vmax.f32 %v3101, 0.0
      %v3161 = vmax.f32 %v3103, 0.0
      %v3162 = vmax.f32 %v3105, 0.0
      %v3163 = vmax.f32 %v3109, 0.0
      %v3164 = vmax.f32 %v3111, 0.0
      %v3165 = vmax.f32 %v3113, 0.0
      %v3166 = vmax.f32 %v3115, 0.0
      %v3167 = vmax.f32 %v3119, 0.0
      %v3168 = vmax.f32 %v3121, 0.0
      %v3169 = vmax.f32 %v3123, 0.0
      %v3170 = vmax.f32 %v3125, 0.0
      %v3171 = vmax.f32 %v3129, 0.0
      %v3172 = vmax.f32 %v3131, 0.0
      %v3173 = vmax.f32 %v3133, 0.0
      %v3174 = vmax.f32 %v3135, 0.0
      %v3175 = vmax.f32 %v3139, 0.0
      %v3176 = vmax.f32 %v3141, 0.0
      %v3177 = vmax.f32 %v3143, 0.0
      %v3178 = vmax.f32 %v3145, 0.0
      %v3179 = vpack.c.bf16 %v3149, %v3147
      %v3180 = vpack.c.bf16 %v3150, %v3148
      %v3181 = vpack.c.bf16 %v3153, %v3151
      %v3182 = vpack.c.bf16 %v3154, %v3152
      %v3183 = vpack.c.bf16 %v3157, %v3155
      %v3184 = vpack.c.bf16 %v3158, %v3156
      %v3185 = vpack.c.bf16 %v3161, %v3159
      %v3186 = vpack.c.bf16 %v3162, %v3160
      %v3187 = vpack.c.bf16 %v3165, %v3163
      %v3188 = vpack.c.bf16 %v3166, %v3164
      %v3189 = vpack.c.bf16 %v3169, %v3167
      %v3190 = vpack.c.bf16 %v3170, %v3168
      %v3191 = vpack.c.bf16 %v3173, %v3171
      %v3192 = vpack.c.bf16 %v3174, %v3172
      %v3193 = vpack.c.bf16 %v3177, %v3175
      %v3194 = vpack.c.bf16 %v3178, %v3176
      %3195 = vmatprep.subr.bf16.mxu0 %v3180
      %3196 = vmatpush1.bf16.msra.mxu0 %v3179
      %3197 = vmatprep.subr.bf16.mxu0 %v3182
      %3198 = vmatpush1.bf16.msra.mxu0 %v3181
      %3199 = vmatprep.subr.bf16.mxu0 %v3184
      %3200 = vmatpush1.bf16.msra.mxu0 %v3183
      %3201 = vmatprep.subr.bf16.mxu0 %v3186
      %3202 = vmatpush1.bf16.msra.mxu0 %v3185
      %3203 = vmatprep.subr.bf16.mxu0 %v3188
      %3204 = vmatpush1.bf16.msra.mxu0 %v3187
      %3205 = vmatprep.subr.bf16.mxu0 %v3190
      %3206 = vmatpush1.bf16.msra.mxu0 %v3189
      %3207 = vmatprep.subr.bf16.mxu0 %v3192
      %3208 = vmatpush1.bf16.msra.mxu0 %v3191
      %3209 = vmatprep.subr.bf16.mxu0 %v3194
      %3210 = vmatpush1.bf16.msra.mxu0 %v3193
      %3211 = vmatprep.subr.bf16.mxu0 0
      %3212 = vmatpush1.bf16.msra.mxu0 0
      %3213 = vmatprep.subr.bf16.mxu0 0
      %3214 = vmatpush1.bf16.msra.mxu0 0
      %3215 = vmatprep.subr.bf16.mxu0 0
      %3216 = vmatpush1.bf16.msra.mxu0 0
      %3217 = vmatprep.subr.bf16.mxu0 0
      %3218 = vmatpush1.bf16.msra.mxu0 0
      %3219 = vmatprep.subr.bf16.mxu0 0
      %3220 = vmatpush1.bf16.msra.mxu0 0
      %3221 = vmatprep.subr.bf16.mxu0 0
      %3222 = vmatpush1.bf16.msra.mxu0 0
      %3223 = vmatprep.subr.bf16.mxu0 0
      %3224 = vmatpush1.bf16.msra.mxu0 0
      %3225 = vmatprep.subr.bf16.mxu0 0
      %3226 = vmatpush1.bf16.msra.mxu0 0
      %3227 = vmatprep.mubr.bf16.mxu0 0
      %3228 = vmatmul.mubr.bf16.gmra.mrb[0].mxu0 %v1589
      %v3229 = vpop.f32.mrb[0].mxu0
      %v3230 = vadd.f32 %v1368, %v3229
      %v3231 = vpop.f32.mrb[0].mxu0
      %v3232 = vadd.f32 %v1368, %v3231
      %v3233 = vpop.f32.mrb[0].mxu0
      %v3234 = vadd.f32 %v1373, %v3233
      %v3235 = vpop.f32.mrb[0].mxu0
      %v3236 = vadd.f32 %v1373, %v3235
      %3237 = vmatprep.mubr.bf16.mxu0 0
      %3238 = vmatmul.mubr.bf16.gmra.mrb[0].mxu0 %v1590
      %v3239 = vpop.f32.mrb[0].mxu0
      %v3240 = vadd.f32 %v1378, %v3239
      %v3241 = vpop.f32.mrb[0].mxu0
      %v3242 = vadd.f32 %v1378, %v3241
      %v3243 = vpop.f32.mrb[0].mxu0
      %v3244 = vadd.f32 %v1383, %v3243
      %v3245 = vpop.f32.mrb[0].mxu0
      %v3246 = vadd.f32 %v1383, %v3245
      %3247 = vmatprep.mubr.bf16.mxu0 0
      %3248 = vmatmul.mubr.bf16.gmra.mrb[0].mxu0 %v1591
      %v3249 = vpop.f32.mrb[0].mxu0
      %v3250 = vadd.f32 %v1388, %v3249
      %v3251 = vpop.f32.mrb[0].mxu0
      %v3252 = vadd.f32 %v1388, %v3251
      %v3253 = vpop.f32.mrb[0].mxu0
      %v3254 = vadd.f32 %v1393, %v3253
      %v3255 = vpop.f32.mrb[0].mxu0
      %v3256 = vadd.f32 %v1393, %v3255
      %3257 = vmatprep.mubr.bf16.mxu0 0
      %3258 = vmatmul.mubr.bf16.gmra.mrb[0].mxu0 %v1592
      %v3259 = vpop.f32.mrb[0].mxu0
      %v3260 = vadd.f32 %v1398, %v3259
      %v3261 = vpop.f32.mrb[0].mxu0
      %v3262 = vadd.f32 %v1398, %v3261
      %v3263 = vpop.f32.mrb[0].mxu0
      %v3264 = vadd.f32 %v1403, %v3263
      %v3265 = vpop.f32.mrb[0].mxu0
      %v3266 = vadd.f32 %v1403, %v3265
      %3267 = vmatprep.mubr.bf16.mxu0 0
      %3268 = vmatmul.mubr.bf16.gmra.mrb[0].mxu0 %v1593
      %v3269 = vpop.f32.mrb[0].mxu0
      %v3270 = vadd.f32 %v1408, %v3269
      %v3271 = vpop.f32.mrb[0].mxu0
      %v3272 = vadd.f32 %v1408, %v3271
      %v3273 = vpop.f32.mrb[0].mxu0
      %v3274 = vadd.f32 %v1413, %v3273
      %v3275 = vpop.f32.mrb[0].mxu0
      %v3276 = vadd.f32 %v1413, %v3275
      %3277 = vmatprep.mubr.bf16.mxu0 0
      %3278 = vmatmul.mubr.bf16.gmra.mrb[0].mxu0 %v1594
      %v3279 = vpop.f32.mrb[0].mxu0
      %v3280 = vadd.f32 %v1418, %v3279
      %v3281 = vpop.f32.mrb[0].mxu0
      %v3282 = vadd.f32 %v1418, %v3281
      %v3283 = vpop.f32.mrb[0].mxu0
      %v3284 = vadd.f32 %v1423, %v3283
      %v3285 = vpop.f32.mrb[0].mxu0
      %v3286 = vadd.f32 %v1423, %v3285
      %3287 = vmatprep.mubr.bf16.mxu0 0
      %3288 = vmatmul.mubr.bf16.gmra.mrb[0].mxu0 %v1595
      %v3289 = vpop.f32.mrb[0].mxu0
      %v3290 = vadd.f32 %v1428, %v3289
      %v3291 = vpop.f32.mrb[0].mxu0
      %v3292 = vadd.f32 %v1428, %v3291
      %v3293 = vpop.f32.mrb[0].mxu0
      %v3294 = vadd.f32 %v1433, %v3293
      %v3295 = vpop.f32.mrb[0].mxu0
      %v3296 = vadd.f32 %v1433, %v3295
      %3297 = vmatprep.mubr.bf16.mxu0 0
      %3298 = vmatmul.mubr.bf16.gmra.mrb[0].mxu0 %v1596
      %v3299 = vpop.f32.mrb[0].mxu0
      %v3300 = vadd.f32 %v1438, %v3299
      %v3301 = vpop.f32.mrb[0].mxu0
      %v3302 = vadd.f32 %v1438, %v3301
      %v3303 = vpop.f32.mrb[0].mxu0
      %v3304 = vadd.f32 %v1443, %v3303
      %v3305 = vpop.f32.mrb[0].mxu0
      %v3306 = vadd.f32 %v1443, %v3305
      %3307 = vmatprep.mubr.bf16.mxu0 0
      %3308 = vmatmul.mubr.bf16.gmra.mrb[0].mxu0 %v1597
      %v3309 = vpop.f32.mrb[0].mxu0
      %v3310 = vadd.f32 %v1448, %v3309
      %v3311 = vpop.f32.mrb[0].mxu0
      %v3312 = vadd.f32 %v1448, %v3311
      %v3313 = vpop.f32.mrb[0].mxu0
      %v3314 = vadd.f32 %v1453, %v3313
      %v3315 = vpop.f32.mrb[0].mxu0
      %v3316 = vadd.f32 %v1453, %v3315
      %3317 = vmatprep.mubr.bf16.mxu0 0
      %3318 = vmatmul.mubr.bf16.gmra.mrb[0].mxu0 %v1598
      %v3319 = vpop.f32.mrb[0].mxu0
      %v3320 = vadd.f32 %v1458, %v3319
      %v3321 = vpop.f32.mrb[0].mxu0
      %v3322 = vadd.f32 %v1458, %v3321
      %v3323 = vpop.f32.mrb[0].mxu0
      %v3324 = vadd.f32 %v1463, %v3323
      %v3325 = vpop.f32.mrb[0].mxu0
      %v3326 = vadd.f32 %v1463, %v3325
      %3327 = vmatprep.mubr.bf16.mxu0 0
      %3328 = vmatmul.mubr.bf16.gmra.mrb[0].mxu0 %v1599
      %v3329 = vpop.f32.mrb[0].mxu0
      %v3330 = vadd.f32 %v1468, %v3329
      %v3331 = vpop.f32.mrb[0].mxu0
      %v3332 = vadd.f32 %v1468, %v3331
      %v3333 = vpop.f32.mrb[0].mxu0
      %v3334 = vadd.f32 %v1473, %v3333
      %v3335 = vpop.f32.mrb[0].mxu0
      %v3336 = vadd.f32 %v1473, %v3335
      %3337 = vmatprep.mubr.bf16.mxu0 0
      %3338 = vmatmul.mubr.bf16.gmra.mrb[0].mxu0 %v1600
      %v3339 = vpop.f32.mrb[0].mxu0
      %v3340 = vadd.f32 %v1478, %v3339
      %v3341 = vpop.f32.mrb[0].mxu0
      %v3342 = vadd.f32 %v1478, %v3341
      %v3343 = vpop.f32.mrb[0].mxu0
      %v3344 = vadd.f32 %v1483, %v3343
      %v3345 = vpop.f32.mrb[0].mxu0
      %v3346 = vadd.f32 %v1483, %v3345
      %3347 = vmatprep.mubr.bf16.mxu0 0
      %3348 = vmatmul.mubr.bf16.gmra.mrb[0].mxu0 %v1601
      %v3349 = vpop.f32.mrb[0].mxu0
      %v3350 = vadd.f32 %v1488, %v3349
      %v3351 = vpop.f32.mrb[0].mxu0
      %v3352 = vadd.f32 %v1488, %v3351
      %v3353 = vpop.f32.mrb[0].mxu0
      %v3354 = vadd.f32 %v1493, %v3353
      %v3355 = vpop.f32.mrb[0].mxu0
      %v3356 = vadd.f32 %v1493, %v3355
      %3357 = vmatprep.mubr.bf16.mxu0 0
      %3358 = vmatmul.mubr.bf16.gmra.mrb[0].mxu0 %v1602
      %v3359 = vpop.f32.mrb[0].mxu0
      %v3360 = vadd.f32 %v1498, %v3359
      %v3361 = vpop.f32.mrb[0].mxu0
      %v3362 = vadd.f32 %v1498, %v3361
      %v3363 = vpop.f32.mrb[0].mxu0
      %v3364 = vadd.f32 %v1503, %v3363
      %v3365 = vpop.f32.mrb[0].mxu0
      %v3366 = vadd.f32 %v1503, %v3365
      %3367 = vmatprep.mubr.bf16.mxu0 0
      %3368 = vmatmul.mubr.bf16.gmra.mrb[0].mxu0 %v1603
      %v3369 = vpop.f32.mrb[0].mxu0
      %v3370 = vadd.f32 %v1508, %v3369
      %v3371 = vpop.f32.mrb[0].mxu0
      %v3372 = vadd.f32 %v1508, %v3371
      %v3373 = vpop.f32.mrb[0].mxu0
      %v3374 = vadd.f32 %v1513, %v3373
      %v3375 = vpop.f32.mrb[0].mxu0
      %v3376 = vadd.f32 %v1513, %v3375
      %3377 = vmatprep.mubr.bf16.mxu0 0
      %3378 = vmatmul.mubr.bf16.gmra.mrb[0].mxu0 %v1604
      %v3379 = vpop.f32.mrb[0].mxu0
      %v3380 = vadd.f32 %v1518, %v3379
      %v3381 = vpop.f32.mrb[0].mxu0
      %v3382 = vadd.f32 %v1518, %v3381
      %v3383 = vpop.f32.mrb[0].mxu0
      %v3384 = vadd.f32 %v1523, %v3383
      %v3385 = vpop.f32.mrb[0].mxu0
      %v3386 = vadd.f32 %v1523, %v3385
      %3387 = vdwg.mxu0
      %v3388 = vmax.f32 %v3230, 0.0
      %v3389 = vmax.f32 %v3232, 0.0
      %v3390 = vmax.f32 %v3234, 0.0
      %v3391 = vmax.f32 %v3236, 0.0
      %v3392 = vmax.f32 %v3240, 0.0
      %v3393 = vmax.f32 %v3242, 0.0
      %v3394 = vmax.f32 %v3244, 0.0
      %v3395 = vmax.f32 %v3246, 0.0
      %v3396 = vmax.f32 %v3250, 0.0
      %v3397 = vmax.f32 %v3252, 0.0
      %v3398 = vmax.f32 %v3254, 0.0
      %v3399 = vmax.f32 %v3256, 0.0
      %v3400 = vmax.f32 %v3260, 0.0
      %v3401 = vmax.f32 %v3262, 0.0
      %v3402 = vmax.f32 %v3264, 0.0
      %v3403 = vmax.f32 %v3266, 0.0
      %v3404 = vmax.f32 %v3270, 0.0
      %v3405 = vmax.f32 %v3272, 0.0
      %v3406 = vmax.f32 %v3274, 0.0
      %v3407 = vmax.f32 %v3276, 0.0
      %v3408 = vmax.f32 %v3280, 0.0
      %v3409 = vmax.f32 %v3282, 0.0
      %v3410 = vmax.f32 %v3284, 0.0
      %v3411 = vmax.f32 %v3286, 0.0
      %v3412 = vmax.f32 %v3290, 0.0
      %v3413 = vmax.f32 %v3292, 0.0
      %v3414 = vmax.f32 %v3294, 0.0
      %v3415 = vmax.f32 %v3296, 0.0
      %v3416 = vmax.f32 %v3300, 0.0
      %v3417 = vmax.f32 %v3302, 0.0
      %v3418 = vmax.f32 %v3304, 0.0
      %v3419 = vmax.f32 %v3306, 0.0
      %v3420 = vmax.f32 %v3310, 0.0
      %v3421 = vmax.f32 %v3312, 0.0
      %v3422 = vmax.f32 %v3314, 0.0
      %v3423 = vmax.f32 %v3316, 0.0
      %v3424 = vmax.f32 %v3320, 0.0
      %v3425 = vmax.f32 %v3322, 0.0
      %v3426 = vmax.f32 %v3324, 0.0
      %v3427 = vmax.f32 %v3326, 0.0
      %v3428 = vmax.f32 %v3330, 0.0
      %v3429 = vmax.f32 %v3332, 0.0
      %v3430 = vmax.f32 %v3334, 0.0
      %v3431 = vmax.f32 %v3336, 0.0
      %v3432 = vmax.f32 %v3340, 0.0
      %v3433 = vmax.f32 %v3342, 0.0
      %v3434 = vmax.f32 %v3344, 0.0
      %v3435 = vmax.f32 %v3346, 0.0
      %v3436 = vmax.f32 %v3350, 0.0
      %v3437 = vmax.f32 %v3352, 0.0
      %v3438 = vmax.f32 %v3354, 0.0
      %v3439 = vmax.f32 %v3356, 0.0
      %v3440 = vmax.f32 %v3360, 0.0
      %v3441 = vmax.f32 %v3362, 0.0
      %v3442 = vmax.f32 %v3364, 0.0
      %v3443 = vmax.f32 %v3366, 0.0
      %v3444 = vmax.f32 %v3370, 0.0
      %v3445 = vmax.f32 %v3372, 0.0
      %v3446 = vmax.f32 %v3374, 0.0
      %v3447 = vmax.f32 %v3376, 0.0
      %v3448 = vmax.f32 %v3380, 0.0
      %v3449 = vmax.f32 %v3382, 0.0
      %v3450 = vmax.f32 %v3384, 0.0
      %v3451 = vmax.f32 %v3386, 0.0
      %v3452 = vpack.c.bf16 %v3390, %v3388
      %v3453 = vpack.c.bf16 %v3391, %v3389
      %v3454 = vpack.c.bf16 %v3394, %v3392
      %v3455 = vpack.c.bf16 %v3395, %v3393
      %v3456 = vpack.c.bf16 %v3398, %v3396
      %v3457 = vpack.c.bf16 %v3399, %v3397
      %v3458 = vpack.c.bf16 %v3402, %v3400
      %v3459 = vpack.c.bf16 %v3403, %v3401
      %v3460 = vpack.c.bf16 %v3406, %v3404
      %v3461 = vpack.c.bf16 %v3407, %v3405
      %v3462 = vpack.c.bf16 %v3410, %v3408
      %v3463 = vpack.c.bf16 %v3411, %v3409
      %v3464 = vpack.c.bf16 %v3414, %v3412
      %v3465 = vpack.c.bf16 %v3415, %v3413
      %v3466 = vpack.c.bf16 %v3418, %v3416
      %v3467 = vpack.c.bf16 %v3419, %v3417
      %v3468 = vpack.c.bf16 %v3422, %v3420
      %v3469 = vpack.c.bf16 %v3423, %v3421
      %v3470 = vpack.c.bf16 %v3426, %v3424
      %v3471 = vpack.c.bf16 %v3427, %v3425
      %v3472 = vpack.c.bf16 %v3430, %v3428
      %v3473 = vpack.c.bf16 %v3431, %v3429
      %v3474 = vpack.c.bf16 %v3434, %v3432
      %v3475 = vpack.c.bf16 %v3435, %v3433
      %v3476 = vpack.c.bf16 %v3438, %v3436
      %v3477 = vpack.c.bf16 %v3439, %v3437
      %v3478 = vpack.c.bf16 %v3442, %v3440
      %v3479 = vpack.c.bf16 %v3443, %v3441
      %v3480 = vpack.c.bf16 %v3446, %v3444
      %v3481 = vpack.c.bf16 %v3447, %v3445
      %v3482 = vpack.c.bf16 %v3450, %v3448
      %v3483 = vpack.c.bf16 %v3451, %v3449
      %3484 = vmatprep.subr.bf16.mxu0 %v3453
      %3485 = vmatpush1.bf16.msra.mxu0 %v3452
      %3486 = vmatprep.subr.bf16.mxu0 %v3455
      %3487 = vmatpush1.bf16.msra.mxu0 %v3454
      %3488 = vmatprep.subr.bf16.mxu0 %v3457
      %3489 = vmatpush1.bf16.msra.mxu0 %v3456
      %3490 = vmatprep.subr.bf16.mxu0 %v3459
      %3491 = vmatpush1.bf16.msra.mxu0 %v3458
      %3492 = vmatprep.subr.bf16.mxu0 %v3461
      %3493 = vmatpush1.bf16.msra.mxu0 %v3460
      %3494 = vmatprep.subr.bf16.mxu0 %v3463
      %3495 = vmatpush1.bf16.msra.mxu0 %v3462
      %3496 = vmatprep.subr.bf16.mxu0 %v3465
      %3497 = vmatpush1.bf16.msra.mxu0 %v3464
      %3498 = vmatprep.subr.bf16.mxu0 %v3467
      %3499 = vmatpush1.bf16.msra.mxu0 %v3466
      %3500 = vmatprep.subr.bf16.mxu0 %v3469
      %3501 = vmatpush1.bf16.msra.mxu0 %v3468
      %3502 = vmatprep.subr.bf16.mxu0 %v3471
      %3503 = vmatpush1.bf16.msra.mxu0 %v3470
      %3504 = vmatprep.subr.bf16.mxu0 %v3473
      %3505 = vmatpush1.bf16.msra.mxu0 %v3472
      %3506 = vmatprep.subr.bf16.mxu0 %v3475
      %3507 = vmatpush1.bf16.msra.mxu0 %v3474
      %3508 = vmatprep.subr.bf16.mxu0 %v3477
      %3509 = vmatpush1.bf16.msra.mxu0 %v3476
      %3510 = vmatprep.subr.bf16.mxu0 %v3479
      %3511 = vmatpush1.bf16.msra.mxu0 %v3478
      %3512 = vmatprep.subr.bf16.mxu0 %v3481
      %3513 = vmatpush1.bf16.msra.mxu0 %v3480
      %3514 = vmatprep.subr.bf16.mxu0 %v3483
      %3515 = vmatpush1.bf16.msra.mxu0 %v3482
      %3516 = vmatprep.mubr.bf16.mxu0 %v1931
      %3517 = vmatmul.mubr.bf16.gmra.mrb[0].mxu0 %v1930
      %v3518 = vpop.f32.mrb[0].mxu0
      %v3519 = vadd.f32 %v1917, %v3518
      %v3520 = vpop.f32.mrb[0].mxu0
      %v3521 = vadd.f32 %v1917, %v3520
      %v3522 = vpop.f32.mrb[0].mxu0
      %v3523 = vadd.f32 %v1922, %v3522
      %v3524 = vpop.f32.mrb[0].mxu0
      %v3525 = vadd.f32 %v1922, %v3524
      %3526 = vdwg.mxu0
      %v3527 = vmax.f32 %v3519, 0.0
      %v3528 = vmax.f32 %v3521, 0.0
      %v3529 = vmax.f32 %v3523, 0.0
      %v3530 = vmax.f32 %v3525, 0.0
      %v3531 = vmax.f32 %v3527, %v3528
      %3532 = vmax.xlane.f32.xlu0 %v3531
      %v3533 = vpop.xlane.xlu0 %3532
      %v3534 = vmax.f32 %v3529, %v3530
      %3535 = vmax.xlane.f32.xlu0 %v3534
      %v3536 = vpop.xlane.xlu0 %3535
      %v3537 = vmax.f32 %v2761, %v3533
      %v3538 = vmax.f32 %v2762, %v3536
      %s3539 = scalar_lea.vmem %s427, 24
      %v3540 = vld [vmem:[%s3539] sm:$0x77]
      %v3542 = vcombine.high %v3540, %v3540
      %v3544 = vpack.c.bf16 %v3540, %v3540
      %v3545 = vpack.c.bf16 %v3542, %v3542
      %v3547 = vand.u32 %v3544, %v538
      %v3550 = vand.u32 %v3545, %v538
      %3552 = vmatprep.subr.bf16.mxu0 %v3550
      %3553 = vmatpush1.bf16.msra.mxu0 %v3547
      %3554 = vmatprep.subr.bf16.mxu0 0
      %3555 = vmatpush1.bf16.msra.mxu0 0
      %3556 = vmatprep.subr.bf16.mxu0 0
      %3557 = vmatpush1.bf16.msra.mxu0 0
      %3558 = vmatprep.subr.bf16.mxu0 0
      %3559 = vmatpush1.bf16.msra.mxu0 0
      %3560 = vmatprep.subr.bf16.mxu0 0
      %3561 = vmatpush1.bf16.msra.mxu0 0
      %3562 = vmatprep.subr.bf16.mxu0 0
      %3563 = vmatpush1.bf16.msra.mxu0 0
      %3564 = vmatprep.subr.bf16.mxu0 0
      %3565 = vmatpush1.bf16.msra.mxu0 0
      %3566 = vmatprep.subr.bf16.mxu0 0
      %3567 = vmatpush1.bf16.msra.mxu0 0
      %3568 = vmatprep.subr.bf16.mxu0 0
      %3569 = vmatpush1.bf16.msra.mxu0 0
      %3570 = vmatprep.subr.bf16.mxu0 0
      %3571 = vmatpush1.bf16.msra.mxu0 0
      %3572 = vmatprep.subr.bf16.mxu0 0
      %3573 = vmatpush1.bf16.msra.mxu0 0
      %3574 = vmatprep.subr.bf16.mxu0 0
      %3575 = vmatpush1.bf16.msra.mxu0 0
      %3576 = vmatprep.subr.bf16.mxu0 0
      %3577 = vmatpush1.bf16.msra.mxu0 0
      %3578 = vmatprep.subr.bf16.mxu0 0
      %3579 = vmatpush1.bf16.msra.mxu0 0
      %3580 = vmatprep.subr.bf16.mxu0 0
      %3581 = vmatpush1.bf16.msra.mxu0 0
      %3582 = vmatprep.subr.bf16.mxu0 0
      %3583 = vmatpush1.bf16.msra.mxu0 0
      %3584 = vmatprep.mubr.bf16.mxu0 0
      %3585 = vmatmul.mubr.bf16.gmra.mrb[0].mxu0 %v524
      %v3586 = vpop.f32.mrb[0].mxu0
      %v3587 = vadd.f32 %v465, %v3586
      %v3588 = vpop.f32.mrb[0].mxu0
      %v3589 = vadd.f32 %v465, %v3588
      %v3590 = vpop.f32.mrb[0].mxu0
      %v3591 = vadd.f32 %v470, %v3590
      %v3592 = vpop.f32.mrb[0].mxu0
      %v3593 = vadd.f32 %v470, %v3592
      %3594 = vmatprep.mubr.bf16.mxu0 0
      %3595 = vmatmul.mubr.bf16.gmra.mrb[0].mxu0 %v527
      %v3596 = vpop.f32.mrb[0].mxu0
      %v3597 = vadd.f32 %v475, %v3596
      %v3598 = vpop.f32.mrb[0].mxu0
      %v3599 = vadd.f32 %v475, %v3598
      %v3600 = vpop.f32.mrb[0].mxu0
      %v3601 = vadd.f32 %v480, %v3600
      %v3602 = vpop.f32.mrb[0].mxu0
      %v3603 = vadd.f32 %v480, %v3602
      %3604 = vmatprep.mubr.bf16.mxu0 0
      %3605 = vmatmul.mubr.bf16.gmra.mrb[0].mxu0 %v530
      %v3606 = vpop.f32.mrb[0].mxu0
      %v3607 = vadd.f32 %v485, %v3606
      %v3608 = vpop.f32.mrb[0].mxu0
      %v3609 = vadd.f32 %v485, %v3608
      %v3610 = vpop.f32.mrb[0].mxu0
      %v3611 = vadd.f32 %v490, %v3610
      %v3612 = vpop.f32.mrb[0].mxu0
      %v3613 = vadd.f32 %v490, %v3612
      %3614 = vmatprep.mubr.bf16.mxu0 0
      %3615 = vmatmul.mubr.bf16.gmra.mrb[0].mxu0 %v533
      %v3616 = vpop.f32.mrb[0].mxu0
      %v3617 = vadd.f32 %v495, %v3616
      %v3618 = vpop.f32.mrb[0].mxu0
      %v3619 = vadd.f32 %v495, %v3618
      %v3620 = vpop.f32.mrb[0].mxu0
      %v3621 = vadd.f32 %v500, %v3620
      %v3622 = vpop.f32.mrb[0].mxu0
      %v3623 = vadd.f32 %v500, %v3622
      %3624 = vdwg.mxu0
      %v3625 = vmax.f32 %v3587, 0.0
      %v3626 = vmax.f32 %v3589, 0.0
      %v3627 = vmax.f32 %v3591, 0.0
      %v3628 = vmax.f32 %v3593, 0.0
      %v3629 = vmax.f32 %v3597, 0.0
      %v3630 = vmax.f32 %v3599, 0.0
      %v3631 = vmax.f32 %v3601, 0.0
      %v3632 = vmax.f32 %v3603, 0.0
      %v3633 = vmax.f32 %v3607, 0.0
      %v3634 = vmax.f32 %v3609, 0.0
      %v3635 = vmax.f32 %v3611, 0.0
      %v3636 = vmax.f32 %v3613, 0.0
      %v3637 = vmax.f32 %v3617, 0.0
      %v3638 = vmax.f32 %v3619, 0.0
      %v3639 = vmax.f32 %v3621, 0.0
      %v3640 = vmax.f32 %v3623, 0.0
      %v3641 = vpack.c.bf16 %v3627, %v3625
      %v3642 = vpack.c.bf16 %v3628, %v3626
      %v3643 = vpack.c.bf16 %v3631, %v3629
      %v3644 = vpack.c.bf16 %v3632, %v3630
      %v3645 = vpack.c.bf16 %v3635, %v3633
      %v3646 = vpack.c.bf16 %v3636, %v3634
      %v3647 = vpack.c.bf16 %v3639, %v3637
      %v3648 = vpack.c.bf16 %v3640, %v3638
      %3649 = vmatprep.subr.bf16.mxu0 %v3642
      %3650 = vmatpush1.bf16.msra.mxu0 %v3641
      %3651 = vmatprep.subr.bf16.mxu0 %v3644
      %3652 = vmatpush1.bf16.msra.mxu0 %v3643
      %3653 = vmatprep.subr.bf16.mxu0 %v3646
      %3654 = vmatpush1.bf16.msra.mxu0 %v3645
      %3655 = vmatprep.subr.bf16.mxu0 %v3648
      %3656 = vmatpush1.bf16.msra.mxu0 %v3647
      %3657 = vmatprep.subr.bf16.mxu0 0
      %3658 = vmatpush1.bf16.msra.mxu0 0
      %3659 = vmatprep.subr.bf16.mxu0 0
      %3660 = vmatpush1.bf16.msra.mxu0 0
      %3661 = vmatprep.subr.bf16.mxu0 0
      %3662 = vmatpush1.bf16.msra.mxu0 0
      %3663 = vmatprep.subr.bf16.mxu0 0
      %3664 = vmatpush1.bf16.msra.mxu0 0
      %3665 = vmatprep.subr.bf16.mxu0 0
      %3666 = vmatpush1.bf16.msra.mxu0 0
      %3667 = vmatprep.subr.bf16.mxu0 0
      %3668 = vmatpush1.bf16.msra.mxu0 0
      %3669 = vmatprep.subr.bf16.mxu0 0
      %3670 = vmatpush1.bf16.msra.mxu0 0
      %3671 = vmatprep.subr.bf16.mxu0 0
      %3672 = vmatpush1.bf16.msra.mxu0 0
      %3673 = vmatprep.subr.bf16.mxu0 0
      %3674 = vmatpush1.bf16.msra.mxu0 0
      %3675 = vmatprep.subr.bf16.mxu0 0
      %3676 = vmatpush1.bf16.msra.mxu0 0
      %3677 = vmatprep.subr.bf16.mxu0 0
      %3678 = vmatpush1.bf16.msra.mxu0 0
      %3679 = vmatprep.subr.bf16.mxu0 0
      %3680 = vmatpush1.bf16.msra.mxu0 0
      %3681 = vmatprep.mubr.bf16.mxu0 0
      %3682 = vmatmul.mubr.bf16.gmra.mrb[0].mxu0 %v796
      %v3683 = vpop.f32.mrb[0].mxu0
      %v3684 = vadd.f32 %v677, %v3683
      %v3685 = vpop.f32.mrb[0].mxu0
      %v3686 = vadd.f32 %v677, %v3685
      %v3687 = vpop.f32.mrb[0].mxu0
      %v3688 = vadd.f32 %v682, %v3687
      %v3689 = vpop.f32.mrb[0].mxu0
      %v3690 = vadd.f32 %v682, %v3689
      %3691 = vmatprep.mubr.bf16.mxu0 0
      %3692 = vmatmul.mubr.bf16.gmra.mrb[0].mxu0 %v799
      %v3693 = vpop.f32.mrb[0].mxu0
      %v3694 = vadd.f32 %v687, %v3693
      %v3695 = vpop.f32.mrb[0].mxu0
      %v3696 = vadd.f32 %v687, %v3695
      %v3697 = vpop.f32.mrb[0].mxu0
      %v3698 = vadd.f32 %v692, %v3697
      %v3699 = vpop.f32.mrb[0].mxu0
      %v3700 = vadd.f32 %v692, %v3699
      %3701 = vmatprep.mubr.bf16.mxu0 0
      %3702 = vmatmul.mubr.bf16.gmra.mrb[0].mxu0 %v802
      %v3703 = vpop.f32.mrb[0].mxu0
      %v3704 = vadd.f32 %v697, %v3703
      %v3705 = vpop.f32.mrb[0].mxu0
      %v3706 = vadd.f32 %v697, %v3705
      %v3707 = vpop.f32.mrb[0].mxu0
      %v3708 = vadd.f32 %v702, %v3707
      %v3709 = vpop.f32.mrb[0].mxu0
      %v3710 = vadd.f32 %v702, %v3709
      %3711 = vmatprep.mubr.bf16.mxu0 0
      %3712 = vmatmul.mubr.bf16.gmra.mrb[0].mxu0 %v805
      %v3713 = vpop.f32.mrb[0].mxu0
      %v3714 = vadd.f32 %v707, %v3713
      %v3715 = vpop.f32.mrb[0].mxu0
      %v3716 = vadd.f32 %v707, %v3715
      %v3717 = vpop.f32.mrb[0].mxu0
      %v3718 = vadd.f32 %v712, %v3717
      %v3719 = vpop.f32.mrb[0].mxu0
      %v3720 = vadd.f32 %v712, %v3719
      %3721 = vmatprep.mubr.bf16.mxu0 0
      %3722 = vmatmul.mubr.bf16.gmra.mrb[0].mxu0 %v808
      %v3723 = vpop.f32.mrb[0].mxu0
      %v3724 = vadd.f32 %v717, %v3723
      %v3725 = vpop.f32.mrb[0].mxu0
      %v3726 = vadd.f32 %v717, %v3725
      %v3727 = vpop.f32.mrb[0].mxu0
      %v3728 = vadd.f32 %v722, %v3727
      %v3729 = vpop.f32.mrb[0].mxu0
      %v3730 = vadd.f32 %v722, %v3729
      %3731 = vmatprep.mubr.bf16.mxu0 0
      %3732 = vmatmul.mubr.bf16.gmra.mrb[0].mxu0 %v811
      %v3733 = vpop.f32.mrb[0].mxu0
      %v3734 = vadd.f32 %v727, %v3733
      %v3735 = vpop.f32.mrb[0].mxu0
      %v3736 = vadd.f32 %v727, %v3735
      %v3737 = vpop.f32.mrb[0].mxu0
      %v3738 = vadd.f32 %v732, %v3737
      %v3739 = vpop.f32.mrb[0].mxu0
      %v3740 = vadd.f32 %v732, %v3739
      %3741 = vmatprep.mubr.bf16.mxu0 0
      %3742 = vmatmul.mubr.bf16.gmra.mrb[0].mxu0 %v814
      %v3743 = vpop.f32.mrb[0].mxu0
      %v3744 = vadd.f32 %v737, %v3743
      %v3745 = vpop.f32.mrb[0].mxu0
      %v3746 = vadd.f32 %v737, %v3745
      %v3747 = vpop.f32.mrb[0].mxu0
      %v3748 = vadd.f32 %v742, %v3747
      %v3749 = vpop.f32.mrb[0].mxu0
      %v3750 = vadd.f32 %v742, %v3749
      %3751 = vmatprep.mubr.bf16.mxu0 0
      %3752 = vmatmul.mubr.bf16.gmra.mrb[0].mxu0 %v817
      %v3753 = vpop.f32.mrb[0].mxu0
      %v3754 = vadd.f32 %v747, %v3753
      %v3755 = vpop.f32.mrb[0].mxu0
      %v3756 = vadd.f32 %v747, %v3755
      %v3757 = vpop.f32.mrb[0].mxu0
      %v3758 = vadd.f32 %v752, %v3757
      %v3759 = vpop.f32.mrb[0].mxu0
      %v3760 = vadd.f32 %v752, %v3759
      %3761 = vdwg.mxu0
      %v3762 = vmax.f32 %v3684, 0.0
      %v3763 = vmax.f32 %v3686, 0.0
      %v3764 = vmax.f32 %v3688, 0.0
      %v3765 = vmax.f32 %v3690, 0.0
      %v3766 = vmax.f32 %v3694, 0.0
      %v3767 = vmax.f32 %v3696, 0.0
      %v3768 = vmax.f32 %v3698, 0.0
      %v3769 = vmax.f32 %v3700, 0.0
      %v3770 = vmax.f32 %v3704, 0.0
      %v3771 = vmax.f32 %v3706, 0.0
      %v3772 = vmax.f32 %v3708, 0.0
      %v3773 = vmax.f32 %v3710, 0.0
      %v3774 = vmax.f32 %v3714, 0.0
      %v3775 = vmax.f32 %v3716, 0.0
      %v3776 = vmax.f32 %v3718, 0.0
      %v3777 = vmax.f32 %v3720, 0.0
      %v3778 = vmax.f32 %v3724, 0.0
      %v3779 = vmax.f32 %v3726, 0.0
      %v3780 = vmax.f32 %v3728, 0.0
      %v3781 = vmax.f32 %v3730, 0.0
      %v3782 = vmax.f32 %v3734, 0.0
      %v3783 = vmax.f32 %v3736, 0.0
      %v3784 = vmax.f32 %v3738, 0.0
      %v3785 = vmax.f32 %v3740, 0.0
      %v3786 = vmax.f32 %v3744, 0.0
      %v3787 = vmax.f32 %v3746, 0.0
      %v3788 = vmax.f32 %v3748, 0.0
      %v3789 = vmax.f32 %v3750, 0.0
      %v3790 = vmax.f32 %v3754, 0.0
      %v3791 = vmax.f32 %v3756, 0.0
      %v3792 = vmax.f32 %v3758, 0.0
      %v3793 = vmax.f32 %v3760, 0.0
      %v3794 = vpack.c.bf16 %v3764, %v3762
      %v3795 = vpack.c.bf16 %v3765, %v3763
      %v3796 = vpack.c.bf16 %v3768, %v3766
      %v3797 = vpack.c.bf16 %v3769, %v3767
      %v3798 = vpack.c.bf16 %v3772, %v3770
      %v3799 = vpack.c.bf16 %v3773, %v3771
      %v3800 = vpack.c.bf16 %v3776, %v3774
      %v3801 = vpack.c.bf16 %v3777, %v3775
      %v3802 = vpack.c.bf16 %v3780, %v3778
      %v3803 = vpack.c.bf16 %v3781, %v3779
      %v3804 = vpack.c.bf16 %v3784, %v3782
      %v3805 = vpack.c.bf16 %v3785, %v3783
      %v3806 = vpack.c.bf16 %v3788, %v3786
      %v3807 = vpack.c.bf16 %v3789, %v3787
      %v3808 = vpack.c.bf16 %v3792, %v3790
      %v3809 = vpack.c.bf16 %v3793, %v3791
      %3810 = vmatprep.subr.bf16.mxu0 %v3795
      %3811 = vmatpush1.bf16.msra.mxu0 %v3794
      %3812 = vmatprep.subr.bf16.mxu0 %v3797
      %3813 = vmatpush1.bf16.msra.mxu0 %v3796
      %3814 = vmatprep.subr.bf16.mxu0 %v3799
      %3815 = vmatpush1.bf16.msra.mxu0 %v3798
      %3816 = vmatprep.subr.bf16.mxu0 %v3801
      %3817 = vmatpush1.bf16.msra.mxu0 %v3800
      %3818 = vmatprep.subr.bf16.mxu0 %v3803
      %3819 = vmatpush1.bf16.msra.mxu0 %v3802
      %3820 = vmatprep.subr.bf16.mxu0 %v3805
      %3821 = vmatpush1.bf16.msra.mxu0 %v3804
      %3822 = vmatprep.subr.bf16.mxu0 %v3807
      %3823 = vmatpush1.bf16.msra.mxu0 %v3806
      %3824 = vmatprep.subr.bf16.mxu0 %v3809
      %3825 = vmatpush1.bf16.msra.mxu0 %v3808
      %3826 = vmatprep.subr.bf16.mxu0 0
      %3827 = vmatpush1.bf16.msra.mxu0 0
      %3828 = vmatprep.subr.bf16.mxu0 0
      %3829 = vmatpush1.bf16.msra.mxu0 0
      %3830 = vmatprep.subr.bf16.mxu0 0
      %3831 = vmatpush1.bf16.msra.mxu0 0
      %3832 = vmatprep.subr.bf16.mxu0 0
      %3833 = vmatpush1.bf16.msra.mxu0 0
      %3834 = vmatprep.subr.bf16.mxu0 0
      %3835 = vmatpush1.bf16.msra.mxu0 0
      %3836 = vmatprep.subr.bf16.mxu0 0
      %3837 = vmatpush1.bf16.msra.mxu0 0
      %3838 = vmatprep.subr.bf16.mxu0 0
      %3839 = vmatpush1.bf16.msra.mxu0 0
      %3840 = vmatprep.subr.bf16.mxu0 0
      %3841 = vmatpush1.bf16.msra.mxu0 0
      %3842 = vmatprep.mubr.bf16.mxu0 0
      %3843 = vmatmul.mubr.bf16.gmra.mrb[0].mxu0 %v1124
      %v3844 = vpop.f32.mrb[0].mxu0
      %v3845 = vadd.f32 %v1015, %v3844
      %v3846 = vpop.f32.mrb[0].mxu0
      %v3847 = vadd.f32 %v1015, %v3846
      %v3848 = vpop.f32.mrb[0].mxu0
      %v3849 = vadd.f32 %v1020, %v3848
      %v3850 = vpop.f32.mrb[0].mxu0
      %v3851 = vadd.f32 %v1020, %v3850
      %3852 = vmatprep.mubr.bf16.mxu0 0
      %3853 = vmatmul.mubr.bf16.gmra.mrb[0].mxu0 %v1125
      %v3854 = vpop.f32.mrb[0].mxu0
      %v3855 = vadd.f32 %v1025, %v3854
      %v3856 = vpop.f32.mrb[0].mxu0
      %v3857 = vadd.f32 %v1025, %v3856
      %v3858 = vpop.f32.mrb[0].mxu0
      %v3859 = vadd.f32 %v1030, %v3858
      %v3860 = vpop.f32.mrb[0].mxu0
      %v3861 = vadd.f32 %v1030, %v3860
      %3862 = vmatprep.mubr.bf16.mxu0 0
      %3863 = vmatmul.mubr.bf16.gmra.mrb[0].mxu0 %v1126
      %v3864 = vpop.f32.mrb[0].mxu0
      %v3865 = vadd.f32 %v1035, %v3864
      %v3866 = vpop.f32.mrb[0].mxu0
      %v3867 = vadd.f32 %v1035, %v3866
      %v3868 = vpop.f32.mrb[0].mxu0
      %v3869 = vadd.f32 %v1040, %v3868
      %v3870 = vpop.f32.mrb[0].mxu0
      %v3871 = vadd.f32 %v1040, %v3870
      %3872 = vmatprep.mubr.bf16.mxu0 0
      %3873 = vmatmul.mubr.bf16.gmra.mrb[0].mxu0 %v1127
      %v3874 = vpop.f32.mrb[0].mxu0
      %v3875 = vadd.f32 %v1045, %v3874
      %v3876 = vpop.f32.mrb[0].mxu0
      %v3877 = vadd.f32 %v1045, %v3876
      %v3878 = vpop.f32.mrb[0].mxu0
      %v3879 = vadd.f32 %v1050, %v3878
      %v3880 = vpop.f32.mrb[0].mxu0
      %v3881 = vadd.f32 %v1050, %v3880
      %3882 = vmatprep.mubr.bf16.mxu0 0
      %3883 = vmatmul.mubr.bf16.gmra.mrb[0].mxu0 %v1128
      %v3884 = vpop.f32.mrb[0].mxu0
      %v3885 = vadd.f32 %v1055, %v3884
      %v3886 = vpop.f32.mrb[0].mxu0
      %v3887 = vadd.f32 %v1055, %v3886
      %v3888 = vpop.f32.mrb[0].mxu0
      %v3889 = vadd.f32 %v1060, %v3888
      %v3890 = vpop.f32.mrb[0].mxu0
      %v3891 = vadd.f32 %v1060, %v3890
      %3892 = vmatprep.mubr.bf16.mxu0 0
      %3893 = vmatmul.mubr.bf16.gmra.mrb[0].mxu0 %v1129
      %v3894 = vpop.f32.mrb[0].mxu0
      %v3895 = vadd.f32 %v1065, %v3894
      %v3896 = vpop.f32.mrb[0].mxu0
      %v3897 = vadd.f32 %v1065, %v3896
      %v3898 = vpop.f32.mrb[0].mxu0
      %v3899 = vadd.f32 %v1070, %v3898
      %v3900 = vpop.f32.mrb[0].mxu0
      %v3901 = vadd.f32 %v1070, %v3900
      %3902 = vmatprep.mubr.bf16.mxu0 0
      %3903 = vmatmul.mubr.bf16.gmra.mrb[0].mxu0 %v1130
      %v3904 = vpop.f32.mrb[0].mxu0
      %v3905 = vadd.f32 %v1075, %v3904
      %v3906 = vpop.f32.mrb[0].mxu0
      %v3907 = vadd.f32 %v1075, %v3906
      %v3908 = vpop.f32.mrb[0].mxu0
      %v3909 = vadd.f32 %v1080, %v3908
      %v3910 = vpop.f32.mrb[0].mxu0
      %v3911 = vadd.f32 %v1080, %v3910
      %3912 = vmatprep.mubr.bf16.mxu0 0
      %3913 = vmatmul.mubr.bf16.gmra.mrb[0].mxu0 %v1131
      %v3914 = vpop.f32.mrb[0].mxu0
      %v3915 = vadd.f32 %v1085, %v3914
      %v3916 = vpop.f32.mrb[0].mxu0
      %v3917 = vadd.f32 %v1085, %v3916
      %v3918 = vpop.f32.mrb[0].mxu0
      %v3919 = vadd.f32 %v1090, %v3918
      %v3920 = vpop.f32.mrb[0].mxu0
      %v3921 = vadd.f32 %v1090, %v3920
      %3922 = vdwg.mxu0
      %v3923 = vmax.f32 %v3845, 0.0
      %v3924 = vmax.f32 %v3847, 0.0
      %v3925 = vmax.f32 %v3849, 0.0
      %v3926 = vmax.f32 %v3851, 0.0
      %v3927 = vmax.f32 %v3855, 0.0
      %v3928 = vmax.f32 %v3857, 0.0
      %v3929 = vmax.f32 %v3859, 0.0
      %v3930 = vmax.f32 %v3861, 0.0
      %v3931 = vmax.f32 %v3865, 0.0
      %v3932 = vmax.f32 %v3867, 0.0
      %v3933 = vmax.f32 %v3869, 0.0
      %v3934 = vmax.f32 %v3871, 0.0
      %v3935 = vmax.f32 %v3875, 0.0
      %v3936 = vmax.f32 %v3877, 0.0
      %v3937 = vmax.f32 %v3879, 0.0
      %v3938 = vmax.f32 %v3881, 0.0
      %v3939 = vmax.f32 %v3885, 0.0
      %v3940 = vmax.f32 %v3887, 0.0
      %v3941 = vmax.f32 %v3889, 0.0
      %v3942 = vmax.f32 %v3891, 0.0
      %v3943 = vmax.f32 %v3895, 0.0
      %v3944 = vmax.f32 %v3897, 0.0
      %v3945 = vmax.f32 %v3899, 0.0
      %v3946 = vmax.f32 %v3901, 0.0
      %v3947 = vmax.f32 %v3905, 0.0
      %v3948 = vmax.f32 %v3907, 0.0
      %v3949 = vmax.f32 %v3909, 0.0
      %v3950 = vmax.f32 %v3911, 0.0
      %v3951 = vmax.f32 %v3915, 0.0
      %v3952 = vmax.f32 %v3917, 0.0
      %v3953 = vmax.f32 %v3919, 0.0
      %v3954 = vmax.f32 %v3921, 0.0
      %v3955 = vpack.c.bf16 %v3925, %v3923
      %v3956 = vpack.c.bf16 %v3926, %v3924
      %v3957 = vpack.c.bf16 %v3929, %v3927
      %v3958 = vpack.c.bf16 %v3930, %v3928
      %v3959 = vpack.c.bf16 %v3933, %v3931
      %v3960 = vpack.c.bf16 %v3934, %v3932
      %v3961 = vpack.c.bf16 %v3937, %v3935
      %v3962 = vpack.c.bf16 %v3938, %v3936
      %v3963 = vpack.c.bf16 %v3941, %v3939
      %v3964 = vpack.c.bf16 %v3942, %v3940
      %v3965 = vpack.c.bf16 %v3945, %v3943
      %v3966 = vpack.c.bf16 %v3946, %v3944
      %v3967 = vpack.c.bf16 %v3949, %v3947
      %v3968 = vpack.c.bf16 %v3950, %v3948
      %v3969 = vpack.c.bf16 %v3953, %v3951
      %v3970 = vpack.c.bf16 %v3954, %v3952
      %3971 = vmatprep.subr.bf16.mxu0 %v3956
      %3972 = vmatpush1.bf16.msra.mxu0 %v3955
      %3973 = vmatprep.subr.bf16.mxu0 %v3958
      %3974 = vmatpush1.bf16.msra.mxu0 %v3957
      %3975 = vmatprep.subr.bf16.mxu0 %v3960
      %3976 = vmatpush1.bf16.msra.mxu0 %v3959
      %3977 = vmatprep.subr.bf16.mxu0 %v3962
      %3978 = vmatpush1.bf16.msra.mxu0 %v3961
      %3979 = vmatprep.subr.bf16.mxu0 %v3964
      %3980 = vmatpush1.bf16.msra.mxu0 %v3963
      %3981 = vmatprep.subr.bf16.mxu0 %v3966
      %3982 = vmatpush1.bf16.msra.mxu0 %v3965
      %3983 = vmatprep.subr.bf16.mxu0 %v3968
      %3984 = vmatpush1.bf16.msra.mxu0 %v3967
      %3985 = vmatprep.subr.bf16.mxu0 %v3970
      %3986 = vmatpush1.bf16.msra.mxu0 %v3969
      %3987 = vmatprep.subr.bf16.mxu0 0
      %3988 = vmatpush1.bf16.msra.mxu0 0
      %3989 = vmatprep.subr.bf16.mxu0 0
      %3990 = vmatpush1.bf16.msra.mxu0 0
      %3991 = vmatprep.subr.bf16.mxu0 0
      %3992 = vmatpush1.bf16.msra.mxu0 0
      %3993 = vmatprep.subr.bf16.mxu0 0
      %3994 = vmatpush1.bf16.msra.mxu0 0
      %3995 = vmatprep.subr.bf16.mxu0 0
      %3996 = vmatpush1.bf16.msra.mxu0 0
      %3997 = vmatprep.subr.bf16.mxu0 0
      %3998 = vmatpush1.bf16.msra.mxu0 0
      %3999 = vmatprep.subr.bf16.mxu0 0
      %4000 = vmatpush1.bf16.msra.mxu0 0
      %4001 = vmatprep.subr.bf16.mxu0 0
      %4002 = vmatpush1.bf16.msra.mxu0 0
      %4003 = vmatprep.mubr.bf16.mxu0 0
      %4004 = vmatmul.mubr.bf16.gmra.mrb[0].mxu0 %v1589
      %v4005 = vpop.f32.mrb[0].mxu0
      %v4006 = vadd.f32 %v1368, %v4005
      %v4007 = vpop.f32.mrb[0].mxu0
      %v4008 = vadd.f32 %v1368, %v4007
      %v4009 = vpop.f32.mrb[0].mxu0
      %v4010 = vadd.f32 %v1373, %v4009
      %v4011 = vpop.f32.mrb[0].mxu0
      %v4012 = vadd.f32 %v1373, %v4011
      %4013 = vmatprep.mubr.bf16.mxu0 0
      %4014 = vmatmul.mubr.bf16.gmra.mrb[0].mxu0 %v1590
      %v4015 = vpop.f32.mrb[0].mxu0
      %v4016 = vadd.f32 %v1378, %v4015
      %v4017 = vpop.f32.mrb[0].mxu0
      %v4018 = vadd.f32 %v1378, %v4017
      %v4019 = vpop.f32.mrb[0].mxu0
      %v4020 = vadd.f32 %v1383, %v4019
      %v4021 = vpop.f32.mrb[0].mxu0
      %v4022 = vadd.f32 %v1383, %v4021
      %4023 = vmatprep.mubr.bf16.mxu0 0
      %4024 = vmatmul.mubr.bf16.gmra.mrb[0].mxu0 %v1591
      %v4025 = vpop.f32.mrb[0].mxu0
      %v4026 = vadd.f32 %v1388, %v4025
      %v4027 = vpop.f32.mrb[0].mxu0
      %v4028 = vadd.f32 %v1388, %v4027
      %v4029 = vpop.f32.mrb[0].mxu0
      %v4030 = vadd.f32 %v1393, %v4029
      %v4031 = vpop.f32.mrb[0].mxu0
      %v4032 = vadd.f32 %v1393, %v4031
      %4033 = vmatprep.mubr.bf16.mxu0 0
      %4034 = vmatmul.mubr.bf16.gmra.mrb[0].mxu0 %v1592
      %v4035 = vpop.f32.mrb[0].mxu0
      %v4036 = vadd.f32 %v1398, %v4035
      %v4037 = vpop.f32.mrb[0].mxu0
      %v4038 = vadd.f32 %v1398, %v4037
      %v4039 = vpop.f32.mrb[0].mxu0
      %v4040 = vadd.f32 %v1403, %v4039
      %v4041 = vpop.f32.mrb[0].mxu0
      %v4042 = vadd.f32 %v1403, %v4041
      %4043 = vmatprep.mubr.bf16.mxu0 0
      %4044 = vmatmul.mubr.bf16.gmra.mrb[0].mxu0 %v1593
      %v4045 = vpop.f32.mrb[0].mxu0
      %v4046 = vadd.f32 %v1408, %v4045
      %v4047 = vpop.f32.mrb[0].mxu0
      %v4048 = vadd.f32 %v1408, %v4047
      %v4049 = vpop.f32.mrb[0].mxu0
      %v4050 = vadd.f32 %v1413, %v4049
      %v4051 = vpop.f32.mrb[0].mxu0
      %v4052 = vadd.f32 %v1413, %v4051
      %4053 = vmatprep.mubr.bf16.mxu0 0
      %4054 = vmatmul.mubr.bf16.gmra.mrb[0].mxu0 %v1594
      %v4055 = vpop.f32.mrb[0].mxu0
      %v4056 = vadd.f32 %v1418, %v4055
      %v4057 = vpop.f32.mrb[0].mxu0
      %v4058 = vadd.f32 %v1418, %v4057
      %v4059 = vpop.f32.mrb[0].mxu0
      %v4060 = vadd.f32 %v1423, %v4059
      %v4061 = vpop.f32.mrb[0].mxu0
      %v4062 = vadd.f32 %v1423, %v4061
      %4063 = vmatprep.mubr.bf16.mxu0 0
      %4064 = vmatmul.mubr.bf16.gmra.mrb[0].mxu0 %v1595
      %v4065 = vpop.f32.mrb[0].mxu0
      %v4066 = vadd.f32 %v1428, %v4065
      %v4067 = vpop.f32.mrb[0].mxu0
      %v4068 = vadd.f32 %v1428, %v4067
      %v4069 = vpop.f32.mrb[0].mxu0
      %v4070 = vadd.f32 %v1433, %v4069
      %v4071 = vpop.f32.mrb[0].mxu0
      %v4072 = vadd.f32 %v1433, %v4071
      %4073 = vmatprep.mubr.bf16.mxu0 0
      %4074 = vmatmul.mubr.bf16.gmra.mrb[0].mxu0 %v1596
      %v4075 = vpop.f32.mrb[0].mxu0
      %v4076 = vadd.f32 %v1438, %v4075
      %v4077 = vpop.f32.mrb[0].mxu0
      %v4078 = vadd.f32 %v1438, %v4077
      %v4079 = vpop.f32.mrb[0].mxu0
      %v4080 = vadd.f32 %v1443, %v4079
      %v4081 = vpop.f32.mrb[0].mxu0
      %v4082 = vadd.f32 %v1443, %v4081
      %4083 = vmatprep.mubr.bf16.mxu0 0
      %4084 = vmatmul.mubr.bf16.gmra.mrb[0].mxu0 %v1597
      %v4085 = vpop.f32.mrb[0].mxu0
      %v4086 = vadd.f32 %v1448, %v4085
      %v4087 = vpop.f32.mrb[0].mxu0
      %v4088 = vadd.f32 %v1448, %v4087
      %v4089 = vpop.f32.mrb[0].mxu0
      %v4090 = vadd.f32 %v1453, %v4089
      %v4091 = vpop.f32.mrb[0].mxu0
      %v4092 = vadd.f32 %v1453, %v4091
      %4093 = vmatprep.mubr.bf16.mxu0 0
      %4094 = vmatmul.mubr.bf16.gmra.mrb[0].mxu0 %v1598
      %v4095 = vpop.f32.mrb[0].mxu0
      %v4096 = vadd.f32 %v1458, %v4095
      %v4097 = vpop.f32.mrb[0].mxu0
      %v4098 = vadd.f32 %v1458, %v4097
      %v4099 = vpop.f32.mrb[0].mxu0
      %v4100 = vadd.f32 %v1463, %v4099
      %v4101 = vpop.f32.mrb[0].mxu0
      %v4102 = vadd.f32 %v1463, %v4101
      %4103 = vmatprep.mubr.bf16.mxu0 0
      %4104 = vmatmul.mubr.bf16.gmra.mrb[0].mxu0 %v1599
      %v4105 = vpop.f32.mrb[0].mxu0
      %v4106 = vadd.f32 %v1468, %v4105
      %v4107 = vpop.f32.mrb[0].mxu0
      %v4108 = vadd.f32 %v1468, %v4107
      %v4109 = vpop.f32.mrb[0].mxu0
      %v4110 = vadd.f32 %v1473, %v4109
      %v4111 = vpop.f32.mrb[0].mxu0
      %v4112 = vadd.f32 %v1473, %v4111
      %4113 = vmatprep.mubr.bf16.mxu0 0
      %4114 = vmatmul.mubr.bf16.gmra.mrb[0].mxu0 %v1600
      %v4115 = vpop.f32.mrb[0].mxu0
      %v4116 = vadd.f32 %v1478, %v4115
      %v4117 = vpop.f32.mrb[0].mxu0
      %v4118 = vadd.f32 %v1478, %v4117
      %v4119 = vpop.f32.mrb[0].mxu0
      %v4120 = vadd.f32 %v1483, %v4119
      %v4121 = vpop.f32.mrb[0].mxu0
      %v4122 = vadd.f32 %v1483, %v4121
      %4123 = vmatprep.mubr.bf16.mxu0 0
      %4124 = vmatmul.mubr.bf16.gmra.mrb[0].mxu0 %v1601
      %v4125 = vpop.f32.mrb[0].mxu0
      %v4126 = vadd.f32 %v1488, %v4125
      %v4127 = vpop.f32.mrb[0].mxu0
      %v4128 = vadd.f32 %v1488, %v4127
      %v4129 = vpop.f32.mrb[0].mxu0
      %v4130 = vadd.f32 %v1493, %v4129
      %v4131 = vpop.f32.mrb[0].mxu0
      %v4132 = vadd.f32 %v1493, %v4131
      %4133 = vmatprep.mubr.bf16.mxu0 0
      %4134 = vmatmul.mubr.bf16.gmra.mrb[0].mxu0 %v1602
      %v4135 = vpop.f32.mrb[0].mxu0
      %v4136 = vadd.f32 %v1498, %v4135
      %v4137 = vpop.f32.mrb[0].mxu0
      %v4138 = vadd.f32 %v1498, %v4137
      %v4139 = vpop.f32.mrb[0].mxu0
      %v4140 = vadd.f32 %v1503, %v4139
      %v4141 = vpop.f32.mrb[0].mxu0
      %v4142 = vadd.f32 %v1503, %v4141
      %4143 = vmatprep.mubr.bf16.mxu0 0
      %4144 = vmatmul.mubr.bf16.gmra.mrb[0].mxu0 %v1603
      %v4145 = vpop.f32.mrb[0].mxu0
      %v4146 = vadd.f32 %v1508, %v4145
      %v4147 = vpop.f32.mrb[0].mxu0
      %v4148 = vadd.f32 %v1508, %v4147
      %v4149 = vpop.f32.mrb[0].mxu0
      %v4150 = vadd.f32 %v1513, %v4149
      %v4151 = vpop.f32.mrb[0].mxu0
      %v4152 = vadd.f32 %v1513, %v4151
      %4153 = vmatprep.mubr.bf16.mxu0 0
      %4154 = vmatmul.mubr.bf16.gmra.mrb[0].mxu0 %v1604
      %v4155 = vpop.f32.mrb[0].mxu0
      %v4156 = vadd.f32 %v1518, %v4155
      %v4157 = vpop.f32.mrb[0].mxu0
      %v4158 = vadd.f32 %v1518, %v4157
      %v4159 = vpop.f32.mrb[0].mxu0
      %v4160 = vadd.f32 %v1523, %v4159
      %v4161 = vpop.f32.mrb[0].mxu0
      %v4162 = vadd.f32 %v1523, %v4161
      %4163 = vdwg.mxu0
      %v4164 = vmax.f32 %v4006, 0.0
      %v4165 = vmax.f32 %v4008, 0.0
      %v4166 = vmax.f32 %v4010, 0.0
      %v4167 = vmax.f32 %v4012, 0.0
      %v4168 = vmax.f32 %v4016, 0.0
      %v4169 = vmax.f32 %v4018, 0.0
      %v4170 = vmax.f32 %v4020, 0.0
      %v4171 = vmax.f32 %v4022, 0.0
      %v4172 = vmax.f32 %v4026, 0.0
      %v4173 = vmax.f32 %v4028, 0.0
      %v4174 = vmax.f32 %v4030, 0.0
      %v4175 = vmax.f32 %v4032, 0.0
      %v4176 = vmax.f32 %v4036, 0.0
      %v4177 = vmax.f32 %v4038, 0.0
      %v4178 = vmax.f32 %v4040, 0.0
      %v4179 = vmax.f32 %v4042, 0.0
      %v4180 = vmax.f32 %v4046, 0.0
      %v4181 = vmax.f32 %v4048, 0.0
      %v4182 = vmax.f32 %v4050, 0.0
      %v4183 = vmax.f32 %v4052, 0.0
      %v4184 = vmax.f32 %v4056, 0.0
      %v4185 = vmax.f32 %v4058, 0.0
      %v4186 = vmax.f32 %v4060, 0.0
      %v4187 = vmax.f32 %v4062, 0.0
      %v4188 = vmax.f32 %v4066, 0.0
      %v4189 = vmax.f32 %v4068, 0.0
      %v4190 = vmax.f32 %v4070, 0.0
      %v4191 = vmax.f32 %v4072, 0.0
      %v4192 = vmax.f32 %v4076, 0.0
      %v4193 = vmax.f32 %v4078, 0.0
      %v4194 = vmax.f32 %v4080, 0.0
      %v4195 = vmax.f32 %v4082, 0.0
      %v4196 = vmax.f32 %v4086, 0.0
      %v4197 = vmax.f32 %v4088, 0.0
      %v4198 = vmax.f32 %v4090, 0.0
      %v4199 = vmax.f32 %v4092, 0.0
      %v4200 = vmax.f32 %v4096, 0.0
      %v4201 = vmax.f32 %v4098, 0.0
      %v4202 = vmax.f32 %v4100, 0.0
      %v4203 = vmax.f32 %v4102, 0.0
      %v4204 = vmax.f32 %v4106, 0.0
      %v4205 = vmax.f32 %v4108, 0.0
      %v4206 = vmax.f32 %v4110, 0.0
      %v4207 = vmax.f32 %v4112, 0.0
      %v4208 = vmax.f32 %v4116, 0.0
      %v4209 = vmax.f32 %v4118, 0.0
      %v4210 = vmax.f32 %v4120, 0.0
      %v4211 = vmax.f32 %v4122, 0.0
      %v4212 = vmax.f32 %v4126, 0.0
      %v4213 = vmax.f32 %v4128, 0.0
      %v4214 = vmax.f32 %v4130, 0.0
      %v4215 = vmax.f32 %v4132, 0.0
      %v4216 = vmax.f32 %v4136, 0.0
      %v4217 = vmax.f32 %v4138, 0.0
      %v4218 = vmax.f32 %v4140, 0.0
      %v4219 = vmax.f32 %v4142, 0.0
      %v4220 = vmax.f32 %v4146, 0.0
      %v4221 = vmax.f32 %v4148, 0.0
      %v4222 = vmax.f32 %v4150, 0.0
      %v4223 = vmax.f32 %v4152, 0.0
      %v4224 = vmax.f32 %v4156, 0.0
      %v4225 = vmax.f32 %v4158, 0.0
      %v4226 = vmax.f32 %v4160, 0.0
      %v4227 = vmax.f32 %v4162, 0.0
      %v4228 = vpack.c.bf16 %v4166, %v4164
      %v4229 = vpack.c.bf16 %v4167, %v4165
      %v4230 = vpack.c.bf16 %v4170, %v4168
      %v4231 = vpack.c.bf16 %v4171, %v4169
      %v4232 = vpack.c.bf16 %v4174, %v4172
      %v4233 = vpack.c.bf16 %v4175, %v4173
      %v4234 = vpack.c.bf16 %v4178, %v4176
      %v4235 = vpack.c.bf16 %v4179, %v4177
      %v4236 = vpack.c.bf16 %v4182, %v4180
      %v4237 = vpack.c.bf16 %v4183, %v4181
      %v4238 = vpack.c.bf16 %v4186, %v4184
      %v4239 = vpack.c.bf16 %v4187, %v4185
      %v4240 = vpack.c.bf16 %v4190, %v4188
      %v4241 = vpack.c.bf16 %v4191, %v4189
      %v4242 = vpack.c.bf16 %v4194, %v4192
      %v4243 = vpack.c.bf16 %v4195, %v4193
      %v4244 = vpack.c.bf16 %v4198, %v4196
      %v4245 = vpack.c.bf16 %v4199, %v4197
      %v4246 = vpack.c.bf16 %v4202, %v4200
      %v4247 = vpack.c.bf16 %v4203, %v4201
      %v4248 = vpack.c.bf16 %v4206, %v4204
      %v4249 = vpack.c.bf16 %v4207, %v4205
      %v4250 = vpack.c.bf16 %v4210, %v4208
      %v4251 = vpack.c.bf16 %v4211, %v4209
      %v4252 = vpack.c.bf16 %v4214, %v4212
      %v4253 = vpack.c.bf16 %v4215, %v4213
      %v4254 = vpack.c.bf16 %v4218, %v4216
      %v4255 = vpack.c.bf16 %v4219, %v4217
      %v4256 = vpack.c.bf16 %v4222, %v4220
      %v4257 = vpack.c.bf16 %v4223, %v4221
      %v4258 = vpack.c.bf16 %v4226, %v4224
      %v4259 = vpack.c.bf16 %v4227, %v4225
      %4260 = vmatprep.subr.bf16.mxu0 %v4229
      %4261 = vmatpush1.bf16.msra.mxu0 %v4228
      %4262 = vmatprep.subr.bf16.mxu0 %v4231
      %4263 = vmatpush1.bf16.msra.mxu0 %v4230
      %4264 = vmatprep.subr.bf16.mxu0 %v4233
      %4265 = vmatpush1.bf16.msra.mxu0 %v4232
      %4266 = vmatprep.subr.bf16.mxu0 %v4235
      %4267 = vmatpush1.bf16.msra.mxu0 %v4234
      %4268 = vmatprep.subr.bf16.mxu0 %v4237
      %4269 = vmatpush1.bf16.msra.mxu0 %v4236
      %4270 = vmatprep.subr.bf16.mxu0 %v4239
      %4271 = vmatpush1.bf16.msra.mxu0 %v4238
      %4272 = vmatprep.subr.bf16.mxu0 %v4241
      %4273 = vmatpush1.bf16.msra.mxu0 %v4240
      %4274 = vmatprep.subr.bf16.mxu0 %v4243
      %4275 = vmatpush1.bf16.msra.mxu0 %v4242
      %4276 = vmatprep.subr.bf16.mxu0 %v4245
      %4277 = vmatpush1.bf16.msra.mxu0 %v4244
      %4278 = vmatprep.subr.bf16.mxu0 %v4247
      %4279 = vmatpush1.bf16.msra.mxu0 %v4246
      %4280 = vmatprep.subr.bf16.mxu0 %v4249
      %4281 = vmatpush1.bf16.msra.mxu0 %v4248
      %4282 = vmatprep.subr.bf16.mxu0 %v4251
      %4283 = vmatpush1.bf16.msra.mxu0 %v4250
      %4284 = vmatprep.subr.bf16.mxu0 %v4253
      %4285 = vmatpush1.bf16.msra.mxu0 %v4252
      %4286 = vmatprep.subr.bf16.mxu0 %v4255
      %4287 = vmatpush1.bf16.msra.mxu0 %v4254
      %4288 = vmatprep.subr.bf16.mxu0 %v4257
      %4289 = vmatpush1.bf16.msra.mxu0 %v4256
      %4290 = vmatprep.subr.bf16.mxu0 %v4259
      %4291 = vmatpush1.bf16.msra.mxu0 %v4258
      %4292 = vmatprep.mubr.bf16.mxu0 %v1931
      %4293 = vmatmul.mubr.bf16.gmra.mrb[0].mxu0 %v1930
      %v4294 = vpop.f32.mrb[0].mxu0
      %v4295 = vadd.f32 %v1917, %v4294
      %v4296 = vpop.f32.mrb[0].mxu0
      %v4297 = vadd.f32 %v1917, %v4296
      %v4298 = vpop.f32.mrb[0].mxu0
      %v4299 = vadd.f32 %v1922, %v4298
      %v4300 = vpop.f32.mrb[0].mxu0
      %v4301 = vadd.f32 %v1922, %v4300
      %4302 = vdwg.mxu0
      %v4303 = vmax.f32 %v4295, 0.0
      %v4304 = vmax.f32 %v4297, 0.0
      %v4305 = vmax.f32 %v4299, 0.0
      %v4306 = vmax.f32 %v4301, 0.0
      %v4307 = vmax.f32 %v4303, %v4304
      %4308 = vmax.xlane.f32.xlu0 %v4307
      %v4309 = vpop.xlane.xlu0 %4308
      %v4310 = vmax.f32 %v4305, %v4306
      %4311 = vmax.xlane.f32.xlu0 %v4310
      %v4312 = vpop.xlane.xlu0 %4311
      %v4313 = vmax.f32 %v3537, %v4309
      %v4314 = vmax.f32 %v3538, %v4312
      %p4315 = scmp.eq.s32.totalorder %s29, 0
      // Predicated region
      $region65: #{tpu_custom_call.1} parent=63 // pred_check
        %p4316 = pneg %p4315
      $region66: #{tpu_custom_call.1} parent=63 // pred_check_branch
        %4318 = sbr.rel (%p4316) target = $region68
      $region67: #{tpu_custom_call.1} parent=63 // pred_region
        %vm4319 = vcmask 7168
        %4320 = vst.msk [vmem:[#allocation2] sm:$0xff] %vm4319, %v4313
        %4321 = vst.msk [vmem:[#allocation2 + $0x8] sm:$0xff] %vm4319, %v4314
      $region68: #{tpu_custom_call.1} parent=63 // pred_fallthru
        _
      %p4322 = scmp.ne.s32.totalorder %s29, 0
      // Predicated region
      $region69: #{tpu_custom_call.1} parent=63 // pred_check
        %p4323 = pneg %p4322
      $region70: #{tpu_custom_call.1} parent=63 // pred_check_branch
        %4325 = sbr.rel (%p4323) target = $region72
      $region71: #{tpu_custom_call.1} parent=63 // pred_region
        %v4326 = vld [vmem:[#allocation2] sm:$0xff]
        %v4327 = vld [vmem:[#allocation2 + $0x8] sm:$0xff]
        %v4328 = vmax.f32 %v4326, %v4313
        %v4329 = vmax.f32 %v4327, %v4314
        %vm4330 = vcmask 7168
        %4331 = vst.msk [vmem:[#allocation2] sm:$0xff] %vm4330, %v4328
        %4332 = vst.msk [vmem:[#allocation2 + $0x8] sm:$0xff] %vm4330, %v4329
      $region72: #{tpu_custom_call.1} parent=63 // pred_fallthru
        _
      // Predicated region
      $region73: #{tpu_custom_call.1} parent=63 // pred_check
        %p4333 = pneg %p4315
      $region74: #{tpu_custom_call.1} parent=63 // pred_check_branch
        %4335 = sbr.rel (%p4333) target = $region76
      $region75: #{tpu_custom_call.1} parent=63 // pred_region
        %v4336 = vld [vmem:[#allocation2] sm:$0xff]
        %v4337 = vld [vmem:[#allocation2 + $0x8] sm:$0xff]
        %vm4338 = vcmask 7168
        %4339 = vst.msk [vmem:[%s438] sm:$0xff] %vm4338, %v4336
        %4340 = vst.msk [vmem:[%s438 + $0x8] sm:$0xff] %vm4338, %v4337
      $region76: #{tpu_custom_call.1} parent=63 // pred_fallthru
        _
      %p4341 = scmp.lt.s32.totalorder %s27, 1
      %s4342 = scalar_select %p4341, %s27, 1
      %p4343 = scmp.lt.s32.totalorder %s28, 1
      %s4344 = scalar_select %p4343, %s28, 1
      %s4345 = smul.addr %s4344, 2
      %s4346 = smul.addr %s4342, 4
      %s4347 = sadd.s32 %s4345, %s4346
      %s4348 = smul.addr %s4347, 8
      %s4349 = scalar_lea.vmem %s11, %s4348
      // Predicated region
      $region77: #{tpu_custom_call.1} parent=63 // pred_check
        %p4350 = pneg %p301
      $region78: #{tpu_custom_call.1} parent=63 // pred_check_branch
        %4352 = sbr.rel (%p4350) target = $region80
      $region79: #{tpu_custom_call.1} parent=63 // pred_region
        _
      $region80: #{tpu_custom_call.1} parent=63 // pred_fallthru
        _
    $region64: #{tpu_custom_call.1} parent=5 // pred_fallthru
      _
    %p4353 = scmp.le.s32.totalorder 2, %s17
    // Predicated region
    $region81: #{tpu_custom_call.1} parent=5 // pred_check
      %p4354 = pneg %p4353
    $region82: #{tpu_custom_call.1} parent=5 // pred_check_branch
      %4356 = sbr.rel (%p4354) target = $region84
    $region83: #{tpu_custom_call.1} parent=5 // pred_region
      %s4357 = ssub.s32 %s17, 2
      // Predicated region
      $region85: #{tpu_custom_call.1} parent=83 // pred_check
        %p4358 = pneg %p307
      $region86: #{tpu_custom_call.1} parent=83 // pred_check_branch
        %4360 = sbr.rel (%p4358) target = $region88
      $region87: #{tpu_custom_call.1} parent=83 // pred_region
        %p4361 = scmp.lt.s32.totalorder %s30, 1
        %s4362 = scalar_select %p4361, %s30, 1
        %p4363 = scmp.lt.s32.totalorder %s31, 1
        %s4364 = scalar_select %p4363, %s31, 1
        %s4365 = smul.addr %s4364, 2
        %s4366 = smul.addr %s4362, 4
        %s4367 = sadd.s32 %s4365, %s4366
        %s4368 = smul.addr %s4367, 8
        %s4369 = scalar_lea.vmem %s11, %s4368
      $region88: #{tpu_custom_call.1} parent=83 // pred_fallthru
        _
    $region84: #{tpu_custom_call.1} parent=5 // pred_fallthru
      _
  $region6: #{tpu_custom_call.1} parent=0 // loop_footer
    %s21 = sadd.s32 1, %s17
  $region7: #{tpu_custom_call.1} parent=0 // loop_footer_branch
    %16 = sbr.rel target = $region3
  $region8: #{tpu_custom_call.1} parent=0 // loop_exit
    _

</llo_original>
